<compile_context>
chip_gen: v7x
topology: tpu7x:2x2x1
jax: 0.10.0
libtpu: 0.0.40
codegen_flags: <defaults>
</compile_context>

<pallas_src>
import functools

import jax
import jax.numpy as jnp
from jax.experimental import pallas as pl
from jax.experimental.pallas import tpu as pltpu

C_FEAT = 2048     # backbone output channels (resnet50 layer4)
D_OUT = 256       # per-branch linear output
GEM_P = 3.0       # GeM default p (specialized to an integer cube below)
GEM_EPS = 1e-6    # GeM clamp eps
_CHUNK = 8        # sublane-tile chunk of the spatial axis per reduction step


def head_kernel(x_ref, w_ref, b_ref, o_ref, *, assume_nonneg):
    """Processes `block_b` batch elements per grid step.

    x_ref : (Bt, HW, C)    backbone features (channels-last, flattened spatial;
                           bf16 or f32 -- accumulation is always f32)
    w_ref : (C, 512)       concat(linear1.W^T, linear2.W^T)
    b_ref : (1, 512)       concat(linear1.b, linear2.b)
    o_ref : (Bt, 1, 512)   concat(l2norm(branch1), l2norm(branch2))
    """
    hw = x_ref.shape[1]

    # ---- fused single-pass spatial reduction: running max / sum / sum(x^3) --
    # Each chunk is loaded from VMEM once and reduced to [Bt, C] immediately;
    # no full-tile intermediates are materialized.
    def chunk_stats(start, size):
        blk = x_ref[:, start:start + size, :].astype(jnp.float32)  # [Bt, sz, C]
        cmax = jnp.max(blk, axis=1)                       # AdaptiveMaxPool piece
        csum = jnp.sum(blk, axis=1)                       # AdaptiveAvgPool piece
        if not assume_nonneg:
            blk = jnp.maximum(blk, GEM_EPS)               # exact PyTorch GeM clamp
        c3 = jnp.sum(blk * blk * blk, axis=1)             # integer cube on the VPU
        return cmax, csum, c3

    n_full, rem = divmod(hw, _CHUNK)
    bounds = [(i * _CHUNK, _CHUNK) for i in range(n_full)]
    if rem:
        bounds.append((n_full * _CHUNK, rem))

    mac, ssum, s3 = chunk_stats(*bounds[0])
    for start, size in bounds[1:]:
        cmax, csum, c3 = chunk_stats(start, size)
        mac = jnp.maximum(mac, cmax)
        ssum = ssum + csum
        s3 = s3 + c3

    spoc = ssum * (1.0 / hw)                              # [Bt, C]
    mean3 = s3 * (1.0 / hw)
    if assume_nonneg:
        # Backbone output is ReLU'd (x >= 0): clamping only the reduced mean is
        # equivalent to PyTorch's clamp-then-cube up to ~1e-18 absolute.
        mean3 = jnp.maximum(mean3, GEM_EPS ** GEM_P)
    gem = jnp.power(mean3, 1.0 / GEM_P)                   # small [Bt, C] EUP op

    s = mac + spoc + gem                                  # [Bt, C]

    # ---- fused Linear(2048 -> 512) for both branches: one MXU matmul --------
    w = w_ref[...].astype(jnp.float32)
    y = jnp.dot(s, w, preferred_element_type=jnp.float32) \
        + b_ref[...].astype(jnp.float32)

    # ---- per-branch L2 norm, stored straight into the lane-dense 512 output -
    y1 = y[:, :D_OUT]
    y2 = y[:, D_OUT:]
    inv1 = jax.lax.rsqrt(jnp.sum(y1 * y1, axis=-1, keepdims=True) + 1e-12)
    inv2 = jax.lax.rsqrt(jnp.sum(y2 * y2, axis=-1, keepdims=True) + 1e-12)
    o_ref[:, :, :D_OUT] = (y1 * inv1)[:, None, :].astype(o_ref.dtype)
    o_ref[:, :, D_OUT:] = (y2 * inv2)[:, None, :].astype(o_ref.dtype)


def fuse_params(w1, b1, w2, b2, *, weight_dtype=jnp.float32):
    """Fuse both branches' Linear params into one [2048, 512] weight and one
    [1, 512] bias.  Call ONCE outside the per-step path (not per forward).

    w1/w2: [2048, 256] (= PyTorch Linear.weight [out, in], transposed).
    weight_dtype=jnp.bfloat16 halves the weight's VMEM footprint (negligible
    accuracy impact after the L2 norm) if tighter VMEM is needed (v7x).
    """
    w_cat = jnp.concatenate([w1, w2], axis=1).astype(weight_dtype)
    b_cat = jnp.concatenate([jnp.reshape(b1, (1, D_OUT)),
                             jnp.reshape(b2, (1, D_OUT))],
                            axis=1).astype(jnp.float32)
    return w_cat, b_cat


def _pick_block_b(B, HW, itemsize, *, max_block_b=16, x_vmem_budget_bytes=16 << 20):
    """Batch elements per grid step: amortize the ~0.35 us/step overhead, keep
    the double-buffered x tile under a VMEM budget, and prefer an even number
    of grid steps so v7x's two TensorCores stay balanced."""
    per_elem = 2 * HW * C_FEAT * itemsize                 # double-buffered x tile
    cap = max(1, x_vmem_budget_bytes // per_elem)
    cap = int(min(cap, max_block_b, B))
    best_key, best = None, 1
    for d in range(1, cap + 1):
        if B % d:
            continue
        g = B // d
        key = (g % 2 == 0, g >= 2, d)      # even grid > >=2 steps > bigger tile
        if best_key is None or key > best_key:
            best_key, best = key, d
    return best


def basenet_head(feat_nhwc, w_cat, b_cat, *, block_b=None, assume_nonneg=True):
    """feat_nhwc: [B, H, W, 2048] channels-last backbone features.  Feed bf16
    (cast once outside the per-step path): the kernel is HBM-bound on x and
    accumulates in f32 regardless.  w_cat/b_cat come from fuse_params()."""
    B, H, W, C = feat_nhwc.shape
    assert C == C_FEAT
    HW = H * W
    x = feat_nhwc.reshape(B, HW, C)                       # free view, no HBM copy

    if block_b is None:
        block_b = _pick_block_b(B, HW, x.dtype.itemsize)
    assert B % block_b == 0
    grid = (B // block_b,)

    # VMEM sizing (re-derived for v7x's 64 MiB/TC): double-buffered x tile,
    # weight/bias buffers, output, plus chunk/accumulator scratch + headroom,
    # capped at 48 MB.
    need = (2 * block_b * HW * C_FEAT * x.dtype.itemsize
            + 2 * (C_FEAT * 2 * D_OUT + 2 * D_OUT) * w_cat.dtype.itemsize
            + 2 * block_b * 2 * D_OUT * 4
            + 8 * block_b * (_CHUNK + 4) * C_FEAT * 4)
    vmem_limit = int(min(max(need + (8 << 20), 32 << 20), 48 << 20))

    kernel = functools.partial(head_kernel, assume_nonneg=assume_nonneg)
    out = pl.pallas_call(
        kernel,
        out_shape=jax.ShapeDtypeStruct((B, 1, 2 * D_OUT), jnp.float32),
        grid_spec=pltpu.PrefetchScalarGridSpec(
            num_scalar_prefetch=0,
            grid=grid,
            in_specs=[
                pl.BlockSpec((block_b, HW, C), lambda i: (i, 0, 0)),
                pl.BlockSpec((C, 2 * D_OUT), lambda i: (0, 0)),
                pl.BlockSpec((1, 2 * D_OUT), lambda i: (0, 0)),
            ],
            out_specs=pl.BlockSpec((block_b, 1, 2 * D_OUT), lambda i: (i, 0, 0)),
        ),
        compiler_params=pltpu.CompilerParams(
            dimension_semantics=("parallel",),
            vmem_limit_bytes=vmem_limit,
        ),
    )(x, w_cat, b_cat)
    return out.reshape(B, 2 * D_OUT)


def basenet_head_ref(feat_nhwc, w_cat, b_cat):
    """Pure-JAX f32 reference mirroring the PyTorch forward (on the supplied
    features and fused Linear params)."""
    B, H, W, C = feat_nhwc.shape
    x = feat_nhwc.reshape(B, H * W, C).astype(jnp.float32)
    mac = jnp.max(x, axis=1)
    spoc = jnp.mean(x, axis=1)
    gem = jnp.power(
        jnp.mean(jnp.power(jnp.maximum(x, GEM_EPS), GEM_P), axis=1),
        1.0 / GEM_P)
    s = mac + spoc + gem
    y = s @ w_cat.astype(jnp.float32) + jnp.reshape(b_cat.astype(jnp.float32), (-1,))
    y1, y2 = y[:, :D_OUT], y[:, D_OUT:]
    y1 = y1 / jnp.sqrt(jnp.sum(y1 * y1, axis=-1, keepdims=True) + 1e-12)
    y2 = y2 / jnp.sqrt(jnp.sum(y2 * y2, axis=-1, keepdims=True) + 1e-12)
    return jnp.concatenate([y1, y2], axis=-1)


if __name__ == "__main__":
    key = jax.random.PRNGKey(0)
    kx, k1, k2 = jax.random.split(key, 3)

    # Small synthetic "backbone output": B=2, H=W=7 (ResNet-50 /32 map), C=2048,
    # channels-last (NHWC).  ReLU'd backbone features are non-negative.
    B, H, W = 2, 7, 7
    feat = jnp.abs(jax.random.normal(kx, (B, H, W, C_FEAT), dtype=jnp.float32))
    # Cast ONCE outside the per-step path: the kernel is HBM-bound on x, so
    # streaming bf16 halves the bytes moved (in-kernel accumulation stays f32).
    feat_bf16 = feat.astype(jnp.bfloat16)

    # Linear params: kaiming_normal_(mode='fan_out') -> std = sqrt(2/out_features)
    std = (2.0 / D_OUT) ** 0.5
    # PyTorch Linear weight is [out, in]; store transposed [in, out] for y = x @ W.
    w1 = jax.random.normal(k1, (C_FEAT, D_OUT), dtype=jnp.float32) * std
    w2 = jax.random.normal(k2, (C_FEAT, D_OUT), dtype=jnp.float32) * std
    b1 = jnp.zeros((D_OUT,), dtype=jnp.float32)
    b2 = jnp.zeros((D_OUT,), dtype=jnp.float32)
    w_cat, b_cat = fuse_params(w1, b1, w2, b2)            # fuse ONCE, outside the step

    out = jax.block_until_ready(
        basenet_head(feat_bf16, w_cat, b_cat, assume_nonneg=True))
    ref = basenet_head_ref(feat_bf16, w_cat, b_cat)       # same (bf16) features

    assert out.shape == (B, 2 * D_OUT)
    assert jnp.allclose(out, ref, atol=5e-4, rtol=5e-4), "mismatch vs reference"

    print("KERNEL_OK")
</pallas_src>

<mosaic_0001>
module attributes {stable_mosaic.version = 11 : i64} {
  func.func @head_kernel(%arg0: i32, %arg1: memref<1x49x2048xbf16, #tpu.memory_space<vmem>>, %arg2: memref<2048x512xf32, #tpu.memory_space<vmem>>, %arg3: memref<1x512xf32, #tpu.memory_space<vmem>>, %arg4: memref<1x1x512xf32, #tpu.memory_space<vmem>>) attributes {dimension_semantics = [#tpu.dimension_semantics<parallel>], iteration_bounds = array<i64: 2>, scalar_prefetch = 0 : i64, scratch_operands = 0 : i64, tpu.core_type = #tpu.core_type<tc>, window_params = [{transform_indices = @transform_0, window_bounds = array<i64: 1, 49, 2048>}, {pipeline_mode = #tpu.pipeline_mode<synchronous>, transform_indices = @transform_1, window_bounds = array<i64: 2048, 512>}, {pipeline_mode = #tpu.pipeline_mode<synchronous>, transform_indices = @transform_2, window_bounds = array<i64: 1, 512>}, {transform_indices = @transform_3, window_bounds = array<i64: 1, 1, 512>}]} {
    %c0 = arith.constant 0 : index
    %c0_0 = arith.constant 0 : index
    %c0_1 = arith.constant 0 : index
    %0 = vector.load %arg1[%c0, %c0_0, %c0_1] : memref<1x49x2048xbf16, #tpu.memory_space<vmem>>, vector<1x8x2048xbf16>
    %1 = arith.extf %0 : vector<1x8x2048xbf16> to vector<1x8x2048xf32>
    %cst = arith.constant dense<0xFF800000> : vector<1x2048xf32>
    %2 = vector.multi_reduction <maximumf>, %1, %cst [1] : vector<1x8x2048xf32> to vector<1x2048xf32>
    %cst_2 = arith.constant dense<0.000000e+00> : vector<1x2048xf32>
    %3 = vector.multi_reduction <add>, %1, %cst_2 [1] : vector<1x8x2048xf32> to vector<1x2048xf32>
    %4 = arith.mulf %1, %1 : vector<1x8x2048xf32>
    %5 = arith.mulf %4, %1 : vector<1x8x2048xf32>
    %cst_3 = arith.constant dense<0.000000e+00> : vector<1x2048xf32>
    %6 = vector.multi_reduction <add>, %5, %cst_3 [1] : vector<1x8x2048xf32> to vector<1x2048xf32>
    %c0_4 = arith.constant 0 : index
    %c8 = arith.constant 8 : index
    %c0_5 = arith.constant 0 : index
    %7 = vector.load %arg1[%c0_4, %c8, %c0_5] : memref<1x49x2048xbf16, #tpu.memory_space<vmem>>, vector<1x8x2048xbf16>
    %8 = arith.extf %7 : vector<1x8x2048xbf16> to vector<1x8x2048xf32>
    %cst_6 = arith.constant dense<0xFF800000> : vector<1x2048xf32>
    %9 = vector.multi_reduction <maximumf>, %8, %cst_6 [1] : vector<1x8x2048xf32> to vector<1x2048xf32>
    %cst_7 = arith.constant dense<0.000000e+00> : vector<1x2048xf32>
    %10 = vector.multi_reduction <add>, %8, %cst_7 [1] : vector<1x8x2048xf32> to vector<1x2048xf32>
    %11 = arith.mulf %8, %8 : vector<1x8x2048xf32>
    %12 = arith.mulf %11, %8 : vector<1x8x2048xf32>
    %cst_8 = arith.constant dense<0.000000e+00> : vector<1x2048xf32>
    %13 = vector.multi_reduction <add>, %12, %cst_8 [1] : vector<1x8x2048xf32> to vector<1x2048xf32>
    %14 = arith.maximumf %2, %9 : vector<1x2048xf32>
    %15 = arith.addf %3, %10 : vector<1x2048xf32>
    %16 = arith.addf %6, %13 : vector<1x2048xf32>
    %c0_9 = arith.constant 0 : index
    %c16 = arith.constant 16 : index
    %c0_10 = arith.constant 0 : index
    %17 = vector.load %arg1[%c0_9, %c16, %c0_10] : memref<1x49x2048xbf16, #tpu.memory_space<vmem>>, vector<1x8x2048xbf16>
    %18 = arith.extf %17 : vector<1x8x2048xbf16> to vector<1x8x2048xf32>
    %cst_11 = arith.constant dense<0xFF800000> : vector<1x2048xf32>
    %19 = vector.multi_reduction <maximumf>, %18, %cst_11 [1] : vector<1x8x2048xf32> to vector<1x2048xf32>
    %cst_12 = arith.constant dense<0.000000e+00> : vector<1x2048xf32>
    %20 = vector.multi_reduction <add>, %18, %cst_12 [1] : vector<1x8x2048xf32> to vector<1x2048xf32>
    %21 = arith.mulf %18, %18 : vector<1x8x2048xf32>
    %22 = arith.mulf %21, %18 : vector<1x8x2048xf32>
    %cst_13 = arith.constant dense<0.000000e+00> : vector<1x2048xf32>
    %23 = vector.multi_reduction <add>, %22, %cst_13 [1] : vector<1x8x2048xf32> to vector<1x2048xf32>
    %24 = arith.maximumf %14, %19 : vector<1x2048xf32>
    %25 = arith.addf %15, %20 : vector<1x2048xf32>
    %26 = arith.addf %16, %23 : vector<1x2048xf32>
    %c0_14 = arith.constant 0 : index
    %c24 = arith.constant 24 : index
    %c0_15 = arith.constant 0 : index
    %27 = vector.load %arg1[%c0_14, %c24, %c0_15] : memref<1x49x2048xbf16, #tpu.memory_space<vmem>>, vector<1x8x2048xbf16>
    %28 = arith.extf %27 : vector<1x8x2048xbf16> to vector<1x8x2048xf32>
    %cst_16 = arith.constant dense<0xFF800000> : vector<1x2048xf32>
    %29 = vector.multi_reduction <maximumf>, %28, %cst_16 [1] : vector<1x8x2048xf32> to vector<1x2048xf32>
    %cst_17 = arith.constant dense<0.000000e+00> : vector<1x2048xf32>
    %30 = vector.multi_reduction <add>, %28, %cst_17 [1] : vector<1x8x2048xf32> to vector<1x2048xf32>
    %31 = arith.mulf %28, %28 : vector<1x8x2048xf32>
    %32 = arith.mulf %31, %28 : vector<1x8x2048xf32>
    %cst_18 = arith.constant dense<0.000000e+00> : vector<1x2048xf32>
    %33 = vector.multi_reduction <add>, %32, %cst_18 [1] : vector<1x8x2048xf32> to vector<1x2048xf32>
    %34 = arith.maximumf %24, %29 : vector<1x2048xf32>
    %35 = arith.addf %25, %30 : vector<1x2048xf32>
    %36 = arith.addf %26, %33 : vector<1x2048xf32>
    %c0_19 = arith.constant 0 : index
    %c32 = arith.constant 32 : index
    %c0_20 = arith.constant 0 : index
    %37 = vector.load %arg1[%c0_19, %c32, %c0_20] : memref<1x49x2048xbf16, #tpu.memory_space<vmem>>, vector<1x8x2048xbf16>
    %38 = arith.extf %37 : vector<1x8x2048xbf16> to vector<1x8x2048xf32>
    %cst_21 = arith.constant dense<0xFF800000> : vector<1x2048xf32>
    %39 = vector.multi_reduction <maximumf>, %38, %cst_21 [1] : vector<1x8x2048xf32> to vector<1x2048xf32>
    %cst_22 = arith.constant dense<0.000000e+00> : vector<1x2048xf32>
    %40 = vector.multi_reduction <add>, %38, %cst_22 [1] : vector<1x8x2048xf32> to vector<1x2048xf32>
    %41 = arith.mulf %38, %38 : vector<1x8x2048xf32>
    %42 = arith.mulf %41, %38 : vector<1x8x2048xf32>
    %cst_23 = arith.constant dense<0.000000e+00> : vector<1x2048xf32>
    %43 = vector.multi_reduction <add>, %42, %cst_23 [1] : vector<1x8x2048xf32> to vector<1x2048xf32>
    %44 = arith.maximumf %34, %39 : vector<1x2048xf32>
    %45 = arith.addf %35, %40 : vector<1x2048xf32>
    %46 = arith.addf %36, %43 : vector<1x2048xf32>
    %c0_24 = arith.constant 0 : index
    %c40 = arith.constant 40 : index
    %c0_25 = arith.constant 0 : index
    %47 = vector.load %arg1[%c0_24, %c40, %c0_25] : memref<1x49x2048xbf16, #tpu.memory_space<vmem>>, vector<1x8x2048xbf16>
    %48 = arith.extf %47 : vector<1x8x2048xbf16> to vector<1x8x2048xf32>
    %cst_26 = arith.constant dense<0xFF800000> : vector<1x2048xf32>
    %49 = vector.multi_reduction <maximumf>, %48, %cst_26 [1] : vector<1x8x2048xf32> to vector<1x2048xf32>
    %cst_27 = arith.constant dense<0.000000e+00> : vector<1x2048xf32>
    %50 = vector.multi_reduction <add>, %48, %cst_27 [1] : vector<1x8x2048xf32> to vector<1x2048xf32>
    %51 = arith.mulf %48, %48 : vector<1x8x2048xf32>
    %52 = arith.mulf %51, %48 : vector<1x8x2048xf32>
    %cst_28 = arith.constant dense<0.000000e+00> : vector<1x2048xf32>
    %53 = vector.multi_reduction <add>, %52, %cst_28 [1] : vector<1x8x2048xf32> to vector<1x2048xf32>
    %54 = arith.maximumf %44, %49 : vector<1x2048xf32>
    %55 = arith.addf %45, %50 : vector<1x2048xf32>
    %56 = arith.addf %46, %53 : vector<1x2048xf32>
    %c0_29 = arith.constant 0 : index
    %c48 = arith.constant 48 : index
    %c0_30 = arith.constant 0 : index
    %57 = vector.load %arg1[%c0_29, %c48, %c0_30] : memref<1x49x2048xbf16, #tpu.memory_space<vmem>>, vector<1x1x2048xbf16>
    %58 = arith.extf %57 : vector<1x1x2048xbf16> to vector<1x1x2048xf32>
    %cst_31 = arith.constant dense<0xFF800000> : vector<1x2048xf32>
    %59 = vector.multi_reduction <maximumf>, %58, %cst_31 [1] : vector<1x1x2048xf32> to vector<1x2048xf32>
    %cst_32 = arith.constant dense<0.000000e+00> : vector<1x2048xf32>
    %60 = vector.multi_reduction <add>, %58, %cst_32 [1] : vector<1x1x2048xf32> to vector<1x2048xf32>
    %61 = arith.mulf %58, %58 : vector<1x1x2048xf32>
    %62 = arith.mulf %61, %58 : vector<1x1x2048xf32>
    %cst_33 = arith.constant dense<0.000000e+00> : vector<1x2048xf32>
    %63 = vector.multi_reduction <add>, %62, %cst_33 [1] : vector<1x1x2048xf32> to vector<1x2048xf32>
    %64 = arith.maximumf %54, %59 : vector<1x2048xf32>
    %65 = arith.addf %55, %60 : vector<1x2048xf32>
    %66 = arith.addf %56, %63 : vector<1x2048xf32>
    %cst_34 = arith.constant 0.0204081628 : f32
    %67 = vector.broadcast %cst_34 : f32 to vector<1x2048xf32>
    %68 = arith.mulf %65, %67 : vector<1x2048xf32>
    %cst_35 = arith.constant 0.0204081628 : f32
    %69 = vector.broadcast %cst_35 : f32 to vector<1x2048xf32>
    %70 = arith.mulf %66, %69 : vector<1x2048xf32>
    %cst_36 = arith.constant 1.000000e-18 : f32
    %71 = vector.broadcast %cst_36 : f32 to vector<1x2048xf32>
    %72 = arith.maximumf %70, %71 : vector<1x2048xf32>
    %cst_37 = arith.constant 0.333333343 : f32
    %73 = vector.broadcast %cst_37 : f32 to vector<1x2048xf32>
    %74 = math.powf %72, %73 : vector<1x2048xf32>
    %75 = arith.addf %64, %68 : vector<1x2048xf32>
    %76 = arith.addf %75, %74 : vector<1x2048xf32>
    %c0_38 = arith.constant 0 : index
    %c0_39 = arith.constant 0 : index
    %77 = vector.load %arg2[%c0_38, %c0_39] : memref<2048x512xf32, #tpu.memory_space<vmem>>, vector<2048x512xf32>
    %cst_40 = arith.constant dense<0.000000e+00> : vector<1x512xf32>
    %78 = tpu.matmul %76, %77, %cst_40 {dimension_numbers = #tpu.dot_dimension_numbers<[1], [0], [0], [1], [0, 0, 1, 1], [], []>} : vector<1x2048xf32>, vector<2048x512xf32>, vector<1x512xf32> -> vector<1x512xf32>
    %c0_41 = arith.constant 0 : index
    %c0_42 = arith.constant 0 : index
    %79 = vector.load %arg3[%c0_41, %c0_42] : memref<1x512xf32, #tpu.memory_space<vmem>>, vector<1x512xf32>
    %80 = arith.addf %78, %79 : vector<1x512xf32>
    %81 = vector.extract_strided_slice %80 {offsets = [0, 0], sizes = [1, 256], strides = [1, 1]} : vector<1x512xf32> to vector<1x256xf32>
    %82 = vector.extract_strided_slice %80 {offsets = [0, 256], sizes = [1, 256], strides = [1, 1]} : vector<1x512xf32> to vector<1x256xf32>
    %83 = arith.mulf %81, %81 : vector<1x256xf32>
    %cst_43 = arith.constant dense<0.000000e+00> : vector<1xf32>
    %84 = vector.multi_reduction <add>, %83, %cst_43 [1] : vector<1x256xf32> to vector<1xf32>
    %85 = vector.shape_cast %84 : vector<1xf32> to vector<1x1xf32>
    %cst_44 = arith.constant 9.99999996E-13 : f32
    %86 = vector.broadcast %cst_44 : f32 to vector<1x1xf32>
    %87 = arith.addf %85, %86 : vector<1x1xf32>
    %88 = math.rsqrt %87 : vector<1x1xf32>
    %89 = arith.mulf %82, %82 : vector<1x256xf32>
    %cst_45 = arith.constant dense<0.000000e+00> : vector<1xf32>
    %90 = vector.multi_reduction <add>, %89, %cst_45 [1] : vector<1x256xf32> to vector<1xf32>
    %91 = vector.shape_cast %90 : vector<1xf32> to vector<1x1xf32>
    %cst_46 = arith.constant 9.99999996E-13 : f32
    %92 = vector.broadcast %cst_46 : f32 to vector<1x1xf32>
    %93 = arith.addf %91, %92 : vector<1x1xf32>
    %94 = math.rsqrt %93 : vector<1x1xf32>
    %95 = vector.broadcast %88 : vector<1x1xf32> to vector<1x256xf32>
    %96 = arith.mulf %81, %95 : vector<1x256xf32>
    %97 = vector.shape_cast %96 : vector<1x256xf32> to vector<1x1x256xf32>
    %c0_47 = arith.constant 0 : index
    %c0_48 = arith.constant 0 : index
    %c0_49 = arith.constant 0 : index
    %98 = vector.load %arg4[%c0_47, %c0_48, %c0_49] : memref<1x1x512xf32, #tpu.memory_space<vmem>>, vector<1x1x256xf32>
    tpu.vector_store %arg4[%c0_47, %c0_48, %c0_49], %97 {strides = array<i32>} : memref<1x1x512xf32, #tpu.memory_space<vmem>>, vector<1x1x256xf32>,
    %99 = vector.broadcast %94 : vector<1x1xf32> to vector<1x256xf32>
    %100 = arith.mulf %82, %99 : vector<1x256xf32>
    %101 = vector.shape_cast %100 : vector<1x256xf32> to vector<1x1x256xf32>
    %c0_50 = arith.constant 0 : index
    %c0_51 = arith.constant 0 : index
    %c256 = arith.constant 256 : index
    %102 = vector.load %arg4[%c0_50, %c0_51, %c256] : memref<1x1x512xf32, #tpu.memory_space<vmem>>, vector<1x1x256xf32>
    tpu.vector_store %arg4[%c0_50, %c0_51, %c256], %101 {strides = array<i32>} : memref<1x1x512xf32, #tpu.memory_space<vmem>>, vector<1x1x256xf32>,
    return
  }
  func.func @transform_0(%arg0: i32) -> (i32, i32, i32) {
    %c0_i32 = arith.constant 0 : i32
    %c0_i32_0 = arith.constant 0 : i32
    %c0_i32_1 = arith.constant 0 : i32
    return %arg0, %c0_i32, %c0_i32_0 : i32, i32, i32
  }
  func.func @transform_1(%arg0: i32) -> (i32, i32) {
    %c0_i32 = arith.constant 0 : i32
    %c0_i32_0 = arith.constant 0 : i32
    %c0_i32_1 = arith.constant 0 : i32
    return %c0_i32, %c0_i32_0 : i32, i32
  }
  func.func @transform_2(%arg0: i32) -> (i32, i32) {
    %c0_i32 = arith.constant 0 : i32
    %c0_i32_0 = arith.constant 0 : i32
    %c0_i32_1 = arith.constant 0 : i32
    return %c0_i32, %c0_i32_0 : i32, i32
  }
  func.func @transform_3(%arg0: i32) -> (i32, i32, i32) {
    %c0_i32 = arith.constant 0 : i32
    %c0_i32_0 = arith.constant 0 : i32
    %c0_i32_1 = arith.constant 0 : i32
    return %arg0, %c0_i32, %c0_i32_0 : i32, i32, i32
  }
}

</mosaic_0001>

<llo_original>
// kernel: tpu_custom_call.1
$region0: #{tpu_custom_call.1}
  #allocation0 [shape = 'u32[]', space=smem, size = 0x4, offset = 0x4, fixed_abs, tag = 'smem constant byte address 0x4 - core index']
  #allocation1 [shape = 'u32[144,128]{1,0:T(1,128)}', space=vmem, size = 0x12000, scoped, tag = 'internal scratch']
  %s0 = inlined_call_operand.vmem [shape: bf16[2,49,2048], index: 0, kind: input, shape index: {}]
  %s1 = inlined_call_operand.hbm [shape: f32[2048,512], index: 1, kind: input, shape index: {}]
  %s2 = inlined_call_operand.hbm [shape: f32[1,512], index: 2, kind: input, shape index: {}]
  %s3 = inlined_call_operand.hbm [shape: f32[2,1,512], index: 3, kind: output, shape index: {}]
  %s4 = sld [smem:[#allocation0]]
  $region53: #{tpu_custom_call.1} parent=0
    _
  %s6 = ssub.s32 1, %s4
  %s7 = scalar_select 0, %s6, %s4
  $region1: #{tpu_custom_call.1} parent=0
    #allocation2 [shape = 'u8[4194304]{0}', space=vmem, size = 0x400000, scoped, tag = 'input window, operand 1, single buffered']
    #allocation3 [shape = 's32[2]{0}', space=sflag, size = 0x8, scoped, tag = 'scoped memory for tpu_custom_call.1']
    #allocation4 [shape = 's32[2]{0}', space=sflag, size = 0x8, scoped, tag = 'scoped memory for tpu_custom_call.1']
    #allocation5 [shape = 'u8[2048]{0}', space=vmem, size = 0x800, scoped, tag = 'input window, operand 2, single buffered']
    #allocation6 [shape = 's32[1]{0}', space=sflag, size = 0x4, scoped, tag = 'scoped memory for tpu_custom_call.1']
    #allocation7 [shape = 'u8[4096]{0}', space=vmem, size = 0x1000, scoped, tag = 'output window, operand 0']
    %8 = vsyncpa [#allocation3], 0
    %9 = vsyncpa [#allocation6], 0
    %10 = vsyncpa [#allocation4], 0
    %s11 = scalar_lea.sflag [#allocation4], 1
    %12 = vsyncpa %s11, 0
    loop: start=0, step=1, limit=4
    $region2: #{tpu_custom_call.1} parent=1 // loop_pre_header
      _
    $region3: #{tpu_custom_call.1} parent=1 // loop_header
      %s14 = sphi 0, %s18
      %p15 = scmp.ge.s32.totalorder %s14, 4
      %s24 = sphi 0, %s26
      %s27 = sphi 0, %s24
      %s28 = sphi 0, %s27
      %s44 = sphi 0, %s28
      %s48 = sphi 0, %s48
      %s50 = sphi 0, %s48
      %s51 = sphi 0, %s50
      %s65 = sphi 0, %s51
      %s69 = sphi 0, %s69
      %s71 = sphi 0, %s69
      %s72 = sphi 0, %s71
      %s86 = sphi 0, %s72
      %s92 = sphi 0, %s94
      %s95 = sphi 0, %s92
      %s96 = sphi 0, %s95
      %s112 = sphi 0, %s96
    $region4: #{tpu_custom_call.1} parent=1 // loop_header_branch
      %17 = sbr.rel (%p15) target = $region8
    $region5: #{tpu_custom_call.1} parent=1 // loop_body
      %s19 = ssub.s32 %s14, 1
      %s20 = ssub.s32 %s14, 2
      %s21 = sadd.s32 %s14, 1
      %s22 = ssub.s32 %s14, %s21
      %p23 = scmp.eq.s32.totalorder %s22, 0
      %s25 = sadd.s32 %s24, 1
      %s26 = scalar_select %p23, %s24, %s25
      %p29 = pneg %p23
      %p30 = scmp.eq.s32.totalorder %s14, 1
      %p31 = por %p29, %p30
      %p32 = scmp.ne.s32.totalorder %s24, %s27
      %p33 = scmp.eq.s32.totalorder %s14, 0
      %p34 = por %p32, %p33
      %p35 = scmp.ne.s32.totalorder %s24, %s27
      %p36 = scmp.eq.s32.totalorder %s19, 1
      %p37 = por %p35, %p36
      %p38 = scmp.ne.s32.totalorder %s27, %s28
      %p39 = scmp.eq.s32.totalorder %s19, 0
      %p40 = por %p38, %p39
      %p41 = scmp.ne.s32.totalorder %s27, %s28
      %p42 = scmp.eq.s32.totalorder %s20, 1
      %p43 = por %p41, %p42
      %p45 = scmp.ne.s32.totalorder %s28, %s44
      %p46 = scmp.eq.s32.totalorder %s20, 0
      %p47 = por %p45, %p46
      %s49 = sadd.s32 %s48, 1
      %p52 = scmp.eq.s32.totalorder %s14, 1
      %p53 = scmp.ne.s32.totalorder %s48, %s50
      %p54 = scmp.eq.s32.totalorder %s14, 0
      %p55 = por %p53, %p54
      %p56 = scmp.ne.s32.totalorder %s48, %s50
      %p57 = scmp.eq.s32.totalorder %s19, 1
      %p58 = por %p56, %p57
      %p59 = scmp.ne.s32.totalorder %s50, %s51
      %p60 = scmp.eq.s32.totalorder %s19, 0
      %p61 = por %p59, %p60
      %p62 = scmp.ne.s32.totalorder %s50, %s51
      %p63 = scmp.eq.s32.totalorder %s20, 1
      %p64 = por %p62, %p63
      %p66 = scmp.ne.s32.totalorder %s51, %s65
      %p67 = scmp.eq.s32.totalorder %s20, 0
      %p68 = por %p66, %p67
      %s70 = sadd.s32 %s69, 1
      %p73 = scmp.eq.s32.totalorder %s14, 1
      %p74 = scmp.ne.s32.totalorder %s69, %s71
      %p75 = scmp.eq.s32.totalorder %s14, 0
      %p76 = por %p74, %p75
      %p77 = scmp.ne.s32.totalorder %s69, %s71
      %p78 = scmp.eq.s32.totalorder %s19, 1
      %p79 = por %p77, %p78
      %p80 = scmp.ne.s32.totalorder %s71, %s72
      %p81 = scmp.eq.s32.totalorder %s19, 0
      %p82 = por %p80, %p81
      %p83 = scmp.ne.s32.totalorder %s71, %s72
      %p84 = scmp.eq.s32.totalorder %s20, 1
      %p85 = por %p83, %p84
      %p87 = scmp.ne.s32.totalorder %s72, %s86
      %p88 = scmp.eq.s32.totalorder %s20, 0
      %p89 = por %p87, %p88
      %s90 = ssub.s32 %s14, %s21
      %p91 = scmp.eq.s32.totalorder %s90, 0
      %s93 = sadd.s32 %s92, 1
      %s94 = scalar_select %p91, %s92, %s93
      %p97 = pneg %p91
      %p98 = scmp.eq.s32.totalorder %s14, 1
      %p99 = por %p97, %p98
      %p100 = scmp.ne.s32.totalorder %s92, %s95
      %p101 = scmp.eq.s32.totalorder %s14, 0
      %p102 = por %p100, %p101
      %p103 = scmp.ne.s32.totalorder %s92, %s95
      %p104 = scmp.eq.s32.totalorder %s19, 1
      %p105 = por %p103, %p104
      %p106 = scmp.ne.s32.totalorder %s95, %s96
      %p107 = scmp.eq.s32.totalorder %s19, 0
      %p108 = por %p106, %p107
      %p109 = scmp.ne.s32.totalorder %s95, %s96
      %p110 = scmp.eq.s32.totalorder %s20, 1
      %p111 = por %p109, %p110
      %p113 = scmp.ne.s32.totalorder %s96, %s112
      %p114 = scmp.eq.s32.totalorder %s20, 0
      %p115 = por %p113, %p114
      %p116 = scmp.le.s32.totalorder 1, %s14
      %p117 = scmp.lt.s32.totalorder %s14, 3
      %p118 = pnand %p116, %p117
      %p119 = pneg %p118
      // Predicated region
      $region9: #{tpu_custom_call.1} parent=5 // pred_check
        _
      $region10: #{tpu_custom_call.1} parent=5 // pred_check_branch
        %121 = sbr.rel (%p118) target = $region12
      $region11: #{tpu_custom_call.1} parent=5 // pred_region
        %s122 = ssub.s32 %s14, 1
        // Predicated region
        $region13: #{tpu_custom_call.1} parent=11 // pred_check
          %p123 = pneg %p61
        $region14: #{tpu_custom_call.1} parent=11 // pred_check_branch
          %125 = sbr.rel (%p123) target = $region16
        $region15: #{tpu_custom_call.1} parent=11 // pred_region
          %s127 = ssub.s32 131072, 131072
          %128 = vsyncadd [#allocation3], %s127
          %s129 = sshll.u32 [#allocation2], 4
          %s130 = int_to_ptr.vmem [resolvable:$true] %s129
          %135 = dma.hbm_to_vmem [thread:$0]  %s1, 131072, %s130, [#allocation3], 512, 512, 32
        $region16: #{tpu_custom_call.1} parent=11 // pred_fallthru
          _
        // Predicated region
        $region17: #{tpu_custom_call.1} parent=11 // pred_check
          %p136 = pneg %p82
        $region18: #{tpu_custom_call.1} parent=11 // pred_check_branch
          %138 = sbr.rel (%p136) target = $region20
        $region19: #{tpu_custom_call.1} parent=11 // pred_region
          %s140 = ssub.s32 64, 64
          %141 = vsyncadd [#allocation6], %s140
          %s143 = sshll.u32 [#allocation5], 4
          %s144 = int_to_ptr.vmem [resolvable:$true] %s143
          %146 = dma.hbm_to_vmem [thread:$0]  %s2, 64, %s144, [#allocation6]
        $region20: #{tpu_custom_call.1} parent=11 // pred_fallthru
          _
      $region12: #{tpu_custom_call.1} parent=5 // pred_fallthru
        _
      %p147 = scmp.lt.s32.totalorder %s14, 2
      // Predicated region
      $region21: #{tpu_custom_call.1} parent=5 // pred_check
        %p148 = pneg %p147
      $region22: #{tpu_custom_call.1} parent=5 // pred_check_branch
        %150 = sbr.rel (%p148) target = $region24
      $region23: #{tpu_custom_call.1} parent=5 // pred_region
        // Predicated region
        $region25: #{tpu_custom_call.1} parent=23 // pred_check
          %p151 = pneg %p34
        $region26: #{tpu_custom_call.1} parent=23 // pred_check_branch
          %153 = sbr.rel (%p151) target = $region28
        $region27: #{tpu_custom_call.1} parent=23 // pred_region
          %p154 = scmp.lt.s32.totalorder %s14, 1
          %s155 = scalar_select %p154, %s14, 1
          %s156 = smul.addr %s155, 112
          %s157 = smul.addr %s156, 4
          %s158 = scalar_lea.vmem %s0, %s157
        $region28: #{tpu_custom_call.1} parent=23 // pred_fallthru
          _
      $region24: #{tpu_custom_call.1} parent=5 // pred_fallthru
        _
      %p159 = scmp.le.s32.totalorder 1, %s14
      %p160 = scmp.lt.s32.totalorder %s14, 3
      %p161 = pnand %p159, %p160
      %p162 = pneg %p161
      // Predicated region
      $region29: #{tpu_custom_call.1} parent=5 // pred_check
        _
      $region30: #{tpu_custom_call.1} parent=5 // pred_check_branch
        %164 = sbr.rel (%p161) target = $region32
      $region31: #{tpu_custom_call.1} parent=5 // pred_region
        %s165 = ssub.s32 %s14, 1
        // Predicated region
        $region33: #{tpu_custom_call.1} parent=31 // pred_check
          %p166 = pneg %p61
        $region34: #{tpu_custom_call.1} parent=31 // pred_check_branch
          %168 = sbr.rel (%p166) target = $region36
        $region35: #{tpu_custom_call.1} parent=31 // pred_region
          %169 = dma.done [#allocation3], 131072
        $region36: #{tpu_custom_call.1} parent=31 // pred_fallthru
          _
        // Predicated region
        $region37: #{tpu_custom_call.1} parent=31 // pred_check
          %p170 = pneg %p82
        $region38: #{tpu_custom_call.1} parent=31 // pred_check_branch
          %172 = sbr.rel (%p170) target = $region40
        $region39: #{tpu_custom_call.1} parent=31 // pred_region
          %173 = dma.done [#allocation6], 64
        $region40: #{tpu_custom_call.1} parent=31 // pred_fallthru
          _
        %p174 = scmp.lt.s32.totalorder %s19, 1
        %s175 = scalar_select %p174, %s19, 1
        %s176 = smul.addr %s175, 112
        %s177 = smul.addr %s176, 4
        %s178 = scalar_lea.vmem %s0, %s177
        %p179 = pneg %p40
        %p180 = pneg %p37
        %p181 = pneg %p61
        %p182 = pneg %p58
        %p183 = pneg %p82
        %p184 = pneg %p79
        %p185 = pneg %p108
        %p186 = pneg %p105
        %s187 = sand.u32 %s95, 1
        %s188 = scalar_lea.sflag [#allocation4], %s187
        %s189 = sand.u32 %s95, 1
        %s190 = smul.addr %s189, 4
        %s191 = scalar_lea.vmem [#allocation7], %s190
        %p192 = scmp.lt.s32.totalorder %s19, 1
        %s193 = scalar_select %p192, %s19, 1
        %s194 = smul.addr %s193, 112
        %s195 = smul.addr %s194, 4
        %s196 = scalar_lea.vmem %s0, %s195
        %v197 = vld [vmem:[%s196] sm:$0xff]
        %v198 = vld [vmem:[%s196 + $0x8] sm:$0xff]
        %v199 = vld [vmem:[%s196 + $0x10] sm:$0xff]
        %v200 = vld [vmem:[%s196 + $0x18] sm:$0xff]
        %v201 = vld [vmem:[%s196 + $0x20] sm:$0xff]
        %v202 = vld [vmem:[%s196 + $0x28] sm:$0xff]
        %v203 = vld [vmem:[%s196 + $0x30] sm:$0xff]
        %v204 = vld [vmem:[%s196 + $0x38] sm:$0xff]
        %v205 = vunpack.c.l.bf16 %v197
        %v206 = vunpack.c.h.bf16 %v197
        %v207 = vunpack.c.l.bf16 %v198
        %v208 = vunpack.c.h.bf16 %v198
        %v209 = vunpack.c.l.bf16 %v199
        %v210 = vunpack.c.h.bf16 %v199
        %v211 = vunpack.c.l.bf16 %v200
        %v212 = vunpack.c.h.bf16 %v200
        %v213 = vunpack.c.l.bf16 %v201
        %v214 = vunpack.c.h.bf16 %v201
        %v215 = vunpack.c.l.bf16 %v202
        %v216 = vunpack.c.h.bf16 %v202
        %v217 = vunpack.c.l.bf16 %v203
        %v218 = vunpack.c.h.bf16 %v203
        %v219 = vunpack.c.l.bf16 %v204
        %v220 = vunpack.c.h.bf16 %v204
        %v221 = vrot.slane %v205, 4
        %v222 = vmax.f32 %v205, %v221
        %v223 = vrot.slane %v222, 2
        %v224 = vmax.f32 %v222, %v223
        %v225 = vrot.slane %v224, 1
        %v226 = vmax.f32 %v224, %v225
        %v227 = vrot.slane %v206, 4
        %v228 = vmax.f32 %v206, %v227
        %v229 = vrot.slane %v228, 2
        %v230 = vmax.f32 %v228, %v229
        %v231 = vrot.slane %v230, 1
        %v232 = vmax.f32 %v230, %v231
        %v233 = vrot.slane %v207, 4
        %v234 = vmax.f32 %v207, %v233
        %v235 = vrot.slane %v234, 2
        %v236 = vmax.f32 %v234, %v235
        %v237 = vrot.slane %v236, 1
        %v238 = vmax.f32 %v236, %v237
        %v239 = vrot.slane %v208, 4
        %v240 = vmax.f32 %v208, %v239
        %v241 = vrot.slane %v240, 2
        %v242 = vmax.f32 %v240, %v241
        %v243 = vrot.slane %v242, 1
        %v244 = vmax.f32 %v242, %v243
        %v245 = vrot.slane %v209, 4
        %v246 = vmax.f32 %v209, %v245
        %v247 = vrot.slane %v246, 2
        %v248 = vmax.f32 %v246, %v247
        %v249 = vrot.slane %v248, 1
        %v250 = vmax.f32 %v248, %v249
        %v251 = vrot.slane %v210, 4
        %v252 = vmax.f32 %v210, %v251
        %v253 = vrot.slane %v252, 2
        %v254 = vmax.f32 %v252, %v253
        %v255 = vrot.slane %v254, 1
        %v256 = vmax.f32 %v254, %v255
        %v257 = vrot.slane %v211, 4
        %v258 = vmax.f32 %v211, %v257
        %v259 = vrot.slane %v258, 2
        %v260 = vmax.f32 %v258, %v259
        %v261 = vrot.slane %v260, 1
        %v262 = vmax.f32 %v260, %v261
        %v263 = vrot.slane %v212, 4
        %v264 = vmax.f32 %v212, %v263
        %v265 = vrot.slane %v264, 2
        %v266 = vmax.f32 %v264, %v265
        %v267 = vrot.slane %v266, 1
        %v268 = vmax.f32 %v266, %v267
        %v269 = vrot.slane %v213, 4
        %v270 = vmax.f32 %v213, %v269
        %v271 = vrot.slane %v270, 2
        %v272 = vmax.f32 %v270, %v271
        %v273 = vrot.slane %v272, 1
        %v274 = vmax.f32 %v272, %v273
        %v275 = vrot.slane %v214, 4
        %v276 = vmax.f32 %v214, %v275
        %v277 = vrot.slane %v276, 2
        %v278 = vmax.f32 %v276, %v277
        %v279 = vrot.slane %v278, 1
        %v280 = vmax.f32 %v278, %v279
        %v281 = vrot.slane %v215, 4
        %v282 = vmax.f32 %v215, %v281
        %v283 = vrot.slane %v282, 2
        %v284 = vmax.f32 %v282, %v283
        %v285 = vrot.slane %v284, 1
        %v286 = vmax.f32 %v284, %v285
        %v287 = vrot.slane %v216, 4
        %v288 = vmax.f32 %v216, %v287
        %v289 = vrot.slane %v288, 2
        %v290 = vmax.f32 %v288, %v289
        %v291 = vrot.slane %v290, 1
        %v292 = vmax.f32 %v290, %v291
        %v293 = vrot.slane %v217, 4
        %v294 = vmax.f32 %v217, %v293
        %v295 = vrot.slane %v294, 2
        %v296 = vmax.f32 %v294, %v295
        %v297 = vrot.slane %v296, 1
        %v298 = vmax.f32 %v296, %v297
        %v299 = vrot.slane %v218, 4
        %v300 = vmax.f32 %v218, %v299
        %v301 = vrot.slane %v300, 2
        %v302 = vmax.f32 %v300, %v301
        %v303 = vrot.slane %v302, 1
        %v304 = vmax.f32 %v302, %v303
        %v305 = vrot.slane %v219, 4
        %v306 = vmax.f32 %v219, %v305
        %v307 = vrot.slane %v306, 2
        %v308 = vmax.f32 %v306, %v307
        %v309 = vrot.slane %v308, 1
        %v310 = vmax.f32 %v308, %v309
        %v311 = vrot.slane %v220, 4
        %v312 = vmax.f32 %v220, %v311
        %v313 = vrot.slane %v312, 2
        %v314 = vmax.f32 %v312, %v313
        %v315 = vrot.slane %v314, 1
        %v316 = vmax.f32 %v314, %v315
        %v317 = vrot.slane %v205, 4
        %v318 = vadd.f32 %v205, %v317
        %v319 = vrot.slane %v318, 2
        %v320 = vadd.f32 %v318, %v319
        %v321 = vrot.slane %v320, 1
        %v322 = vadd.f32 %v320, %v321
        %v323 = vrot.slane %v206, 4
        %v324 = vadd.f32 %v206, %v323
        %v325 = vrot.slane %v324, 2
        %v326 = vadd.f32 %v324, %v325
        %v327 = vrot.slane %v326, 1
        %v328 = vadd.f32 %v326, %v327
        %v329 = vrot.slane %v207, 4
        %v330 = vadd.f32 %v207, %v329
        %v331 = vrot.slane %v330, 2
        %v332 = vadd.f32 %v330, %v331
        %v333 = vrot.slane %v332, 1
        %v334 = vadd.f32 %v332, %v333
        %v335 = vrot.slane %v208, 4
        %v336 = vadd.f32 %v208, %v335
        %v337 = vrot.slane %v336, 2
        %v338 = vadd.f32 %v336, %v337
        %v339 = vrot.slane %v338, 1
        %v340 = vadd.f32 %v338, %v339
        %v341 = vrot.slane %v209, 4
        %v342 = vadd.f32 %v209, %v341
        %v343 = vrot.slane %v342, 2
        %v344 = vadd.f32 %v342, %v343
        %v345 = vrot.slane %v344, 1
        %v346 = vadd.f32 %v344, %v345
        %v347 = vrot.slane %v210, 4
        %v348 = vadd.f32 %v210, %v347
        %v349 = vrot.slane %v348, 2
        %v350 = vadd.f32 %v348, %v349
        %v351 = vrot.slane %v350, 1
        %v352 = vadd.f32 %v350, %v351
        %v353 = vrot.slane %v211, 4
        %v354 = vadd.f32 %v211, %v353
        %v355 = vrot.slane %v354, 2
        %v356 = vadd.f32 %v354, %v355
        %v357 = vrot.slane %v356, 1
        %v358 = vadd.f32 %v356, %v357
        %v359 = vrot.slane %v212, 4
        %v360 = vadd.f32 %v212, %v359
        %v361 = vrot.slane %v360, 2
        %v362 = vadd.f32 %v360, %v361
        %v363 = vrot.slane %v362, 1
        %v364 = vadd.f32 %v362, %v363
        %v365 = vrot.slane %v213, 4
        %v366 = vadd.f32 %v213, %v365
        %v367 = vrot.slane %v366, 2
        %v368 = vadd.f32 %v366, %v367
        %v369 = vrot.slane %v368, 1
        %v370 = vadd.f32 %v368, %v369
        %v371 = vrot.slane %v214, 4
        %v372 = vadd.f32 %v214, %v371
        %v373 = vrot.slane %v372, 2
        %v374 = vadd.f32 %v372, %v373
        %v375 = vrot.slane %v374, 1
        %v376 = vadd.f32 %v374, %v375
        %v377 = vrot.slane %v215, 4
        %v378 = vadd.f32 %v215, %v377
        %v379 = vrot.slane %v378, 2
        %v380 = vadd.f32 %v378, %v379
        %v381 = vrot.slane %v380, 1
        %v382 = vadd.f32 %v380, %v381
        %v383 = vrot.slane %v216, 4
        %v384 = vadd.f32 %v216, %v383
        %v385 = vrot.slane %v384, 2
        %v386 = vadd.f32 %v384, %v385
        %v387 = vrot.slane %v386, 1
        %v388 = vadd.f32 %v386, %v387
        %v389 = vrot.slane %v217, 4
        %v390 = vadd.f32 %v217, %v389
        %v391 = vrot.slane %v390, 2
        %v392 = vadd.f32 %v390, %v391
        %v393 = vrot.slane %v392, 1
        %v394 = vadd.f32 %v392, %v393
        %v395 = vrot.slane %v218, 4
        %v396 = vadd.f32 %v218, %v395
        %v397 = vrot.slane %v396, 2
        %v398 = vadd.f32 %v396, %v397
        %v399 = vrot.slane %v398, 1
        %v400 = vadd.f32 %v398, %v399
        %v401 = vrot.slane %v219, 4
        %v402 = vadd.f32 %v219, %v401
        %v403 = vrot.slane %v402, 2
        %v404 = vadd.f32 %v402, %v403
        %v405 = vrot.slane %v404, 1
        %v406 = vadd.f32 %v404, %v405
        %v407 = vrot.slane %v220, 4
        %v408 = vadd.f32 %v220, %v407
        %v409 = vrot.slane %v408, 2
        %v410 = vadd.f32 %v408, %v409
        %v411 = vrot.slane %v410, 1
        %v412 = vadd.f32 %v410, %v411
        %v413 = vmul.f32 %v205, %v205
        %v414 = vmul.f32 %v206, %v206
        %v415 = vmul.f32 %v207, %v207
        %v416 = vmul.f32 %v208, %v208
        %v417 = vmul.f32 %v209, %v209
        %v418 = vmul.f32 %v210, %v210
        %v419 = vmul.f32 %v211, %v211
        %v420 = vmul.f32 %v212, %v212
        %v421 = vmul.f32 %v213, %v213
        %v422 = vmul.f32 %v214, %v214
        %v423 = vmul.f32 %v215, %v215
        %v424 = vmul.f32 %v216, %v216
        %v425 = vmul.f32 %v217, %v217
        %v426 = vmul.f32 %v218, %v218
        %v427 = vmul.f32 %v219, %v219
        %v428 = vmul.f32 %v220, %v220
        %v429 = vmul.f32 %v413, %v205
        %v430 = vmul.f32 %v414, %v206
        %v431 = vmul.f32 %v415, %v207
        %v432 = vmul.f32 %v416, %v208
        %v433 = vmul.f32 %v417, %v209
        %v434 = vmul.f32 %v418, %v210
        %v435 = vmul.f32 %v419, %v211
        %v436 = vmul.f32 %v420, %v212
        %v437 = vmul.f32 %v421, %v213
        %v438 = vmul.f32 %v422, %v214
        %v439 = vmul.f32 %v423, %v215
        %v440 = vmul.f32 %v424, %v216
        %v441 = vmul.f32 %v425, %v217
        %v442 = vmul.f32 %v426, %v218
        %v443 = vmul.f32 %v427, %v219
        %v444 = vmul.f32 %v428, %v220
        %v445 = vrot.slane %v429, 4
        %v446 = vadd.f32 %v429, %v445
        %v447 = vrot.slane %v446, 2
        %v448 = vadd.f32 %v446, %v447
        %v449 = vrot.slane %v448, 1
        %v450 = vadd.f32 %v448, %v449
        %v451 = vrot.slane %v430, 4
        %v452 = vadd.f32 %v430, %v451
        %v453 = vrot.slane %v452, 2
        %v454 = vadd.f32 %v452, %v453
        %v455 = vrot.slane %v454, 1
        %v456 = vadd.f32 %v454, %v455
        %v457 = vrot.slane %v431, 4
        %v458 = vadd.f32 %v431, %v457
        %v459 = vrot.slane %v458, 2
        %v460 = vadd.f32 %v458, %v459
        %v461 = vrot.slane %v460, 1
        %v462 = vadd.f32 %v460, %v461
        %v463 = vrot.slane %v432, 4
        %v464 = vadd.f32 %v432, %v463
        %v465 = vrot.slane %v464, 2
        %v466 = vadd.f32 %v464, %v465
        %v467 = vrot.slane %v466, 1
        %v468 = vadd.f32 %v466, %v467
        %v469 = vrot.slane %v433, 4
        %v470 = vadd.f32 %v433, %v469
        %v471 = vrot.slane %v470, 2
        %v472 = vadd.f32 %v470, %v471
        %v473 = vrot.slane %v472, 1
        %v474 = vadd.f32 %v472, %v473
        %v475 = vrot.slane %v434, 4
        %v476 = vadd.f32 %v434, %v475
        %v477 = vrot.slane %v476, 2
        %v478 = vadd.f32 %v476, %v477
        %v479 = vrot.slane %v478, 1
        %v480 = vadd.f32 %v478, %v479
        %v481 = vrot.slane %v435, 4
        %v482 = vadd.f32 %v435, %v481
        %v483 = vrot.slane %v482, 2
        %v484 = vadd.f32 %v482, %v483
        %v485 = vrot.slane %v484, 1
        %v486 = vadd.f32 %v484, %v485
        %v487 = vrot.slane %v436, 4
        %v488 = vadd.f32 %v436, %v487
        %v489 = vrot.slane %v488, 2
        %v490 = vadd.f32 %v488, %v489
        %v491 = vrot.slane %v490, 1
        %v492 = vadd.f32 %v490, %v491
        %v493 = vrot.slane %v437, 4
        %v494 = vadd.f32 %v437, %v493
        %v495 = vrot.slane %v494, 2
        %v496 = vadd.f32 %v494, %v495
        %v497 = vrot.slane %v496, 1
        %v498 = vadd.f32 %v496, %v497
        %v499 = vrot.slane %v438, 4
        %v500 = vadd.f32 %v438, %v499
        %v501 = vrot.slane %v500, 2
        %v502 = vadd.f32 %v500, %v501
        %v503 = vrot.slane %v502, 1
        %v504 = vadd.f32 %v502, %v503
        %v505 = vrot.slane %v439, 4
        %v506 = vadd.f32 %v439, %v505
        %v507 = vrot.slane %v506, 2
        %v508 = vadd.f32 %v506, %v507
        %v509 = vrot.slane %v508, 1
        %v510 = vadd.f32 %v508, %v509
        %v511 = vrot.slane %v440, 4
        %v512 = vadd.f32 %v440, %v511
        %v513 = vrot.slane %v512, 2
        %v514 = vadd.f32 %v512, %v513
        %v515 = vrot.slane %v514, 1
        %v516 = vadd.f32 %v514, %v515
        %v517 = vrot.slane %v441, 4
        %v518 = vadd.f32 %v441, %v517
        %v519 = vrot.slane %v518, 2
        %v520 = vadd.f32 %v518, %v519
        %v521 = vrot.slane %v520, 1
        %v522 = vadd.f32 %v520, %v521
        %v523 = vrot.slane %v442, 4
        %v524 = vadd.f32 %v442, %v523
        %v525 = vrot.slane %v524, 2
        %v526 = vadd.f32 %v524, %v525
        %v527 = vrot.slane %v526, 1
        %v528 = vadd.f32 %v526, %v527
        %v529 = vrot.slane %v443, 4
        %v530 = vadd.f32 %v443, %v529
        %v531 = vrot.slane %v530, 2
        %v532 = vadd.f32 %v530, %v531
        %v533 = vrot.slane %v532, 1
        %v534 = vadd.f32 %v532, %v533
        %v535 = vrot.slane %v444, 4
        %v536 = vadd.f32 %v444, %v535
        %v537 = vrot.slane %v536, 2
        %v538 = vadd.f32 %v536, %v537
        %v539 = vrot.slane %v538, 1
        %v540 = vadd.f32 %v538, %v539
        %v541 = vld [vmem:[%s196 + $0x40] sm:$0xff]
        %v542 = vld [vmem:[%s196 + $0x48] sm:$0xff]
        %v543 = vld [vmem:[%s196 + $0x50] sm:$0xff]
        %v544 = vld [vmem:[%s196 + $0x58] sm:$0xff]
        %v545 = vld [vmem:[%s196 + $0x60] sm:$0xff]
        %v546 = vld [vmem:[%s196 + $0x68] sm:$0xff]
        %v547 = vld [vmem:[%s196 + $0x70] sm:$0xff]
        %v548 = vld [vmem:[%s196 + $0x78] sm:$0xff]
        %v549 = vunpack.c.l.bf16 %v541
        %v550 = vunpack.c.h.bf16 %v541
        %v551 = vunpack.c.l.bf16 %v542
        %v552 = vunpack.c.h.bf16 %v542
        %v553 = vunpack.c.l.bf16 %v543
        %v554 = vunpack.c.h.bf16 %v543
        %v555 = vunpack.c.l.bf16 %v544
        %v556 = vunpack.c.h.bf16 %v544
        %v557 = vunpack.c.l.bf16 %v545
        %v558 = vunpack.c.h.bf16 %v545
        %v559 = vunpack.c.l.bf16 %v546
        %v560 = vunpack.c.h.bf16 %v546
        %v561 = vunpack.c.l.bf16 %v547
        %v562 = vunpack.c.h.bf16 %v547
        %v563 = vunpack.c.l.bf16 %v548
        %v564 = vunpack.c.h.bf16 %v548
        %v565 = vrot.slane %v549, 4
        %v566 = vmax.f32 %v549, %v565
        %v567 = vrot.slane %v566, 2
        %v568 = vmax.f32 %v566, %v567
        %v569 = vrot.slane %v568, 1
        %v570 = vmax.f32 %v568, %v569
        %v571 = vrot.slane %v550, 4
        %v572 = vmax.f32 %v550, %v571
        %v573 = vrot.slane %v572, 2
        %v574 = vmax.f32 %v572, %v573
        %v575 = vrot.slane %v574, 1
        %v576 = vmax.f32 %v574, %v575
        %v577 = vrot.slane %v551, 4
        %v578 = vmax.f32 %v551, %v577
        %v579 = vrot.slane %v578, 2
        %v580 = vmax.f32 %v578, %v579
        %v581 = vrot.slane %v580, 1
        %v582 = vmax.f32 %v580, %v581
        %v583 = vrot.slane %v552, 4
        %v584 = vmax.f32 %v552, %v583
        %v585 = vrot.slane %v584, 2
        %v586 = vmax.f32 %v584, %v585
        %v587 = vrot.slane %v586, 1
        %v588 = vmax.f32 %v586, %v587
        %v589 = vrot.slane %v553, 4
        %v590 = vmax.f32 %v553, %v589
        %v591 = vrot.slane %v590, 2
        %v592 = vmax.f32 %v590, %v591
        %v593 = vrot.slane %v592, 1
        %v594 = vmax.f32 %v592, %v593
        %v595 = vrot.slane %v554, 4
        %v596 = vmax.f32 %v554, %v595
        %v597 = vrot.slane %v596, 2
        %v598 = vmax.f32 %v596, %v597
        %v599 = vrot.slane %v598, 1
        %v600 = vmax.f32 %v598, %v599
        %v601 = vrot.slane %v555, 4
        %v602 = vmax.f32 %v555, %v601
        %v603 = vrot.slane %v602, 2
        %v604 = vmax.f32 %v602, %v603
        %v605 = vrot.slane %v604, 1
        %v606 = vmax.f32 %v604, %v605
        %v607 = vrot.slane %v556, 4
        %v608 = vmax.f32 %v556, %v607
        %v609 = vrot.slane %v608, 2
        %v610 = vmax.f32 %v608, %v609
        %v611 = vrot.slane %v610, 1
        %v612 = vmax.f32 %v610, %v611
        %v613 = vrot.slane %v557, 4
        %v614 = vmax.f32 %v557, %v613
        %v615 = vrot.slane %v614, 2
        %v616 = vmax.f32 %v614, %v615
        %v617 = vrot.slane %v616, 1
        %v618 = vmax.f32 %v616, %v617
        %v619 = vrot.slane %v558, 4
        %v620 = vmax.f32 %v558, %v619
        %v621 = vrot.slane %v620, 2
        %v622 = vmax.f32 %v620, %v621
        %v623 = vrot.slane %v622, 1
        %v624 = vmax.f32 %v622, %v623
        %v625 = vrot.slane %v559, 4
        %v626 = vmax.f32 %v559, %v625
        %v627 = vrot.slane %v626, 2
        %v628 = vmax.f32 %v626, %v627
        %v629 = vrot.slane %v628, 1
        %v630 = vmax.f32 %v628, %v629
        %v631 = vrot.slane %v560, 4
        %v632 = vmax.f32 %v560, %v631
        %v633 = vrot.slane %v632, 2
        %v634 = vmax.f32 %v632, %v633
        %v635 = vrot.slane %v634, 1
        %v636 = vmax.f32 %v634, %v635
        %v637 = vrot.slane %v561, 4
        %v638 = vmax.f32 %v561, %v637
        %v639 = vrot.slane %v638, 2
        %v640 = vmax.f32 %v638, %v639
        %v641 = vrot.slane %v640, 1
        %v642 = vmax.f32 %v640, %v641
        %v643 = vrot.slane %v562, 4
        %v644 = vmax.f32 %v562, %v643
        %v645 = vrot.slane %v644, 2
        %v646 = vmax.f32 %v644, %v645
        %v647 = vrot.slane %v646, 1
        %v648 = vmax.f32 %v646, %v647
        %v649 = vrot.slane %v563, 4
        %v650 = vmax.f32 %v563, %v649
        %v651 = vrot.slane %v650, 2
        %v652 = vmax.f32 %v650, %v651
        %v653 = vrot.slane %v652, 1
        %v654 = vmax.f32 %v652, %v653
        %v655 = vrot.slane %v564, 4
        %v656 = vmax.f32 %v564, %v655
        %v657 = vrot.slane %v656, 2
        %v658 = vmax.f32 %v656, %v657
        %v659 = vrot.slane %v658, 1
        %v660 = vmax.f32 %v658, %v659
        %v661 = vrot.slane %v549, 4
        %v662 = vadd.f32 %v549, %v661
        %v663 = vrot.slane %v662, 2
        %v664 = vadd.f32 %v662, %v663
        %v665 = vrot.slane %v664, 1
        %v666 = vadd.f32 %v664, %v665
        %v667 = vrot.slane %v550, 4
        %v668 = vadd.f32 %v550, %v667
        %v669 = vrot.slane %v668, 2
        %v670 = vadd.f32 %v668, %v669
        %v671 = vrot.slane %v670, 1
        %v672 = vadd.f32 %v670, %v671
        %v673 = vrot.slane %v551, 4
        %v674 = vadd.f32 %v551, %v673
        %v675 = vrot.slane %v674, 2
        %v676 = vadd.f32 %v674, %v675
        %v677 = vrot.slane %v676, 1
        %v678 = vadd.f32 %v676, %v677
        %v679 = vrot.slane %v552, 4
        %v680 = vadd.f32 %v552, %v679
        %v681 = vrot.slane %v680, 2
        %v682 = vadd.f32 %v680, %v681
        %v683 = vrot.slane %v682, 1
        %v684 = vadd.f32 %v682, %v683
        %v685 = vrot.slane %v553, 4
        %v686 = vadd.f32 %v553, %v685
        %v687 = vrot.slane %v686, 2
        %v688 = vadd.f32 %v686, %v687
        %v689 = vrot.slane %v688, 1
        %v690 = vadd.f32 %v688, %v689
        %v691 = vrot.slane %v554, 4
        %v692 = vadd.f32 %v554, %v691
        %v693 = vrot.slane %v692, 2
        %v694 = vadd.f32 %v692, %v693
        %v695 = vrot.slane %v694, 1
        %v696 = vadd.f32 %v694, %v695
        %v697 = vrot.slane %v555, 4
        %v698 = vadd.f32 %v555, %v697
        %v699 = vrot.slane %v698, 2
        %v700 = vadd.f32 %v698, %v699
        %v701 = vrot.slane %v700, 1
        %v702 = vadd.f32 %v700, %v701
        %v703 = vrot.slane %v556, 4
        %v704 = vadd.f32 %v556, %v703
        %v705 = vrot.slane %v704, 2
        %v706 = vadd.f32 %v704, %v705
        %v707 = vrot.slane %v706, 1
        %v708 = vadd.f32 %v706, %v707
        %v709 = vrot.slane %v557, 4
        %v710 = vadd.f32 %v557, %v709
        %v711 = vrot.slane %v710, 2
        %v712 = vadd.f32 %v710, %v711
        %v713 = vrot.slane %v712, 1
        %v714 = vadd.f32 %v712, %v713
        %v715 = vrot.slane %v558, 4
        %v716 = vadd.f32 %v558, %v715
        %v717 = vrot.slane %v716, 2
        %v718 = vadd.f32 %v716, %v717
        %v719 = vrot.slane %v718, 1
        %v720 = vadd.f32 %v718, %v719
        %v721 = vrot.slane %v559, 4
        %v722 = vadd.f32 %v559, %v721
        %v723 = vrot.slane %v722, 2
        %v724 = vadd.f32 %v722, %v723
        %v725 = vrot.slane %v724, 1
        %v726 = vadd.f32 %v724, %v725
        %v727 = vrot.slane %v560, 4
        %v728 = vadd.f32 %v560, %v727
        %v729 = vrot.slane %v728, 2
        %v730 = vadd.f32 %v728, %v729
        %v731 = vrot.slane %v730, 1
        %v732 = vadd.f32 %v730, %v731
        %v733 = vrot.slane %v561, 4
        %v734 = vadd.f32 %v561, %v733
        %v735 = vrot.slane %v734, 2
        %v736 = vadd.f32 %v734, %v735
        %v737 = vrot.slane %v736, 1
        %v738 = vadd.f32 %v736, %v737
        %v739 = vrot.slane %v562, 4
        %v740 = vadd.f32 %v562, %v739
        %v741 = vrot.slane %v740, 2
        %v742 = vadd.f32 %v740, %v741
        %v743 = vrot.slane %v742, 1
        %v744 = vadd.f32 %v742, %v743
        %v745 = vrot.slane %v563, 4
        %v746 = vadd.f32 %v563, %v745
        %v747 = vrot.slane %v746, 2
        %v748 = vadd.f32 %v746, %v747
        %v749 = vrot.slane %v748, 1
        %v750 = vadd.f32 %v748, %v749
        %v751 = vrot.slane %v564, 4
        %v752 = vadd.f32 %v564, %v751
        %v753 = vrot.slane %v752, 2
        %v754 = vadd.f32 %v752, %v753
        %v755 = vrot.slane %v754, 1
        %v756 = vadd.f32 %v754, %v755
        %v757 = vmul.f32 %v549, %v549
        %v758 = vmul.f32 %v550, %v550
        %v759 = vmul.f32 %v551, %v551
        %v760 = vmul.f32 %v552, %v552
        %v761 = vmul.f32 %v553, %v553
        %v762 = vmul.f32 %v554, %v554
        %v763 = vmul.f32 %v555, %v555
        %v764 = vmul.f32 %v556, %v556
        %v765 = vmul.f32 %v557, %v557
        %v766 = vmul.f32 %v558, %v558
        %v767 = vmul.f32 %v559, %v559
        %v768 = vmul.f32 %v560, %v560
        %v769 = vmul.f32 %v561, %v561
        %v770 = vmul.f32 %v562, %v562
        %v771 = vmul.f32 %v563, %v563
        %v772 = vmul.f32 %v564, %v564
        %v773 = vmul.f32 %v757, %v549
        %v774 = vmul.f32 %v758, %v550
        %v775 = vmul.f32 %v759, %v551
        %v776 = vmul.f32 %v760, %v552
        %v777 = vmul.f32 %v761, %v553
        %v778 = vmul.f32 %v762, %v554
        %v779 = vmul.f32 %v763, %v555
        %v780 = vmul.f32 %v764, %v556
        %v781 = vmul.f32 %v765, %v557
        %v782 = vmul.f32 %v766, %v558
        %v783 = vmul.f32 %v767, %v559
        %v784 = vmul.f32 %v768, %v560
        %v785 = vmul.f32 %v769, %v561
        %v786 = vmul.f32 %v770, %v562
        %v787 = vmul.f32 %v771, %v563
        %v788 = vmul.f32 %v772, %v564
        %v789 = vrot.slane %v773, 4
        %v790 = vadd.f32 %v773, %v789
        %v791 = vrot.slane %v790, 2
        %v792 = vadd.f32 %v790, %v791
        %v793 = vrot.slane %v792, 1
        %v794 = vadd.f32 %v792, %v793
        %v795 = vrot.slane %v774, 4
        %v796 = vadd.f32 %v774, %v795
        %v797 = vrot.slane %v796, 2
        %v798 = vadd.f32 %v796, %v797
        %v799 = vrot.slane %v798, 1
        %v800 = vadd.f32 %v798, %v799
        %v801 = vrot.slane %v775, 4
        %v802 = vadd.f32 %v775, %v801
        %v803 = vrot.slane %v802, 2
        %v804 = vadd.f32 %v802, %v803
        %v805 = vrot.slane %v804, 1
        %v806 = vadd.f32 %v804, %v805
        %v807 = vrot.slane %v776, 4
        %v808 = vadd.f32 %v776, %v807
        %v809 = vrot.slane %v808, 2
        %v810 = vadd.f32 %v808, %v809
        %v811 = vrot.slane %v810, 1
        %v812 = vadd.f32 %v810, %v811
        %v813 = vrot.slane %v777, 4
        %v814 = vadd.f32 %v777, %v813
        %v815 = vrot.slane %v814, 2
        %v816 = vadd.f32 %v814, %v815
        %v817 = vrot.slane %v816, 1
        %v818 = vadd.f32 %v816, %v817
        %v819 = vrot.slane %v778, 4
        %v820 = vadd.f32 %v778, %v819
        %v821 = vrot.slane %v820, 2
        %v822 = vadd.f32 %v820, %v821
        %v823 = vrot.slane %v822, 1
        %v824 = vadd.f32 %v822, %v823
        %v825 = vrot.slane %v779, 4
        %v826 = vadd.f32 %v779, %v825
        %v827 = vrot.slane %v826, 2
        %v828 = vadd.f32 %v826, %v827
        %v829 = vrot.slane %v828, 1
        %v830 = vadd.f32 %v828, %v829
        %v831 = vrot.slane %v780, 4
        %v832 = vadd.f32 %v780, %v831
        %v833 = vrot.slane %v832, 2
        %v834 = vadd.f32 %v832, %v833
        %v835 = vrot.slane %v834, 1
        %v836 = vadd.f32 %v834, %v835
        %v837 = vrot.slane %v781, 4
        %v838 = vadd.f32 %v781, %v837
        %v839 = vrot.slane %v838, 2
        %v840 = vadd.f32 %v838, %v839
        %v841 = vrot.slane %v840, 1
        %v842 = vadd.f32 %v840, %v841
        %v843 = vrot.slane %v782, 4
        %v844 = vadd.f32 %v782, %v843
        %v845 = vrot.slane %v844, 2
        %v846 = vadd.f32 %v844, %v845
        %v847 = vrot.slane %v846, 1
        %v848 = vadd.f32 %v846, %v847
        %v849 = vrot.slane %v783, 4
        %v850 = vadd.f32 %v783, %v849
        %v851 = vrot.slane %v850, 2
        %v852 = vadd.f32 %v850, %v851
        %v853 = vrot.slane %v852, 1
        %v854 = vadd.f32 %v852, %v853
        %v855 = vrot.slane %v784, 4
        %v856 = vadd.f32 %v784, %v855
        %v857 = vrot.slane %v856, 2
        %v858 = vadd.f32 %v856, %v857
        %v859 = vrot.slane %v858, 1
        %v860 = vadd.f32 %v858, %v859
        %v861 = vrot.slane %v785, 4
        %v862 = vadd.f32 %v785, %v861
        %v863 = vrot.slane %v862, 2
        %v864 = vadd.f32 %v862, %v863
        %v865 = vrot.slane %v864, 1
        %v866 = vadd.f32 %v864, %v865
        %v867 = vrot.slane %v786, 4
        %v868 = vadd.f32 %v786, %v867
        %v869 = vrot.slane %v868, 2
        %v870 = vadd.f32 %v868, %v869
        %v871 = vrot.slane %v870, 1
        %v872 = vadd.f32 %v870, %v871
        %v873 = vrot.slane %v787, 4
        %v874 = vadd.f32 %v787, %v873
        %v875 = vrot.slane %v874, 2
        %v876 = vadd.f32 %v874, %v875
        %v877 = vrot.slane %v876, 1
        %v878 = vadd.f32 %v876, %v877
        %v879 = vrot.slane %v788, 4
        %v880 = vadd.f32 %v788, %v879
        %v881 = vrot.slane %v880, 2
        %v882 = vadd.f32 %v880, %v881
        %v883 = vrot.slane %v882, 1
        %v884 = vadd.f32 %v882, %v883
        %v885 = vmax.f32 %v226, %v570
        %v886 = vmax.f32 %v232, %v576
        %v887 = vmax.f32 %v238, %v582
        %v888 = vmax.f32 %v244, %v588
        %v889 = vmax.f32 %v250, %v594
        %v890 = vmax.f32 %v256, %v600
        %v891 = vmax.f32 %v262, %v606
        %v892 = vmax.f32 %v268, %v612
        %v893 = vmax.f32 %v274, %v618
        %v894 = vmax.f32 %v280, %v624
        %v895 = vmax.f32 %v286, %v630
        %v896 = vmax.f32 %v292, %v636
        %v897 = vmax.f32 %v298, %v642
        %v898 = vmax.f32 %v304, %v648
        %v899 = vmax.f32 %v310, %v654
        %v900 = vmax.f32 %v316, %v660
        %v901 = vadd.f32 %v322, %v666
        %v902 = vadd.f32 %v328, %v672
        %v903 = vadd.f32 %v334, %v678
        %v904 = vadd.f32 %v340, %v684
        %v905 = vadd.f32 %v346, %v690
        %v906 = vadd.f32 %v352, %v696
        %v907 = vadd.f32 %v358, %v702
        %v908 = vadd.f32 %v364, %v708
        %v909 = vadd.f32 %v370, %v714
        %v910 = vadd.f32 %v376, %v720
        %v911 = vadd.f32 %v382, %v726
        %v912 = vadd.f32 %v388, %v732
        %v913 = vadd.f32 %v394, %v738
        %v914 = vadd.f32 %v400, %v744
        %v915 = vadd.f32 %v406, %v750
        %v916 = vadd.f32 %v412, %v756
        %v917 = vadd.f32 %v450, %v794
        %v918 = vadd.f32 %v456, %v800
        %v919 = vadd.f32 %v462, %v806
        %v920 = vadd.f32 %v468, %v812
        %v921 = vadd.f32 %v474, %v818
        %v922 = vadd.f32 %v480, %v824
        %v923 = vadd.f32 %v486, %v830
        %v924 = vadd.f32 %v492, %v836
        %v925 = vadd.f32 %v498, %v842
        %v926 = vadd.f32 %v504, %v848
        %v927 = vadd.f32 %v510, %v854
        %v928 = vadd.f32 %v516, %v860
        %v929 = vadd.f32 %v522, %v866
        %v930 = vadd.f32 %v528, %v872
        %v931 = vadd.f32 %v534, %v878
        %v932 = vadd.f32 %v540, %v884
        %v933 = vld [vmem:[%s196 + $0x80] sm:$0xff]
        %v934 = vld [vmem:[%s196 + $0x88] sm:$0xff]
        %v935 = vld [vmem:[%s196 + $0x90] sm:$0xff]
        %v936 = vld [vmem:[%s196 + $0x98] sm:$0xff]
        %v937 = vld [vmem:[%s196 + $0xa0] sm:$0xff]
        %v938 = vld [vmem:[%s196 + $0xa8] sm:$0xff]
        %v939 = vld [vmem:[%s196 + $0xb0] sm:$0xff]
        %v940 = vld [vmem:[%s196 + $0xb8] sm:$0xff]
        %v941 = vunpack.c.l.bf16 %v933
        %v942 = vunpack.c.h.bf16 %v933
        %v943 = vunpack.c.l.bf16 %v934
        %v944 = vunpack.c.h.bf16 %v934
        %v945 = vunpack.c.l.bf16 %v935
        %v946 = vunpack.c.h.bf16 %v935
        %v947 = vunpack.c.l.bf16 %v936
        %v948 = vunpack.c.h.bf16 %v936
        %v949 = vunpack.c.l.bf16 %v937
        %v950 = vunpack.c.h.bf16 %v937
        %v951 = vunpack.c.l.bf16 %v938
        %v952 = vunpack.c.h.bf16 %v938
        %v953 = vunpack.c.l.bf16 %v939
        %v954 = vunpack.c.h.bf16 %v939
        %v955 = vunpack.c.l.bf16 %v940
        %v956 = vunpack.c.h.bf16 %v940
        %v957 = vrot.slane %v941, 4
        %v958 = vmax.f32 %v941, %v957
        %v959 = vrot.slane %v958, 2
        %v960 = vmax.f32 %v958, %v959
        %v961 = vrot.slane %v960, 1
        %v962 = vmax.f32 %v960, %v961
        %v963 = vrot.slane %v942, 4
        %v964 = vmax.f32 %v942, %v963
        %v965 = vrot.slane %v964, 2
        %v966 = vmax.f32 %v964, %v965
        %v967 = vrot.slane %v966, 1
        %v968 = vmax.f32 %v966, %v967
        %v969 = vrot.slane %v943, 4
        %v970 = vmax.f32 %v943, %v969
        %v971 = vrot.slane %v970, 2
        %v972 = vmax.f32 %v970, %v971
        %v973 = vrot.slane %v972, 1
        %v974 = vmax.f32 %v972, %v973
        %v975 = vrot.slane %v944, 4
        %v976 = vmax.f32 %v944, %v975
        %v977 = vrot.slane %v976, 2
        %v978 = vmax.f32 %v976, %v977
        %v979 = vrot.slane %v978, 1
        %v980 = vmax.f32 %v978, %v979
        %v981 = vrot.slane %v945, 4
        %v982 = vmax.f32 %v945, %v981
        %v983 = vrot.slane %v982, 2
        %v984 = vmax.f32 %v982, %v983
        %v985 = vrot.slane %v984, 1
        %v986 = vmax.f32 %v984, %v985
        %v987 = vrot.slane %v946, 4
        %v988 = vmax.f32 %v946, %v987
        %v989 = vrot.slane %v988, 2
        %v990 = vmax.f32 %v988, %v989
        %v991 = vrot.slane %v990, 1
        %v992 = vmax.f32 %v990, %v991
        %v993 = vrot.slane %v947, 4
        %v994 = vmax.f32 %v947, %v993
        %v995 = vrot.slane %v994, 2
        %v996 = vmax.f32 %v994, %v995
        %v997 = vrot.slane %v996, 1
        %v998 = vmax.f32 %v996, %v997
        %v999 = vrot.slane %v948, 4
        %v1000 = vmax.f32 %v948, %v999
        %v1001 = vrot.slane %v1000, 2
        %v1002 = vmax.f32 %v1000, %v1001
        %v1003 = vrot.slane %v1002, 1
        %v1004 = vmax.f32 %v1002, %v1003
        %v1005 = vrot.slane %v949, 4
        %v1006 = vmax.f32 %v949, %v1005
        %v1007 = vrot.slane %v1006, 2
        %v1008 = vmax.f32 %v1006, %v1007
        %v1009 = vrot.slane %v1008, 1
        %v1010 = vmax.f32 %v1008, %v1009
        %v1011 = vrot.slane %v950, 4
        %v1012 = vmax.f32 %v950, %v1011
        %v1013 = vrot.slane %v1012, 2
        %v1014 = vmax.f32 %v1012, %v1013
        %v1015 = vrot.slane %v1014, 1
        %v1016 = vmax.f32 %v1014, %v1015
        %v1017 = vrot.slane %v951, 4
        %v1018 = vmax.f32 %v951, %v1017
        %v1019 = vrot.slane %v1018, 2
        %v1020 = vmax.f32 %v1018, %v1019
        %v1021 = vrot.slane %v1020, 1
        %v1022 = vmax.f32 %v1020, %v1021
        %v1023 = vrot.slane %v952, 4
        %v1024 = vmax.f32 %v952, %v1023
        %v1025 = vrot.slane %v1024, 2
        %v1026 = vmax.f32 %v1024, %v1025
        %v1027 = vrot.slane %v1026, 1
        %v1028 = vmax.f32 %v1026, %v1027
        %v1029 = vrot.slane %v953, 4
        %v1030 = vmax.f32 %v953, %v1029
        %v1031 = vrot.slane %v1030, 2
        %v1032 = vmax.f32 %v1030, %v1031
        %v1033 = vrot.slane %v1032, 1
        %v1034 = vmax.f32 %v1032, %v1033
        %v1035 = vrot.slane %v954, 4
        %v1036 = vmax.f32 %v954, %v1035
        %v1037 = vrot.slane %v1036, 2
        %v1038 = vmax.f32 %v1036, %v1037
        %v1039 = vrot.slane %v1038, 1
        %v1040 = vmax.f32 %v1038, %v1039
        %v1041 = vrot.slane %v955, 4
        %v1042 = vmax.f32 %v955, %v1041
        %v1043 = vrot.slane %v1042, 2
        %v1044 = vmax.f32 %v1042, %v1043
        %v1045 = vrot.slane %v1044, 1
        %v1046 = vmax.f32 %v1044, %v1045
        %v1047 = vrot.slane %v956, 4
        %v1048 = vmax.f32 %v956, %v1047
        %v1049 = vrot.slane %v1048, 2
        %v1050 = vmax.f32 %v1048, %v1049
        %v1051 = vrot.slane %v1050, 1
        %v1052 = vmax.f32 %v1050, %v1051
        %v1053 = vrot.slane %v941, 4
        %v1054 = vadd.f32 %v941, %v1053
        %v1055 = vrot.slane %v1054, 2
        %v1056 = vadd.f32 %v1054, %v1055
        %v1057 = vrot.slane %v1056, 1
        %v1058 = vadd.f32 %v1056, %v1057
        %v1059 = vrot.slane %v942, 4
        %v1060 = vadd.f32 %v942, %v1059
        %v1061 = vrot.slane %v1060, 2
        %v1062 = vadd.f32 %v1060, %v1061
        %v1063 = vrot.slane %v1062, 1
        %v1064 = vadd.f32 %v1062, %v1063
        %v1065 = vrot.slane %v943, 4
        %v1066 = vadd.f32 %v943, %v1065
        %v1067 = vrot.slane %v1066, 2
        %v1068 = vadd.f32 %v1066, %v1067
        %v1069 = vrot.slane %v1068, 1
        %v1070 = vadd.f32 %v1068, %v1069
        %v1071 = vrot.slane %v944, 4
        %v1072 = vadd.f32 %v944, %v1071
        %v1073 = vrot.slane %v1072, 2
        %v1074 = vadd.f32 %v1072, %v1073
        %v1075 = vrot.slane %v1074, 1
        %v1076 = vadd.f32 %v1074, %v1075
        %v1077 = vrot.slane %v945, 4
        %v1078 = vadd.f32 %v945, %v1077
        %v1079 = vrot.slane %v1078, 2
        %v1080 = vadd.f32 %v1078, %v1079
        %v1081 = vrot.slane %v1080, 1
        %v1082 = vadd.f32 %v1080, %v1081
        %v1083 = vrot.slane %v946, 4
        %v1084 = vadd.f32 %v946, %v1083
        %v1085 = vrot.slane %v1084, 2
        %v1086 = vadd.f32 %v1084, %v1085
        %v1087 = vrot.slane %v1086, 1
        %v1088 = vadd.f32 %v1086, %v1087
        %v1089 = vrot.slane %v947, 4
        %v1090 = vadd.f32 %v947, %v1089
        %v1091 = vrot.slane %v1090, 2
        %v1092 = vadd.f32 %v1090, %v1091
        %v1093 = vrot.slane %v1092, 1
        %v1094 = vadd.f32 %v1092, %v1093
        %v1095 = vrot.slane %v948, 4
        %v1096 = vadd.f32 %v948, %v1095
        %v1097 = vrot.slane %v1096, 2
        %v1098 = vadd.f32 %v1096, %v1097
        %v1099 = vrot.slane %v1098, 1
        %v1100 = vadd.f32 %v1098, %v1099
        %v1101 = vrot.slane %v949, 4
        %v1102 = vadd.f32 %v949, %v1101
        %v1103 = vrot.slane %v1102, 2
        %v1104 = vadd.f32 %v1102, %v1103
        %v1105 = vrot.slane %v1104, 1
        %v1106 = vadd.f32 %v1104, %v1105
        %v1107 = vrot.slane %v950, 4
        %v1108 = vadd.f32 %v950, %v1107
        %v1109 = vrot.slane %v1108, 2
        %v1110 = vadd.f32 %v1108, %v1109
        %v1111 = vrot.slane %v1110, 1
        %v1112 = vadd.f32 %v1110, %v1111
        %v1113 = vrot.slane %v951, 4
        %v1114 = vadd.f32 %v951, %v1113
        %v1115 = vrot.slane %v1114, 2
        %v1116 = vadd.f32 %v1114, %v1115
        %v1117 = vrot.slane %v1116, 1
        %v1118 = vadd.f32 %v1116, %v1117
        %v1119 = vrot.slane %v952, 4
        %v1120 = vadd.f32 %v952, %v1119
        %v1121 = vrot.slane %v1120, 2
        %v1122 = vadd.f32 %v1120, %v1121
        %v1123 = vrot.slane %v1122, 1
        %v1124 = vadd.f32 %v1122, %v1123
        %v1125 = vrot.slane %v953, 4
        %v1126 = vadd.f32 %v953, %v1125
        %v1127 = vrot.slane %v1126, 2
        %v1128 = vadd.f32 %v1126, %v1127
        %v1129 = vrot.slane %v1128, 1
        %v1130 = vadd.f32 %v1128, %v1129
        %v1131 = vrot.slane %v954, 4
        %v1132 = vadd.f32 %v954, %v1131
        %v1133 = vrot.slane %v1132, 2
        %v1134 = vadd.f32 %v1132, %v1133
        %v1135 = vrot.slane %v1134, 1
        %v1136 = vadd.f32 %v1134, %v1135
        %v1137 = vrot.slane %v955, 4
        %v1138 = vadd.f32 %v955, %v1137
        %v1139 = vrot.slane %v1138, 2
        %v1140 = vadd.f32 %v1138, %v1139
        %v1141 = vrot.slane %v1140, 1
        %v1142 = vadd.f32 %v1140, %v1141
        %v1143 = vrot.slane %v956, 4
        %v1144 = vadd.f32 %v956, %v1143
        %v1145 = vrot.slane %v1144, 2
        %v1146 = vadd.f32 %v1144, %v1145
        %v1147 = vrot.slane %v1146, 1
        %v1148 = vadd.f32 %v1146, %v1147
        %v1149 = vmul.f32 %v941, %v941
        %v1150 = vmul.f32 %v942, %v942
        %v1151 = vmul.f32 %v943, %v943
        %v1152 = vmul.f32 %v944, %v944
        %v1153 = vmul.f32 %v945, %v945
        %v1154 = vmul.f32 %v946, %v946
        %v1155 = vmul.f32 %v947, %v947
        %v1156 = vmul.f32 %v948, %v948
        %v1157 = vmul.f32 %v949, %v949
        %v1158 = vmul.f32 %v950, %v950
        %v1159 = vmul.f32 %v951, %v951
        %v1160 = vmul.f32 %v952, %v952
        %v1161 = vmul.f32 %v953, %v953
        %v1162 = vmul.f32 %v954, %v954
        %v1163 = vmul.f32 %v955, %v955
        %v1164 = vmul.f32 %v956, %v956
        %v1165 = vmul.f32 %v1149, %v941
        %v1166 = vmul.f32 %v1150, %v942
        %v1167 = vmul.f32 %v1151, %v943
        %v1168 = vmul.f32 %v1152, %v944
        %v1169 = vmul.f32 %v1153, %v945
        %v1170 = vmul.f32 %v1154, %v946
        %v1171 = vmul.f32 %v1155, %v947
        %v1172 = vmul.f32 %v1156, %v948
        %v1173 = vmul.f32 %v1157, %v949
        %v1174 = vmul.f32 %v1158, %v950
        %v1175 = vmul.f32 %v1159, %v951
        %v1176 = vmul.f32 %v1160, %v952
        %v1177 = vmul.f32 %v1161, %v953
        %v1178 = vmul.f32 %v1162, %v954
        %v1179 = vmul.f32 %v1163, %v955
        %v1180 = vmul.f32 %v1164, %v956
        %v1181 = vrot.slane %v1165, 4
        %v1182 = vadd.f32 %v1165, %v1181
        %v1183 = vrot.slane %v1182, 2
        %v1184 = vadd.f32 %v1182, %v1183
        %v1185 = vrot.slane %v1184, 1
        %v1186 = vadd.f32 %v1184, %v1185
        %v1187 = vrot.slane %v1166, 4
        %v1188 = vadd.f32 %v1166, %v1187
        %v1189 = vrot.slane %v1188, 2
        %v1190 = vadd.f32 %v1188, %v1189
        %v1191 = vrot.slane %v1190, 1
        %v1192 = vadd.f32 %v1190, %v1191
        %v1193 = vrot.slane %v1167, 4
        %v1194 = vadd.f32 %v1167, %v1193
        %v1195 = vrot.slane %v1194, 2
        %v1196 = vadd.f32 %v1194, %v1195
        %v1197 = vrot.slane %v1196, 1
        %v1198 = vadd.f32 %v1196, %v1197
        %v1199 = vrot.slane %v1168, 4
        %v1200 = vadd.f32 %v1168, %v1199
        %v1201 = vrot.slane %v1200, 2
        %v1202 = vadd.f32 %v1200, %v1201
        %v1203 = vrot.slane %v1202, 1
        %v1204 = vadd.f32 %v1202, %v1203
        %v1205 = vrot.slane %v1169, 4
        %v1206 = vadd.f32 %v1169, %v1205
        %v1207 = vrot.slane %v1206, 2
        %v1208 = vadd.f32 %v1206, %v1207
        %v1209 = vrot.slane %v1208, 1
        %v1210 = vadd.f32 %v1208, %v1209
        %v1211 = vrot.slane %v1170, 4
        %v1212 = vadd.f32 %v1170, %v1211
        %v1213 = vrot.slane %v1212, 2
        %v1214 = vadd.f32 %v1212, %v1213
        %v1215 = vrot.slane %v1214, 1
        %v1216 = vadd.f32 %v1214, %v1215
        %v1217 = vrot.slane %v1171, 4
        %v1218 = vadd.f32 %v1171, %v1217
        %v1219 = vrot.slane %v1218, 2
        %v1220 = vadd.f32 %v1218, %v1219
        %v1221 = vrot.slane %v1220, 1
        %v1222 = vadd.f32 %v1220, %v1221
        %v1223 = vrot.slane %v1172, 4
        %v1224 = vadd.f32 %v1172, %v1223
        %v1225 = vrot.slane %v1224, 2
        %v1226 = vadd.f32 %v1224, %v1225
        %v1227 = vrot.slane %v1226, 1
        %v1228 = vadd.f32 %v1226, %v1227
        %v1229 = vrot.slane %v1173, 4
        %v1230 = vadd.f32 %v1173, %v1229
        %v1231 = vrot.slane %v1230, 2
        %v1232 = vadd.f32 %v1230, %v1231
        %v1233 = vrot.slane %v1232, 1
        %v1234 = vadd.f32 %v1232, %v1233
        %v1235 = vrot.slane %v1174, 4
        %v1236 = vadd.f32 %v1174, %v1235
        %v1237 = vrot.slane %v1236, 2
        %v1238 = vadd.f32 %v1236, %v1237
        %v1239 = vrot.slane %v1238, 1
        %v1240 = vadd.f32 %v1238, %v1239
        %v1241 = vrot.slane %v1175, 4
        %v1242 = vadd.f32 %v1175, %v1241
        %v1243 = vrot.slane %v1242, 2
        %v1244 = vadd.f32 %v1242, %v1243
        %v1245 = vrot.slane %v1244, 1
        %v1246 = vadd.f32 %v1244, %v1245
        %v1247 = vrot.slane %v1176, 4
        %v1248 = vadd.f32 %v1176, %v1247
        %v1249 = vrot.slane %v1248, 2
        %v1250 = vadd.f32 %v1248, %v1249
        %v1251 = vrot.slane %v1250, 1
        %v1252 = vadd.f32 %v1250, %v1251
        %v1253 = vrot.slane %v1177, 4
        %v1254 = vadd.f32 %v1177, %v1253
        %v1255 = vrot.slane %v1254, 2
        %v1256 = vadd.f32 %v1254, %v1255
        %v1257 = vrot.slane %v1256, 1
        %v1258 = vadd.f32 %v1256, %v1257
        %v1259 = vrot.slane %v1178, 4
        %v1260 = vadd.f32 %v1178, %v1259
        %v1261 = vrot.slane %v1260, 2
        %v1262 = vadd.f32 %v1260, %v1261
        %v1263 = vrot.slane %v1262, 1
        %v1264 = vadd.f32 %v1262, %v1263
        %v1265 = vrot.slane %v1179, 4
        %v1266 = vadd.f32 %v1179, %v1265
        %v1267 = vrot.slane %v1266, 2
        %v1268 = vadd.f32 %v1266, %v1267
        %v1269 = vrot.slane %v1268, 1
        %v1270 = vadd.f32 %v1268, %v1269
        %v1271 = vrot.slane %v1180, 4
        %v1272 = vadd.f32 %v1180, %v1271
        %v1273 = vrot.slane %v1272, 2
        %v1274 = vadd.f32 %v1272, %v1273
        %v1275 = vrot.slane %v1274, 1
        %v1276 = vadd.f32 %v1274, %v1275
        %v1277 = vmax.f32 %v885, %v962
        %v1278 = vmax.f32 %v886, %v968
        %v1279 = vmax.f32 %v887, %v974
        %v1280 = vmax.f32 %v888, %v980
        %v1281 = vmax.f32 %v889, %v986
        %v1282 = vmax.f32 %v890, %v992
        %v1283 = vmax.f32 %v891, %v998
        %v1284 = vmax.f32 %v892, %v1004
        %v1285 = vmax.f32 %v893, %v1010
        %v1286 = vmax.f32 %v894, %v1016
        %v1287 = vmax.f32 %v895, %v1022
        %v1288 = vmax.f32 %v896, %v1028
        %v1289 = vmax.f32 %v897, %v1034
        %v1290 = vmax.f32 %v898, %v1040
        %v1291 = vmax.f32 %v899, %v1046
        %v1292 = vmax.f32 %v900, %v1052
        %v1293 = vadd.f32 %v901, %v1058
        %v1294 = vadd.f32 %v902, %v1064
        %v1295 = vadd.f32 %v903, %v1070
        %v1296 = vadd.f32 %v904, %v1076
        %v1297 = vadd.f32 %v905, %v1082
        %v1298 = vadd.f32 %v906, %v1088
        %v1299 = vadd.f32 %v907, %v1094
        %v1300 = vadd.f32 %v908, %v1100
        %v1301 = vadd.f32 %v909, %v1106
        %v1302 = vadd.f32 %v910, %v1112
        %v1303 = vadd.f32 %v911, %v1118
        %v1304 = vadd.f32 %v912, %v1124
        %v1305 = vadd.f32 %v913, %v1130
        %v1306 = vadd.f32 %v914, %v1136
        %v1307 = vadd.f32 %v915, %v1142
        %v1308 = vadd.f32 %v916, %v1148
        %v1309 = vadd.f32 %v917, %v1186
        %v1310 = vadd.f32 %v918, %v1192
        %v1311 = vadd.f32 %v919, %v1198
        %v1312 = vadd.f32 %v920, %v1204
        %v1313 = vadd.f32 %v921, %v1210
        %v1314 = vadd.f32 %v922, %v1216
        %v1315 = vadd.f32 %v923, %v1222
        %v1316 = vadd.f32 %v924, %v1228
        %v1317 = vadd.f32 %v925, %v1234
        %v1318 = vadd.f32 %v926, %v1240
        %v1319 = vadd.f32 %v927, %v1246
        %v1320 = vadd.f32 %v928, %v1252
        %v1321 = vadd.f32 %v929, %v1258
        %v1322 = vadd.f32 %v930, %v1264
        %v1323 = vadd.f32 %v931, %v1270
        %v1324 = vadd.f32 %v932, %v1276
        %v1325 = vld [vmem:[%s196 + $0xc0] sm:$0xff]
        %v1326 = vld [vmem:[%s196 + $0xc8] sm:$0xff]
        %v1327 = vld [vmem:[%s196 + $0xd0] sm:$0xff]
        %v1328 = vld [vmem:[%s196 + $0xd8] sm:$0xff]
        %v1329 = vld [vmem:[%s196 + $0xe0] sm:$0xff]
        %v1330 = vld [vmem:[%s196 + $0xe8] sm:$0xff]
        %v1331 = vld [vmem:[%s196 + $0xf0] sm:$0xff]
        %v1332 = vld [vmem:[%s196 + $0xf8] sm:$0xff]
        %v1333 = vunpack.c.l.bf16 %v1325
        %v1334 = vunpack.c.h.bf16 %v1325
        %v1335 = vunpack.c.l.bf16 %v1326
        %v1336 = vunpack.c.h.bf16 %v1326
        %v1337 = vunpack.c.l.bf16 %v1327
        %v1338 = vunpack.c.h.bf16 %v1327
        %v1339 = vunpack.c.l.bf16 %v1328
        %v1340 = vunpack.c.h.bf16 %v1328
        %v1341 = vunpack.c.l.bf16 %v1329
        %v1342 = vunpack.c.h.bf16 %v1329
        %v1343 = vunpack.c.l.bf16 %v1330
        %v1344 = vunpack.c.h.bf16 %v1330
        %v1345 = vunpack.c.l.bf16 %v1331
        %v1346 = vunpack.c.h.bf16 %v1331
        %v1347 = vunpack.c.l.bf16 %v1332
        %v1348 = vunpack.c.h.bf16 %v1332
        %v1349 = vrot.slane %v1333, 4
        %v1350 = vmax.f32 %v1333, %v1349
        %v1351 = vrot.slane %v1350, 2
        %v1352 = vmax.f32 %v1350, %v1351
        %v1353 = vrot.slane %v1352, 1
        %v1354 = vmax.f32 %v1352, %v1353
        %v1355 = vrot.slane %v1334, 4
        %v1356 = vmax.f32 %v1334, %v1355
        %v1357 = vrot.slane %v1356, 2
        %v1358 = vmax.f32 %v1356, %v1357
        %v1359 = vrot.slane %v1358, 1
        %v1360 = vmax.f32 %v1358, %v1359
        %v1361 = vrot.slane %v1335, 4
        %v1362 = vmax.f32 %v1335, %v1361
        %v1363 = vrot.slane %v1362, 2
        %v1364 = vmax.f32 %v1362, %v1363
        %v1365 = vrot.slane %v1364, 1
        %v1366 = vmax.f32 %v1364, %v1365
        %v1367 = vrot.slane %v1336, 4
        %v1368 = vmax.f32 %v1336, %v1367
        %v1369 = vrot.slane %v1368, 2
        %v1370 = vmax.f32 %v1368, %v1369
        %v1371 = vrot.slane %v1370, 1
        %v1372 = vmax.f32 %v1370, %v1371
        %v1373 = vrot.slane %v1337, 4
        %v1374 = vmax.f32 %v1337, %v1373
        %v1375 = vrot.slane %v1374, 2
        %v1376 = vmax.f32 %v1374, %v1375
        %v1377 = vrot.slane %v1376, 1
        %v1378 = vmax.f32 %v1376, %v1377
        %v1379 = vrot.slane %v1338, 4
        %v1380 = vmax.f32 %v1338, %v1379
        %v1381 = vrot.slane %v1380, 2
        %v1382 = vmax.f32 %v1380, %v1381
        %v1383 = vrot.slane %v1382, 1
        %v1384 = vmax.f32 %v1382, %v1383
        %v1385 = vrot.slane %v1339, 4
        %v1386 = vmax.f32 %v1339, %v1385
        %v1387 = vrot.slane %v1386, 2
        %v1388 = vmax.f32 %v1386, %v1387
        %v1389 = vrot.slane %v1388, 1
        %v1390 = vmax.f32 %v1388, %v1389
        %v1391 = vrot.slane %v1340, 4
        %v1392 = vmax.f32 %v1340, %v1391
        %v1393 = vrot.slane %v1392, 2
        %v1394 = vmax.f32 %v1392, %v1393
        %v1395 = vrot.slane %v1394, 1
        %v1396 = vmax.f32 %v1394, %v1395
        %v1397 = vrot.slane %v1341, 4
        %v1398 = vmax.f32 %v1341, %v1397
        %v1399 = vrot.slane %v1398, 2
        %v1400 = vmax.f32 %v1398, %v1399
        %v1401 = vrot.slane %v1400, 1
        %v1402 = vmax.f32 %v1400, %v1401
        %v1403 = vrot.slane %v1342, 4
        %v1404 = vmax.f32 %v1342, %v1403
        %v1405 = vrot.slane %v1404, 2
        %v1406 = vmax.f32 %v1404, %v1405
        %v1407 = vrot.slane %v1406, 1
        %v1408 = vmax.f32 %v1406, %v1407
        %v1409 = vrot.slane %v1343, 4
        %v1410 = vmax.f32 %v1343, %v1409
        %v1411 = vrot.slane %v1410, 2
        %v1412 = vmax.f32 %v1410, %v1411
        %v1413 = vrot.slane %v1412, 1
        %v1414 = vmax.f32 %v1412, %v1413
        %v1415 = vrot.slane %v1344, 4
        %v1416 = vmax.f32 %v1344, %v1415
        %v1417 = vrot.slane %v1416, 2
        %v1418 = vmax.f32 %v1416, %v1417
        %v1419 = vrot.slane %v1418, 1
        %v1420 = vmax.f32 %v1418, %v1419
        %v1421 = vrot.slane %v1345, 4
        %v1422 = vmax.f32 %v1345, %v1421
        %v1423 = vrot.slane %v1422, 2
        %v1424 = vmax.f32 %v1422, %v1423
        %v1425 = vrot.slane %v1424, 1
        %v1426 = vmax.f32 %v1424, %v1425
        %v1427 = vrot.slane %v1346, 4
        %v1428 = vmax.f32 %v1346, %v1427
        %v1429 = vrot.slane %v1428, 2
        %v1430 = vmax.f32 %v1428, %v1429
        %v1431 = vrot.slane %v1430, 1
        %v1432 = vmax.f32 %v1430, %v1431
        %v1433 = vrot.slane %v1347, 4
        %v1434 = vmax.f32 %v1347, %v1433
        %v1435 = vrot.slane %v1434, 2
        %v1436 = vmax.f32 %v1434, %v1435
        %v1437 = vrot.slane %v1436, 1
        %v1438 = vmax.f32 %v1436, %v1437
        %v1439 = vrot.slane %v1348, 4
        %v1440 = vmax.f32 %v1348, %v1439
        %v1441 = vrot.slane %v1440, 2
        %v1442 = vmax.f32 %v1440, %v1441
        %v1443 = vrot.slane %v1442, 1
        %v1444 = vmax.f32 %v1442, %v1443
        %v1445 = vrot.slane %v1333, 4
        %v1446 = vadd.f32 %v1333, %v1445
        %v1447 = vrot.slane %v1446, 2
        %v1448 = vadd.f32 %v1446, %v1447
        %v1449 = vrot.slane %v1448, 1
        %v1450 = vadd.f32 %v1448, %v1449
        %v1451 = vrot.slane %v1334, 4
        %v1452 = vadd.f32 %v1334, %v1451
        %v1453 = vrot.slane %v1452, 2
        %v1454 = vadd.f32 %v1452, %v1453
        %v1455 = vrot.slane %v1454, 1
        %v1456 = vadd.f32 %v1454, %v1455
        %v1457 = vrot.slane %v1335, 4
        %v1458 = vadd.f32 %v1335, %v1457
        %v1459 = vrot.slane %v1458, 2
        %v1460 = vadd.f32 %v1458, %v1459
        %v1461 = vrot.slane %v1460, 1
        %v1462 = vadd.f32 %v1460, %v1461
        %v1463 = vrot.slane %v1336, 4
        %v1464 = vadd.f32 %v1336, %v1463
        %v1465 = vrot.slane %v1464, 2
        %v1466 = vadd.f32 %v1464, %v1465
        %v1467 = vrot.slane %v1466, 1
        %v1468 = vadd.f32 %v1466, %v1467
        %v1469 = vrot.slane %v1337, 4
        %v1470 = vadd.f32 %v1337, %v1469
        %v1471 = vrot.slane %v1470, 2
        %v1472 = vadd.f32 %v1470, %v1471
        %v1473 = vrot.slane %v1472, 1
        %v1474 = vadd.f32 %v1472, %v1473
        %v1475 = vrot.slane %v1338, 4
        %v1476 = vadd.f32 %v1338, %v1475
        %v1477 = vrot.slane %v1476, 2
        %v1478 = vadd.f32 %v1476, %v1477
        %v1479 = vrot.slane %v1478, 1
        %v1480 = vadd.f32 %v1478, %v1479
        %v1481 = vrot.slane %v1339, 4
        %v1482 = vadd.f32 %v1339, %v1481
        %v1483 = vrot.slane %v1482, 2
        %v1484 = vadd.f32 %v1482, %v1483
        %v1485 = vrot.slane %v1484, 1
        %v1486 = vadd.f32 %v1484, %v1485
        %v1487 = vrot.slane %v1340, 4
        %v1488 = vadd.f32 %v1340, %v1487
        %v1489 = vrot.slane %v1488, 2
        %v1490 = vadd.f32 %v1488, %v1489
        %v1491 = vrot.slane %v1490, 1
        %v1492 = vadd.f32 %v1490, %v1491
        %v1493 = vrot.slane %v1341, 4
        %v1494 = vadd.f32 %v1341, %v1493
        %v1495 = vrot.slane %v1494, 2
        %v1496 = vadd.f32 %v1494, %v1495
        %v1497 = vrot.slane %v1496, 1
        %v1498 = vadd.f32 %v1496, %v1497
        %v1499 = vrot.slane %v1342, 4
        %v1500 = vadd.f32 %v1342, %v1499
        %v1501 = vrot.slane %v1500, 2
        %v1502 = vadd.f32 %v1500, %v1501
        %v1503 = vrot.slane %v1502, 1
        %v1504 = vadd.f32 %v1502, %v1503
        %v1505 = vrot.slane %v1343, 4
        %v1506 = vadd.f32 %v1343, %v1505
        %v1507 = vrot.slane %v1506, 2
        %v1508 = vadd.f32 %v1506, %v1507
        %v1509 = vrot.slane %v1508, 1
        %v1510 = vadd.f32 %v1508, %v1509
        %v1511 = vrot.slane %v1344, 4
        %v1512 = vadd.f32 %v1344, %v1511
        %v1513 = vrot.slane %v1512, 2
        %v1514 = vadd.f32 %v1512, %v1513
        %v1515 = vrot.slane %v1514, 1
        %v1516 = vadd.f32 %v1514, %v1515
        %v1517 = vrot.slane %v1345, 4
        %v1518 = vadd.f32 %v1345, %v1517
        %v1519 = vrot.slane %v1518, 2
        %v1520 = vadd.f32 %v1518, %v1519
        %v1521 = vrot.slane %v1520, 1
        %v1522 = vadd.f32 %v1520, %v1521
        %v1523 = vrot.slane %v1346, 4
        %v1524 = vadd.f32 %v1346, %v1523
        %v1525 = vrot.slane %v1524, 2
        %v1526 = vadd.f32 %v1524, %v1525
        %v1527 = vrot.slane %v1526, 1
        %v1528 = vadd.f32 %v1526, %v1527
        %v1529 = vrot.slane %v1347, 4
        %v1530 = vadd.f32 %v1347, %v1529
        %v1531 = vrot.slane %v1530, 2
        %v1532 = vadd.f32 %v1530, %v1531
        %v1533 = vrot.slane %v1532, 1
        %v1534 = vadd.f32 %v1532, %v1533
        %v1535 = vrot.slane %v1348, 4
        %v1536 = vadd.f32 %v1348, %v1535
        %v1537 = vrot.slane %v1536, 2
        %v1538 = vadd.f32 %v1536, %v1537
        %v1539 = vrot.slane %v1538, 1
        %v1540 = vadd.f32 %v1538, %v1539
        %v1541 = vmul.f32 %v1333, %v1333
        %v1542 = vmul.f32 %v1334, %v1334
        %v1543 = vmul.f32 %v1335, %v1335
        %v1544 = vmul.f32 %v1336, %v1336
        %v1545 = vmul.f32 %v1337, %v1337
        %v1546 = vmul.f32 %v1338, %v1338
        %v1547 = vmul.f32 %v1339, %v1339
        %v1548 = vmul.f32 %v1340, %v1340
        %v1549 = vmul.f32 %v1341, %v1341
        %v1550 = vmul.f32 %v1342, %v1342
        %v1551 = vmul.f32 %v1343, %v1343
        %v1552 = vmul.f32 %v1344, %v1344
        %v1553 = vmul.f32 %v1345, %v1345
        %v1554 = vmul.f32 %v1346, %v1346
        %v1555 = vmul.f32 %v1347, %v1347
        %v1556 = vmul.f32 %v1348, %v1348
        %v1557 = vmul.f32 %v1541, %v1333
        %v1558 = vmul.f32 %v1542, %v1334
        %v1559 = vmul.f32 %v1543, %v1335
        %v1560 = vmul.f32 %v1544, %v1336
        %v1561 = vmul.f32 %v1545, %v1337
        %v1562 = vmul.f32 %v1546, %v1338
        %v1563 = vmul.f32 %v1547, %v1339
        %v1564 = vmul.f32 %v1548, %v1340
        %v1565 = vmul.f32 %v1549, %v1341
        %v1566 = vmul.f32 %v1550, %v1342
        %v1567 = vmul.f32 %v1551, %v1343
        %v1568 = vmul.f32 %v1552, %v1344
        %v1569 = vmul.f32 %v1553, %v1345
        %v1570 = vmul.f32 %v1554, %v1346
        %v1571 = vmul.f32 %v1555, %v1347
        %v1572 = vmul.f32 %v1556, %v1348
        %v1573 = vrot.slane %v1557, 4
        %v1574 = vadd.f32 %v1557, %v1573
        %v1575 = vrot.slane %v1574, 2
        %v1576 = vadd.f32 %v1574, %v1575
        %v1577 = vrot.slane %v1576, 1
        %v1578 = vadd.f32 %v1576, %v1577
        %v1579 = vrot.slane %v1558, 4
        %v1580 = vadd.f32 %v1558, %v1579
        %v1581 = vrot.slane %v1580, 2
        %v1582 = vadd.f32 %v1580, %v1581
        %v1583 = vrot.slane %v1582, 1
        %v1584 = vadd.f32 %v1582, %v1583
        %v1585 = vrot.slane %v1559, 4
        %v1586 = vadd.f32 %v1559, %v1585
        %v1587 = vrot.slane %v1586, 2
        %v1588 = vadd.f32 %v1586, %v1587
        %v1589 = vrot.slane %v1588, 1
        %v1590 = vadd.f32 %v1588, %v1589
        %v1591 = vrot.slane %v1560, 4
        %v1592 = vadd.f32 %v1560, %v1591
        %v1593 = vrot.slane %v1592, 2
        %v1594 = vadd.f32 %v1592, %v1593
        %v1595 = vrot.slane %v1594, 1
        %v1596 = vadd.f32 %v1594, %v1595
        %v1597 = vrot.slane %v1561, 4
        %v1598 = vadd.f32 %v1561, %v1597
        %v1599 = vrot.slane %v1598, 2
        %v1600 = vadd.f32 %v1598, %v1599
        %v1601 = vrot.slane %v1600, 1
        %v1602 = vadd.f32 %v1600, %v1601
        %v1603 = vrot.slane %v1562, 4
        %v1604 = vadd.f32 %v1562, %v1603
        %v1605 = vrot.slane %v1604, 2
        %v1606 = vadd.f32 %v1604, %v1605
        %v1607 = vrot.slane %v1606, 1
        %v1608 = vadd.f32 %v1606, %v1607
        %v1609 = vrot.slane %v1563, 4
        %v1610 = vadd.f32 %v1563, %v1609
        %v1611 = vrot.slane %v1610, 2
        %v1612 = vadd.f32 %v1610, %v1611
        %v1613 = vrot.slane %v1612, 1
        %v1614 = vadd.f32 %v1612, %v1613
        %v1615 = vrot.slane %v1564, 4
        %v1616 = vadd.f32 %v1564, %v1615
        %v1617 = vrot.slane %v1616, 2
        %v1618 = vadd.f32 %v1616, %v1617
        %v1619 = vrot.slane %v1618, 1
        %v1620 = vadd.f32 %v1618, %v1619
        %v1621 = vrot.slane %v1565, 4
        %v1622 = vadd.f32 %v1565, %v1621
        %v1623 = vrot.slane %v1622, 2
        %v1624 = vadd.f32 %v1622, %v1623
        %v1625 = vrot.slane %v1624, 1
        %v1626 = vadd.f32 %v1624, %v1625
        %v1627 = vrot.slane %v1566, 4
        %v1628 = vadd.f32 %v1566, %v1627
        %v1629 = vrot.slane %v1628, 2
        %v1630 = vadd.f32 %v1628, %v1629
        %v1631 = vrot.slane %v1630, 1
        %v1632 = vadd.f32 %v1630, %v1631
        %v1633 = vrot.slane %v1567, 4
        %v1634 = vadd.f32 %v1567, %v1633
        %v1635 = vrot.slane %v1634, 2
        %v1636 = vadd.f32 %v1634, %v1635
        %v1637 = vrot.slane %v1636, 1
        %v1638 = vadd.f32 %v1636, %v1637
        %v1639 = vrot.slane %v1568, 4
        %v1640 = vadd.f32 %v1568, %v1639
        %v1641 = vrot.slane %v1640, 2
        %v1642 = vadd.f32 %v1640, %v1641
        %v1643 = vrot.slane %v1642, 1
        %v1644 = vadd.f32 %v1642, %v1643
        %v1645 = vrot.slane %v1569, 4
        %v1646 = vadd.f32 %v1569, %v1645
        %v1647 = vrot.slane %v1646, 2
        %v1648 = vadd.f32 %v1646, %v1647
        %v1649 = vrot.slane %v1648, 1
        %v1650 = vadd.f32 %v1648, %v1649
        %v1651 = vrot.slane %v1570, 4
        %v1652 = vadd.f32 %v1570, %v1651
        %v1653 = vrot.slane %v1652, 2
        %v1654 = vadd.f32 %v1652, %v1653
        %v1655 = vrot.slane %v1654, 1
        %v1656 = vadd.f32 %v1654, %v1655
        %v1657 = vrot.slane %v1571, 4
        %v1658 = vadd.f32 %v1571, %v1657
        %v1659 = vrot.slane %v1658, 2
        %v1660 = vadd.f32 %v1658, %v1659
        %v1661 = vrot.slane %v1660, 1
        %v1662 = vadd.f32 %v1660, %v1661
        %v1663 = vrot.slane %v1572, 4
        %v1664 = vadd.f32 %v1572, %v1663
        %v1665 = vrot.slane %v1664, 2
        %v1666 = vadd.f32 %v1664, %v1665
        %v1667 = vrot.slane %v1666, 1
        %v1668 = vadd.f32 %v1666, %v1667
        %v1669 = vmax.f32 %v1277, %v1354
        %v1670 = vmax.f32 %v1278, %v1360
        %v1671 = vmax.f32 %v1279, %v1366
        %v1672 = vmax.f32 %v1280, %v1372
        %v1673 = vmax.f32 %v1281, %v1378
        %v1674 = vmax.f32 %v1282, %v1384
        %v1675 = vmax.f32 %v1283, %v1390
        %v1676 = vmax.f32 %v1284, %v1396
        %v1677 = vmax.f32 %v1285, %v1402
        %v1678 = vmax.f32 %v1286, %v1408
        %v1679 = vmax.f32 %v1287, %v1414
        %v1680 = vmax.f32 %v1288, %v1420
        %v1681 = vmax.f32 %v1289, %v1426
        %v1682 = vmax.f32 %v1290, %v1432
        %v1683 = vmax.f32 %v1291, %v1438
        %v1684 = vmax.f32 %v1292, %v1444
        %v1685 = vadd.f32 %v1293, %v1450
        %v1686 = vadd.f32 %v1294, %v1456
        %v1687 = vadd.f32 %v1295, %v1462
        %v1688 = vadd.f32 %v1296, %v1468
        %v1689 = vadd.f32 %v1297, %v1474
        %v1690 = vadd.f32 %v1298, %v1480
        %v1691 = vadd.f32 %v1299, %v1486
        %v1692 = vadd.f32 %v1300, %v1492
        %v1693 = vadd.f32 %v1301, %v1498
        %v1694 = vadd.f32 %v1302, %v1504
        %v1695 = vadd.f32 %v1303, %v1510
        %v1696 = vadd.f32 %v1304, %v1516
        %v1697 = vadd.f32 %v1305, %v1522
        %v1698 = vadd.f32 %v1306, %v1528
        %v1699 = vadd.f32 %v1307, %v1534
        %v1700 = vadd.f32 %v1308, %v1540
        %v1701 = vadd.f32 %v1309, %v1578
        %v1702 = vadd.f32 %v1310, %v1584
        %v1703 = vadd.f32 %v1311, %v1590
        %v1704 = vadd.f32 %v1312, %v1596
        %v1705 = vadd.f32 %v1313, %v1602
        %v1706 = vadd.f32 %v1314, %v1608
        %v1707 = vadd.f32 %v1315, %v1614
        %v1708 = vadd.f32 %v1316, %v1620
        %v1709 = vadd.f32 %v1317, %v1626
        %v1710 = vadd.f32 %v1318, %v1632
        %v1711 = vadd.f32 %v1319, %v1638
        %v1712 = vadd.f32 %v1320, %v1644
        %v1713 = vadd.f32 %v1321, %v1650
        %v1714 = vadd.f32 %v1322, %v1656
        %v1715 = vadd.f32 %v1323, %v1662
        %v1716 = vadd.f32 %v1324, %v1668
        %v1717 = vld [vmem:[%s196 + $0x100] sm:$0xff]
        %v1718 = vld [vmem:[%s196 + $0x108] sm:$0xff]
        %v1719 = vld [vmem:[%s196 + $0x110] sm:$0xff]
        %v1720 = vld [vmem:[%s196 + $0x118] sm:$0xff]
        %v1721 = vld [vmem:[%s196 + $0x120] sm:$0xff]
        %v1722 = vld [vmem:[%s196 + $0x128] sm:$0xff]
        %v1723 = vld [vmem:[%s196 + $0x130] sm:$0xff]
        %v1724 = vld [vmem:[%s196 + $0x138] sm:$0xff]
        %v1725 = vunpack.c.l.bf16 %v1717
        %v1726 = vunpack.c.h.bf16 %v1717
        %v1727 = vunpack.c.l.bf16 %v1718
        %v1728 = vunpack.c.h.bf16 %v1718
        %v1729 = vunpack.c.l.bf16 %v1719
        %v1730 = vunpack.c.h.bf16 %v1719
        %v1731 = vunpack.c.l.bf16 %v1720
        %v1732 = vunpack.c.h.bf16 %v1720
        %v1733 = vunpack.c.l.bf16 %v1721
        %v1734 = vunpack.c.h.bf16 %v1721
        %v1735 = vunpack.c.l.bf16 %v1722
        %v1736 = vunpack.c.h.bf16 %v1722
        %v1737 = vunpack.c.l.bf16 %v1723
        %v1738 = vunpack.c.h.bf16 %v1723
        %v1739 = vunpack.c.l.bf16 %v1724
        %v1740 = vunpack.c.h.bf16 %v1724
        %v1741 = vrot.slane %v1725, 4
        %v1742 = vmax.f32 %v1725, %v1741
        %v1743 = vrot.slane %v1742, 2
        %v1744 = vmax.f32 %v1742, %v1743
        %v1745 = vrot.slane %v1744, 1
        %v1746 = vmax.f32 %v1744, %v1745
        %v1747 = vrot.slane %v1726, 4
        %v1748 = vmax.f32 %v1726, %v1747
        %v1749 = vrot.slane %v1748, 2
        %v1750 = vmax.f32 %v1748, %v1749
        %v1751 = vrot.slane %v1750, 1
        %v1752 = vmax.f32 %v1750, %v1751
        %v1753 = vrot.slane %v1727, 4
        %v1754 = vmax.f32 %v1727, %v1753
        %v1755 = vrot.slane %v1754, 2
        %v1756 = vmax.f32 %v1754, %v1755
        %v1757 = vrot.slane %v1756, 1
        %v1758 = vmax.f32 %v1756, %v1757
        %v1759 = vrot.slane %v1728, 4
        %v1760 = vmax.f32 %v1728, %v1759
        %v1761 = vrot.slane %v1760, 2
        %v1762 = vmax.f32 %v1760, %v1761
        %v1763 = vrot.slane %v1762, 1
        %v1764 = vmax.f32 %v1762, %v1763
        %v1765 = vrot.slane %v1729, 4
        %v1766 = vmax.f32 %v1729, %v1765
        %v1767 = vrot.slane %v1766, 2
        %v1768 = vmax.f32 %v1766, %v1767
        %v1769 = vrot.slane %v1768, 1
        %v1770 = vmax.f32 %v1768, %v1769
        %v1771 = vrot.slane %v1730, 4
        %v1772 = vmax.f32 %v1730, %v1771
        %v1773 = vrot.slane %v1772, 2
        %v1774 = vmax.f32 %v1772, %v1773
        %v1775 = vrot.slane %v1774, 1
        %v1776 = vmax.f32 %v1774, %v1775
        %v1777 = vrot.slane %v1731, 4
        %v1778 = vmax.f32 %v1731, %v1777
        %v1779 = vrot.slane %v1778, 2
        %v1780 = vmax.f32 %v1778, %v1779
        %v1781 = vrot.slane %v1780, 1
        %v1782 = vmax.f32 %v1780, %v1781
        %v1783 = vrot.slane %v1732, 4
        %v1784 = vmax.f32 %v1732, %v1783
        %v1785 = vrot.slane %v1784, 2
        %v1786 = vmax.f32 %v1784, %v1785
        %v1787 = vrot.slane %v1786, 1
        %v1788 = vmax.f32 %v1786, %v1787
        %v1789 = vrot.slane %v1733, 4
        %v1790 = vmax.f32 %v1733, %v1789
        %v1791 = vrot.slane %v1790, 2
        %v1792 = vmax.f32 %v1790, %v1791
        %v1793 = vrot.slane %v1792, 1
        %v1794 = vmax.f32 %v1792, %v1793
        %v1795 = vrot.slane %v1734, 4
        %v1796 = vmax.f32 %v1734, %v1795
        %v1797 = vrot.slane %v1796, 2
        %v1798 = vmax.f32 %v1796, %v1797
        %v1799 = vrot.slane %v1798, 1
        %v1800 = vmax.f32 %v1798, %v1799
        %v1801 = vrot.slane %v1735, 4
        %v1802 = vmax.f32 %v1735, %v1801
        %v1803 = vrot.slane %v1802, 2
        %v1804 = vmax.f32 %v1802, %v1803
        %v1805 = vrot.slane %v1804, 1
        %v1806 = vmax.f32 %v1804, %v1805
        %v1807 = vrot.slane %v1736, 4
        %v1808 = vmax.f32 %v1736, %v1807
        %v1809 = vrot.slane %v1808, 2
        %v1810 = vmax.f32 %v1808, %v1809
        %v1811 = vrot.slane %v1810, 1
        %v1812 = vmax.f32 %v1810, %v1811
        %v1813 = vrot.slane %v1737, 4
        %v1814 = vmax.f32 %v1737, %v1813
        %v1815 = vrot.slane %v1814, 2
        %v1816 = vmax.f32 %v1814, %v1815
        %v1817 = vrot.slane %v1816, 1
        %v1818 = vmax.f32 %v1816, %v1817
        %v1819 = vrot.slane %v1738, 4
        %v1820 = vmax.f32 %v1738, %v1819
        %v1821 = vrot.slane %v1820, 2
        %v1822 = vmax.f32 %v1820, %v1821
        %v1823 = vrot.slane %v1822, 1
        %v1824 = vmax.f32 %v1822, %v1823
        %v1825 = vrot.slane %v1739, 4
        %v1826 = vmax.f32 %v1739, %v1825
        %v1827 = vrot.slane %v1826, 2
        %v1828 = vmax.f32 %v1826, %v1827
        %v1829 = vrot.slane %v1828, 1
        %v1830 = vmax.f32 %v1828, %v1829
        %v1831 = vrot.slane %v1740, 4
        %v1832 = vmax.f32 %v1740, %v1831
        %v1833 = vrot.slane %v1832, 2
        %v1834 = vmax.f32 %v1832, %v1833
        %v1835 = vrot.slane %v1834, 1
        %v1836 = vmax.f32 %v1834, %v1835
        %v1837 = vrot.slane %v1725, 4
        %v1838 = vadd.f32 %v1725, %v1837
        %v1839 = vrot.slane %v1838, 2
        %v1840 = vadd.f32 %v1838, %v1839
        %v1841 = vrot.slane %v1840, 1
        %v1842 = vadd.f32 %v1840, %v1841
        %v1843 = vrot.slane %v1726, 4
        %v1844 = vadd.f32 %v1726, %v1843
        %v1845 = vrot.slane %v1844, 2
        %v1846 = vadd.f32 %v1844, %v1845
        %v1847 = vrot.slane %v1846, 1
        %v1848 = vadd.f32 %v1846, %v1847
        %v1849 = vrot.slane %v1727, 4
        %v1850 = vadd.f32 %v1727, %v1849
        %v1851 = vrot.slane %v1850, 2
        %v1852 = vadd.f32 %v1850, %v1851
        %v1853 = vrot.slane %v1852, 1
        %v1854 = vadd.f32 %v1852, %v1853
        %v1855 = vrot.slane %v1728, 4
        %v1856 = vadd.f32 %v1728, %v1855
        %v1857 = vrot.slane %v1856, 2
        %v1858 = vadd.f32 %v1856, %v1857
        %v1859 = vrot.slane %v1858, 1
        %v1860 = vadd.f32 %v1858, %v1859
        %v1861 = vrot.slane %v1729, 4
        %v1862 = vadd.f32 %v1729, %v1861
        %v1863 = vrot.slane %v1862, 2
        %v1864 = vadd.f32 %v1862, %v1863
        %v1865 = vrot.slane %v1864, 1
        %v1866 = vadd.f32 %v1864, %v1865
        %v1867 = vrot.slane %v1730, 4
        %v1868 = vadd.f32 %v1730, %v1867
        %v1869 = vrot.slane %v1868, 2
        %v1870 = vadd.f32 %v1868, %v1869
        %v1871 = vrot.slane %v1870, 1
        %v1872 = vadd.f32 %v1870, %v1871
        %v1873 = vrot.slane %v1731, 4
        %v1874 = vadd.f32 %v1731, %v1873
        %v1875 = vrot.slane %v1874, 2
        %v1876 = vadd.f32 %v1874, %v1875
        %v1877 = vrot.slane %v1876, 1
        %v1878 = vadd.f32 %v1876, %v1877
        %v1879 = vrot.slane %v1732, 4
        %v1880 = vadd.f32 %v1732, %v1879
        %v1881 = vrot.slane %v1880, 2
        %v1882 = vadd.f32 %v1880, %v1881
        %v1883 = vrot.slane %v1882, 1
        %v1884 = vadd.f32 %v1882, %v1883
        %v1885 = vrot.slane %v1733, 4
        %v1886 = vadd.f32 %v1733, %v1885
        %v1887 = vrot.slane %v1886, 2
        %v1888 = vadd.f32 %v1886, %v1887
        %v1889 = vrot.slane %v1888, 1
        %v1890 = vadd.f32 %v1888, %v1889
        %v1891 = vrot.slane %v1734, 4
        %v1892 = vadd.f32 %v1734, %v1891
        %v1893 = vrot.slane %v1892, 2
        %v1894 = vadd.f32 %v1892, %v1893
        %v1895 = vrot.slane %v1894, 1
        %v1896 = vadd.f32 %v1894, %v1895
        %v1897 = vrot.slane %v1735, 4
        %v1898 = vadd.f32 %v1735, %v1897
        %v1899 = vrot.slane %v1898, 2
        %v1900 = vadd.f32 %v1898, %v1899
        %v1901 = vrot.slane %v1900, 1
        %v1902 = vadd.f32 %v1900, %v1901
        %v1903 = vrot.slane %v1736, 4
        %v1904 = vadd.f32 %v1736, %v1903
        %v1905 = vrot.slane %v1904, 2
        %v1906 = vadd.f32 %v1904, %v1905
        %v1907 = vrot.slane %v1906, 1
        %v1908 = vadd.f32 %v1906, %v1907
        %v1909 = vrot.slane %v1737, 4
        %v1910 = vadd.f32 %v1737, %v1909
        %v1911 = vrot.slane %v1910, 2
        %v1912 = vadd.f32 %v1910, %v1911
        %v1913 = vrot.slane %v1912, 1
        %v1914 = vadd.f32 %v1912, %v1913
        %v1915 = vrot.slane %v1738, 4
        %v1916 = vadd.f32 %v1738, %v1915
        %v1917 = vrot.slane %v1916, 2
        %v1918 = vadd.f32 %v1916, %v1917
        %v1919 = vrot.slane %v1918, 1
        %v1920 = vadd.f32 %v1918, %v1919
        %v1921 = vrot.slane %v1739, 4
        %v1922 = vadd.f32 %v1739, %v1921
        %v1923 = vrot.slane %v1922, 2
        %v1924 = vadd.f32 %v1922, %v1923
        %v1925 = vrot.slane %v1924, 1
        %v1926 = vadd.f32 %v1924, %v1925
        %v1927 = vrot.slane %v1740, 4
        %v1928 = vadd.f32 %v1740, %v1927
        %v1929 = vrot.slane %v1928, 2
        %v1930 = vadd.f32 %v1928, %v1929
        %v1931 = vrot.slane %v1930, 1
        %v1932 = vadd.f32 %v1930, %v1931
        %v1933 = vmul.f32 %v1725, %v1725
        %v1934 = vmul.f32 %v1726, %v1726
        %v1935 = vmul.f32 %v1727, %v1727
        %v1936 = vmul.f32 %v1728, %v1728
        %v1937 = vmul.f32 %v1729, %v1729
        %v1938 = vmul.f32 %v1730, %v1730
        %v1939 = vmul.f32 %v1731, %v1731
        %v1940 = vmul.f32 %v1732, %v1732
        %v1941 = vmul.f32 %v1733, %v1733
        %v1942 = vmul.f32 %v1734, %v1734
        %v1943 = vmul.f32 %v1735, %v1735
        %v1944 = vmul.f32 %v1736, %v1736
        %v1945 = vmul.f32 %v1737, %v1737
        %v1946 = vmul.f32 %v1738, %v1738
        %v1947 = vmul.f32 %v1739, %v1739
        %v1948 = vmul.f32 %v1740, %v1740
        %v1949 = vmul.f32 %v1933, %v1725
        %v1950 = vmul.f32 %v1934, %v1726
        %v1951 = vmul.f32 %v1935, %v1727
        %v1952 = vmul.f32 %v1936, %v1728
        %v1953 = vmul.f32 %v1937, %v1729
        %v1954 = vmul.f32 %v1938, %v1730
        %v1955 = vmul.f32 %v1939, %v1731
        %v1956 = vmul.f32 %v1940, %v1732
        %v1957 = vmul.f32 %v1941, %v1733
        %v1958 = vmul.f32 %v1942, %v1734
        %v1959 = vmul.f32 %v1943, %v1735
        %v1960 = vmul.f32 %v1944, %v1736
        %v1961 = vmul.f32 %v1945, %v1737
        %v1962 = vmul.f32 %v1946, %v1738
        %v1963 = vmul.f32 %v1947, %v1739
        %v1964 = vmul.f32 %v1948, %v1740
        %v1965 = vrot.slane %v1949, 4
        %v1966 = vadd.f32 %v1949, %v1965
        %v1967 = vrot.slane %v1966, 2
        %v1968 = vadd.f32 %v1966, %v1967
        %v1969 = vrot.slane %v1968, 1
        %v1970 = vadd.f32 %v1968, %v1969
        %v1971 = vrot.slane %v1950, 4
        %v1972 = vadd.f32 %v1950, %v1971
        %v1973 = vrot.slane %v1972, 2
        %v1974 = vadd.f32 %v1972, %v1973
        %v1975 = vrot.slane %v1974, 1
        %v1976 = vadd.f32 %v1974, %v1975
        %v1977 = vrot.slane %v1951, 4
        %v1978 = vadd.f32 %v1951, %v1977
        %v1979 = vrot.slane %v1978, 2
        %v1980 = vadd.f32 %v1978, %v1979
        %v1981 = vrot.slane %v1980, 1
        %v1982 = vadd.f32 %v1980, %v1981
        %v1983 = vrot.slane %v1952, 4
        %v1984 = vadd.f32 %v1952, %v1983
        %v1985 = vrot.slane %v1984, 2
        %v1986 = vadd.f32 %v1984, %v1985
        %v1987 = vrot.slane %v1986, 1
        %v1988 = vadd.f32 %v1986, %v1987
        %v1989 = vrot.slane %v1953, 4
        %v1990 = vadd.f32 %v1953, %v1989
        %v1991 = vrot.slane %v1990, 2
        %v1992 = vadd.f32 %v1990, %v1991
        %v1993 = vrot.slane %v1992, 1
        %v1994 = vadd.f32 %v1992, %v1993
        %v1995 = vrot.slane %v1954, 4
        %v1996 = vadd.f32 %v1954, %v1995
        %v1997 = vrot.slane %v1996, 2
        %v1998 = vadd.f32 %v1996, %v1997
        %v1999 = vrot.slane %v1998, 1
        %v2000 = vadd.f32 %v1998, %v1999
        %v2001 = vrot.slane %v1955, 4
        %v2002 = vadd.f32 %v1955, %v2001
        %v2003 = vrot.slane %v2002, 2
        %v2004 = vadd.f32 %v2002, %v2003
        %v2005 = vrot.slane %v2004, 1
        %v2006 = vadd.f32 %v2004, %v2005
        %v2007 = vrot.slane %v1956, 4
        %v2008 = vadd.f32 %v1956, %v2007
        %v2009 = vrot.slane %v2008, 2
        %v2010 = vadd.f32 %v2008, %v2009
        %v2011 = vrot.slane %v2010, 1
        %v2012 = vadd.f32 %v2010, %v2011
        %v2013 = vrot.slane %v1957, 4
        %v2014 = vadd.f32 %v1957, %v2013
        %v2015 = vrot.slane %v2014, 2
        %v2016 = vadd.f32 %v2014, %v2015
        %v2017 = vrot.slane %v2016, 1
        %v2018 = vadd.f32 %v2016, %v2017
        %v2019 = vrot.slane %v1958, 4
        %v2020 = vadd.f32 %v1958, %v2019
        %v2021 = vrot.slane %v2020, 2
        %v2022 = vadd.f32 %v2020, %v2021
        %v2023 = vrot.slane %v2022, 1
        %v2024 = vadd.f32 %v2022, %v2023
        %v2025 = vrot.slane %v1959, 4
        %v2026 = vadd.f32 %v1959, %v2025
        %v2027 = vrot.slane %v2026, 2
        %v2028 = vadd.f32 %v2026, %v2027
        %v2029 = vrot.slane %v2028, 1
        %v2030 = vadd.f32 %v2028, %v2029
        %v2031 = vrot.slane %v1960, 4
        %v2032 = vadd.f32 %v1960, %v2031
        %v2033 = vrot.slane %v2032, 2
        %v2034 = vadd.f32 %v2032, %v2033
        %v2035 = vrot.slane %v2034, 1
        %v2036 = vadd.f32 %v2034, %v2035
        %v2037 = vrot.slane %v1961, 4
        %v2038 = vadd.f32 %v1961, %v2037
        %v2039 = vrot.slane %v2038, 2
        %v2040 = vadd.f32 %v2038, %v2039
        %v2041 = vrot.slane %v2040, 1
        %v2042 = vadd.f32 %v2040, %v2041
        %v2043 = vrot.slane %v1962, 4
        %v2044 = vadd.f32 %v1962, %v2043
        %v2045 = vrot.slane %v2044, 2
        %v2046 = vadd.f32 %v2044, %v2045
        %v2047 = vrot.slane %v2046, 1
        %v2048 = vadd.f32 %v2046, %v2047
        %v2049 = vrot.slane %v1963, 4
        %v2050 = vadd.f32 %v1963, %v2049
        %v2051 = vrot.slane %v2050, 2
        %v2052 = vadd.f32 %v2050, %v2051
        %v2053 = vrot.slane %v2052, 1
        %v2054 = vadd.f32 %v2052, %v2053
        %v2055 = vrot.slane %v1964, 4
        %v2056 = vadd.f32 %v1964, %v2055
        %v2057 = vrot.slane %v2056, 2
        %v2058 = vadd.f32 %v2056, %v2057
        %v2059 = vrot.slane %v2058, 1
        %v2060 = vadd.f32 %v2058, %v2059
        %v2061 = vmax.f32 %v1669, %v1746
        %v2062 = vmax.f32 %v1670, %v1752
        %v2063 = vmax.f32 %v1671, %v1758
        %v2064 = vmax.f32 %v1672, %v1764
        %v2065 = vmax.f32 %v1673, %v1770
        %v2066 = vmax.f32 %v1674, %v1776
        %v2067 = vmax.f32 %v1675, %v1782
        %v2068 = vmax.f32 %v1676, %v1788
        %v2069 = vmax.f32 %v1677, %v1794
        %v2070 = vmax.f32 %v1678, %v1800
        %v2071 = vmax.f32 %v1679, %v1806
        %v2072 = vmax.f32 %v1680, %v1812
        %v2073 = vmax.f32 %v1681, %v1818
        %v2074 = vmax.f32 %v1682, %v1824
        %v2075 = vmax.f32 %v1683, %v1830
        %v2076 = vmax.f32 %v1684, %v1836
        %v2077 = vadd.f32 %v1685, %v1842
        %v2078 = vadd.f32 %v1686, %v1848
        %v2079 = vadd.f32 %v1687, %v1854
        %v2080 = vadd.f32 %v1688, %v1860
        %v2081 = vadd.f32 %v1689, %v1866
        %v2082 = vadd.f32 %v1690, %v1872
        %v2083 = vadd.f32 %v1691, %v1878
        %v2084 = vadd.f32 %v1692, %v1884
        %v2085 = vadd.f32 %v1693, %v1890
        %v2086 = vadd.f32 %v1694, %v1896
        %v2087 = vadd.f32 %v1695, %v1902
        %v2088 = vadd.f32 %v1696, %v1908
        %v2089 = vadd.f32 %v1697, %v1914
        %v2090 = vadd.f32 %v1698, %v1920
        %v2091 = vadd.f32 %v1699, %v1926
        %v2092 = vadd.f32 %v1700, %v1932
        %v2093 = vadd.f32 %v1701, %v1970
        %v2094 = vadd.f32 %v1702, %v1976
        %v2095 = vadd.f32 %v1703, %v1982
        %v2096 = vadd.f32 %v1704, %v1988
        %v2097 = vadd.f32 %v1705, %v1994
        %v2098 = vadd.f32 %v1706, %v2000
        %v2099 = vadd.f32 %v1707, %v2006
        %v2100 = vadd.f32 %v1708, %v2012
        %v2101 = vadd.f32 %v1709, %v2018
        %v2102 = vadd.f32 %v1710, %v2024
        %v2103 = vadd.f32 %v1711, %v2030
        %v2104 = vadd.f32 %v1712, %v2036
        %v2105 = vadd.f32 %v1713, %v2042
        %v2106 = vadd.f32 %v1714, %v2048
        %v2107 = vadd.f32 %v1715, %v2054
        %v2108 = vadd.f32 %v1716, %v2060
        %v2109 = vld [vmem:[%s196 + $0x140] sm:$0xff]
        %v2110 = vld [vmem:[%s196 + $0x148] sm:$0xff]
        %v2111 = vld [vmem:[%s196 + $0x150] sm:$0xff]
        %v2112 = vld [vmem:[%s196 + $0x158] sm:$0xff]
        %v2113 = vld [vmem:[%s196 + $0x160] sm:$0xff]
        %v2114 = vld [vmem:[%s196 + $0x168] sm:$0xff]
        %v2115 = vld [vmem:[%s196 + $0x170] sm:$0xff]
        %v2116 = vld [vmem:[%s196 + $0x178] sm:$0xff]
        %v2117 = vunpack.c.l.bf16 %v2109
        %v2118 = vunpack.c.h.bf16 %v2109
        %v2119 = vunpack.c.l.bf16 %v2110
        %v2120 = vunpack.c.h.bf16 %v2110
        %v2121 = vunpack.c.l.bf16 %v2111
        %v2122 = vunpack.c.h.bf16 %v2111
        %v2123 = vunpack.c.l.bf16 %v2112
        %v2124 = vunpack.c.h.bf16 %v2112
        %v2125 = vunpack.c.l.bf16 %v2113
        %v2126 = vunpack.c.h.bf16 %v2113
        %v2127 = vunpack.c.l.bf16 %v2114
        %v2128 = vunpack.c.h.bf16 %v2114
        %v2129 = vunpack.c.l.bf16 %v2115
        %v2130 = vunpack.c.h.bf16 %v2115
        %v2131 = vunpack.c.l.bf16 %v2116
        %v2132 = vunpack.c.h.bf16 %v2116
        %v2133 = vrot.slane %v2117, 4
        %v2134 = vmax.f32 %v2117, %v2133
        %v2135 = vrot.slane %v2134, 2
        %v2136 = vmax.f32 %v2134, %v2135
        %v2137 = vrot.slane %v2136, 1
        %v2138 = vmax.f32 %v2136, %v2137
        %v2139 = vrot.slane %v2118, 4
        %v2140 = vmax.f32 %v2118, %v2139
        %v2141 = vrot.slane %v2140, 2
        %v2142 = vmax.f32 %v2140, %v2141
        %v2143 = vrot.slane %v2142, 1
        %v2144 = vmax.f32 %v2142, %v2143
        %v2145 = vrot.slane %v2119, 4
        %v2146 = vmax.f32 %v2119, %v2145
        %v2147 = vrot.slane %v2146, 2
        %v2148 = vmax.f32 %v2146, %v2147
        %v2149 = vrot.slane %v2148, 1
        %v2150 = vmax.f32 %v2148, %v2149
        %v2151 = vrot.slane %v2120, 4
        %v2152 = vmax.f32 %v2120, %v2151
        %v2153 = vrot.slane %v2152, 2
        %v2154 = vmax.f32 %v2152, %v2153
        %v2155 = vrot.slane %v2154, 1
        %v2156 = vmax.f32 %v2154, %v2155
        %v2157 = vrot.slane %v2121, 4
        %v2158 = vmax.f32 %v2121, %v2157
        %v2159 = vrot.slane %v2158, 2
        %v2160 = vmax.f32 %v2158, %v2159
        %v2161 = vrot.slane %v2160, 1
        %v2162 = vmax.f32 %v2160, %v2161
        %v2163 = vrot.slane %v2122, 4
        %v2164 = vmax.f32 %v2122, %v2163
        %v2165 = vrot.slane %v2164, 2
        %v2166 = vmax.f32 %v2164, %v2165
        %v2167 = vrot.slane %v2166, 1
        %v2168 = vmax.f32 %v2166, %v2167
        %v2169 = vrot.slane %v2123, 4
        %v2170 = vmax.f32 %v2123, %v2169
        %v2171 = vrot.slane %v2170, 2
        %v2172 = vmax.f32 %v2170, %v2171
        %v2173 = vrot.slane %v2172, 1
        %v2174 = vmax.f32 %v2172, %v2173
        %v2175 = vrot.slane %v2124, 4
        %v2176 = vmax.f32 %v2124, %v2175
        %v2177 = vrot.slane %v2176, 2
        %v2178 = vmax.f32 %v2176, %v2177
        %v2179 = vrot.slane %v2178, 1
        %v2180 = vmax.f32 %v2178, %v2179
        %v2181 = vrot.slane %v2125, 4
        %v2182 = vmax.f32 %v2125, %v2181
        %v2183 = vrot.slane %v2182, 2
        %v2184 = vmax.f32 %v2182, %v2183
        %v2185 = vrot.slane %v2184, 1
        %v2186 = vmax.f32 %v2184, %v2185
        %v2187 = vrot.slane %v2126, 4
        %v2188 = vmax.f32 %v2126, %v2187
        %v2189 = vrot.slane %v2188, 2
        %v2190 = vmax.f32 %v2188, %v2189
        %v2191 = vrot.slane %v2190, 1
        %v2192 = vmax.f32 %v2190, %v2191
        %v2193 = vrot.slane %v2127, 4
        %v2194 = vmax.f32 %v2127, %v2193
        %v2195 = vrot.slane %v2194, 2
        %v2196 = vmax.f32 %v2194, %v2195
        %v2197 = vrot.slane %v2196, 1
        %v2198 = vmax.f32 %v2196, %v2197
        %v2199 = vrot.slane %v2128, 4
        %v2200 = vmax.f32 %v2128, %v2199
        %v2201 = vrot.slane %v2200, 2
        %v2202 = vmax.f32 %v2200, %v2201
        %v2203 = vrot.slane %v2202, 1
        %v2204 = vmax.f32 %v2202, %v2203
        %v2205 = vrot.slane %v2129, 4
        %v2206 = vmax.f32 %v2129, %v2205
        %v2207 = vrot.slane %v2206, 2
        %v2208 = vmax.f32 %v2206, %v2207
        %v2209 = vrot.slane %v2208, 1
        %v2210 = vmax.f32 %v2208, %v2209
        %v2211 = vrot.slane %v2130, 4
        %v2212 = vmax.f32 %v2130, %v2211
        %v2213 = vrot.slane %v2212, 2
        %v2214 = vmax.f32 %v2212, %v2213
        %v2215 = vrot.slane %v2214, 1
        %v2216 = vmax.f32 %v2214, %v2215
        %v2217 = vrot.slane %v2131, 4
        %v2218 = vmax.f32 %v2131, %v2217
        %v2219 = vrot.slane %v2218, 2
        %v2220 = vmax.f32 %v2218, %v2219
        %v2221 = vrot.slane %v2220, 1
        %v2222 = vmax.f32 %v2220, %v2221
        %v2223 = vrot.slane %v2132, 4
        %v2224 = vmax.f32 %v2132, %v2223
        %v2225 = vrot.slane %v2224, 2
        %v2226 = vmax.f32 %v2224, %v2225
        %v2227 = vrot.slane %v2226, 1
        %v2228 = vmax.f32 %v2226, %v2227
        %v2229 = vrot.slane %v2117, 4
        %v2230 = vadd.f32 %v2117, %v2229
        %v2231 = vrot.slane %v2230, 2
        %v2232 = vadd.f32 %v2230, %v2231
        %v2233 = vrot.slane %v2232, 1
        %v2234 = vadd.f32 %v2232, %v2233
        %v2235 = vrot.slane %v2118, 4
        %v2236 = vadd.f32 %v2118, %v2235
        %v2237 = vrot.slane %v2236, 2
        %v2238 = vadd.f32 %v2236, %v2237
        %v2239 = vrot.slane %v2238, 1
        %v2240 = vadd.f32 %v2238, %v2239
        %v2241 = vrot.slane %v2119, 4
        %v2242 = vadd.f32 %v2119, %v2241
        %v2243 = vrot.slane %v2242, 2
        %v2244 = vadd.f32 %v2242, %v2243
        %v2245 = vrot.slane %v2244, 1
        %v2246 = vadd.f32 %v2244, %v2245
        %v2247 = vrot.slane %v2120, 4
        %v2248 = vadd.f32 %v2120, %v2247
        %v2249 = vrot.slane %v2248, 2
        %v2250 = vadd.f32 %v2248, %v2249
        %v2251 = vrot.slane %v2250, 1
        %v2252 = vadd.f32 %v2250, %v2251
        %v2253 = vrot.slane %v2121, 4
        %v2254 = vadd.f32 %v2121, %v2253
        %v2255 = vrot.slane %v2254, 2
        %v2256 = vadd.f32 %v2254, %v2255
        %v2257 = vrot.slane %v2256, 1
        %v2258 = vadd.f32 %v2256, %v2257
        %v2259 = vrot.slane %v2122, 4
        %v2260 = vadd.f32 %v2122, %v2259
        %v2261 = vrot.slane %v2260, 2
        %v2262 = vadd.f32 %v2260, %v2261
        %v2263 = vrot.slane %v2262, 1
        %v2264 = vadd.f32 %v2262, %v2263
        %v2265 = vrot.slane %v2123, 4
        %v2266 = vadd.f32 %v2123, %v2265
        %v2267 = vrot.slane %v2266, 2
        %v2268 = vadd.f32 %v2266, %v2267
        %v2269 = vrot.slane %v2268, 1
        %v2270 = vadd.f32 %v2268, %v2269
        %v2271 = vrot.slane %v2124, 4
        %v2272 = vadd.f32 %v2124, %v2271
        %v2273 = vrot.slane %v2272, 2
        %v2274 = vadd.f32 %v2272, %v2273
        %v2275 = vrot.slane %v2274, 1
        %v2276 = vadd.f32 %v2274, %v2275
        %v2277 = vrot.slane %v2125, 4
        %v2278 = vadd.f32 %v2125, %v2277
        %v2279 = vrot.slane %v2278, 2
        %v2280 = vadd.f32 %v2278, %v2279
        %v2281 = vrot.slane %v2280, 1
        %v2282 = vadd.f32 %v2280, %v2281
        %v2283 = vrot.slane %v2126, 4
        %v2284 = vadd.f32 %v2126, %v2283
        %v2285 = vrot.slane %v2284, 2
        %v2286 = vadd.f32 %v2284, %v2285
        %v2287 = vrot.slane %v2286, 1
        %v2288 = vadd.f32 %v2286, %v2287
        %v2289 = vrot.slane %v2127, 4
        %v2290 = vadd.f32 %v2127, %v2289
        %v2291 = vrot.slane %v2290, 2
        %v2292 = vadd.f32 %v2290, %v2291
        %v2293 = vrot.slane %v2292, 1
        %v2294 = vadd.f32 %v2292, %v2293
        %v2295 = vrot.slane %v2128, 4
        %v2296 = vadd.f32 %v2128, %v2295
        %v2297 = vrot.slane %v2296, 2
        %v2298 = vadd.f32 %v2296, %v2297
        %v2299 = vrot.slane %v2298, 1
        %v2300 = vadd.f32 %v2298, %v2299
        %v2301 = vrot.slane %v2129, 4
        %v2302 = vadd.f32 %v2129, %v2301
        %v2303 = vrot.slane %v2302, 2
        %v2304 = vadd.f32 %v2302, %v2303
        %v2305 = vrot.slane %v2304, 1
        %v2306 = vadd.f32 %v2304, %v2305
        %v2307 = vrot.slane %v2130, 4
        %v2308 = vadd.f32 %v2130, %v2307
        %v2309 = vrot.slane %v2308, 2
        %v2310 = vadd.f32 %v2308, %v2309
        %v2311 = vrot.slane %v2310, 1
        %v2312 = vadd.f32 %v2310, %v2311
        %v2313 = vrot.slane %v2131, 4
        %v2314 = vadd.f32 %v2131, %v2313
        %v2315 = vrot.slane %v2314, 2
        %v2316 = vadd.f32 %v2314, %v2315
        %v2317 = vrot.slane %v2316, 1
        %v2318 = vadd.f32 %v2316, %v2317
        %v2319 = vrot.slane %v2132, 4
        %v2320 = vadd.f32 %v2132, %v2319
        %v2321 = vrot.slane %v2320, 2
        %v2322 = vadd.f32 %v2320, %v2321
        %v2323 = vrot.slane %v2322, 1
        %v2324 = vadd.f32 %v2322, %v2323
        %v2325 = vmul.f32 %v2117, %v2117
        %v2326 = vmul.f32 %v2118, %v2118
        %v2327 = vmul.f32 %v2119, %v2119
        %v2328 = vmul.f32 %v2120, %v2120
        %v2329 = vmul.f32 %v2121, %v2121
        %v2330 = vmul.f32 %v2122, %v2122
        %v2331 = vmul.f32 %v2123, %v2123
        %v2332 = vmul.f32 %v2124, %v2124
        %v2333 = vmul.f32 %v2125, %v2125
        %v2334 = vmul.f32 %v2126, %v2126
        %v2335 = vmul.f32 %v2127, %v2127
        %v2336 = vmul.f32 %v2128, %v2128
        %v2337 = vmul.f32 %v2129, %v2129
        %v2338 = vmul.f32 %v2130, %v2130
        %v2339 = vmul.f32 %v2131, %v2131
        %v2340 = vmul.f32 %v2132, %v2132
        %v2341 = vmul.f32 %v2325, %v2117
        %v2342 = vmul.f32 %v2326, %v2118
        %v2343 = vmul.f32 %v2327, %v2119
        %v2344 = vmul.f32 %v2328, %v2120
        %v2345 = vmul.f32 %v2329, %v2121
        %v2346 = vmul.f32 %v2330, %v2122
        %v2347 = vmul.f32 %v2331, %v2123
        %v2348 = vmul.f32 %v2332, %v2124
        %v2349 = vmul.f32 %v2333, %v2125
        %v2350 = vmul.f32 %v2334, %v2126
        %v2351 = vmul.f32 %v2335, %v2127
        %v2352 = vmul.f32 %v2336, %v2128
        %v2353 = vmul.f32 %v2337, %v2129
        %v2354 = vmul.f32 %v2338, %v2130
        %v2355 = vmul.f32 %v2339, %v2131
        %v2356 = vmul.f32 %v2340, %v2132
        %v2357 = vrot.slane %v2341, 4
        %v2358 = vadd.f32 %v2341, %v2357
        %v2359 = vrot.slane %v2358, 2
        %v2360 = vadd.f32 %v2358, %v2359
        %v2361 = vrot.slane %v2360, 1
        %v2362 = vadd.f32 %v2360, %v2361
        %v2363 = vrot.slane %v2342, 4
        %v2364 = vadd.f32 %v2342, %v2363
        %v2365 = vrot.slane %v2364, 2
        %v2366 = vadd.f32 %v2364, %v2365
        %v2367 = vrot.slane %v2366, 1
        %v2368 = vadd.f32 %v2366, %v2367
        %v2369 = vrot.slane %v2343, 4
        %v2370 = vadd.f32 %v2343, %v2369
        %v2371 = vrot.slane %v2370, 2
        %v2372 = vadd.f32 %v2370, %v2371
        %v2373 = vrot.slane %v2372, 1
        %v2374 = vadd.f32 %v2372, %v2373
        %v2375 = vrot.slane %v2344, 4
        %v2376 = vadd.f32 %v2344, %v2375
        %v2377 = vrot.slane %v2376, 2
        %v2378 = vadd.f32 %v2376, %v2377
        %v2379 = vrot.slane %v2378, 1
        %v2380 = vadd.f32 %v2378, %v2379
        %v2381 = vrot.slane %v2345, 4
        %v2382 = vadd.f32 %v2345, %v2381
        %v2383 = vrot.slane %v2382, 2
        %v2384 = vadd.f32 %v2382, %v2383
        %v2385 = vrot.slane %v2384, 1
        %v2386 = vadd.f32 %v2384, %v2385
        %v2387 = vrot.slane %v2346, 4
        %v2388 = vadd.f32 %v2346, %v2387
        %v2389 = vrot.slane %v2388, 2
        %v2390 = vadd.f32 %v2388, %v2389
        %v2391 = vrot.slane %v2390, 1
        %v2392 = vadd.f32 %v2390, %v2391
        %v2393 = vrot.slane %v2347, 4
        %v2394 = vadd.f32 %v2347, %v2393
        %v2395 = vrot.slane %v2394, 2
        %v2396 = vadd.f32 %v2394, %v2395
        %v2397 = vrot.slane %v2396, 1
        %v2398 = vadd.f32 %v2396, %v2397
        %v2399 = vrot.slane %v2348, 4
        %v2400 = vadd.f32 %v2348, %v2399
        %v2401 = vrot.slane %v2400, 2
        %v2402 = vadd.f32 %v2400, %v2401
        %v2403 = vrot.slane %v2402, 1
        %v2404 = vadd.f32 %v2402, %v2403
        %v2405 = vrot.slane %v2349, 4
        %v2406 = vadd.f32 %v2349, %v2405
        %v2407 = vrot.slane %v2406, 2
        %v2408 = vadd.f32 %v2406, %v2407
        %v2409 = vrot.slane %v2408, 1
        %v2410 = vadd.f32 %v2408, %v2409
        %v2411 = vrot.slane %v2350, 4
        %v2412 = vadd.f32 %v2350, %v2411
        %v2413 = vrot.slane %v2412, 2
        %v2414 = vadd.f32 %v2412, %v2413
        %v2415 = vrot.slane %v2414, 1
        %v2416 = vadd.f32 %v2414, %v2415
        %v2417 = vrot.slane %v2351, 4
        %v2418 = vadd.f32 %v2351, %v2417
        %v2419 = vrot.slane %v2418, 2
        %v2420 = vadd.f32 %v2418, %v2419
        %v2421 = vrot.slane %v2420, 1
        %v2422 = vadd.f32 %v2420, %v2421
        %v2423 = vrot.slane %v2352, 4
        %v2424 = vadd.f32 %v2352, %v2423
        %v2425 = vrot.slane %v2424, 2
        %v2426 = vadd.f32 %v2424, %v2425
        %v2427 = vrot.slane %v2426, 1
        %v2428 = vadd.f32 %v2426, %v2427
        %v2429 = vrot.slane %v2353, 4
        %v2430 = vadd.f32 %v2353, %v2429
        %v2431 = vrot.slane %v2430, 2
        %v2432 = vadd.f32 %v2430, %v2431
        %v2433 = vrot.slane %v2432, 1
        %v2434 = vadd.f32 %v2432, %v2433
        %v2435 = vrot.slane %v2354, 4
        %v2436 = vadd.f32 %v2354, %v2435
        %v2437 = vrot.slane %v2436, 2
        %v2438 = vadd.f32 %v2436, %v2437
        %v2439 = vrot.slane %v2438, 1
        %v2440 = vadd.f32 %v2438, %v2439
        %v2441 = vrot.slane %v2355, 4
        %v2442 = vadd.f32 %v2355, %v2441
        %v2443 = vrot.slane %v2442, 2
        %v2444 = vadd.f32 %v2442, %v2443
        %v2445 = vrot.slane %v2444, 1
        %v2446 = vadd.f32 %v2444, %v2445
        %v2447 = vrot.slane %v2356, 4
        %v2448 = vadd.f32 %v2356, %v2447
        %v2449 = vrot.slane %v2448, 2
        %v2450 = vadd.f32 %v2448, %v2449
        %v2451 = vrot.slane %v2450, 1
        %v2452 = vadd.f32 %v2450, %v2451
        %v2453 = vmax.f32 %v2061, %v2138
        %v2454 = vmax.f32 %v2062, %v2144
        %v2455 = vmax.f32 %v2063, %v2150
        %v2456 = vmax.f32 %v2064, %v2156
        %v2457 = vmax.f32 %v2065, %v2162
        %v2458 = vmax.f32 %v2066, %v2168
        %v2459 = vmax.f32 %v2067, %v2174
        %v2460 = vmax.f32 %v2068, %v2180
        %v2461 = vmax.f32 %v2069, %v2186
        %v2462 = vmax.f32 %v2070, %v2192
        %v2463 = vmax.f32 %v2071, %v2198
        %v2464 = vmax.f32 %v2072, %v2204
        %v2465 = vmax.f32 %v2073, %v2210
        %v2466 = vmax.f32 %v2074, %v2216
        %v2467 = vmax.f32 %v2075, %v2222
        %v2468 = vmax.f32 %v2076, %v2228
        %v2469 = vadd.f32 %v2077, %v2234
        %v2470 = vadd.f32 %v2078, %v2240
        %v2471 = vadd.f32 %v2079, %v2246
        %v2472 = vadd.f32 %v2080, %v2252
        %v2473 = vadd.f32 %v2081, %v2258
        %v2474 = vadd.f32 %v2082, %v2264
        %v2475 = vadd.f32 %v2083, %v2270
        %v2476 = vadd.f32 %v2084, %v2276
        %v2477 = vadd.f32 %v2085, %v2282
        %v2478 = vadd.f32 %v2086, %v2288
        %v2479 = vadd.f32 %v2087, %v2294
        %v2480 = vadd.f32 %v2088, %v2300
        %v2481 = vadd.f32 %v2089, %v2306
        %v2482 = vadd.f32 %v2090, %v2312
        %v2483 = vadd.f32 %v2091, %v2318
        %v2484 = vadd.f32 %v2092, %v2324
        %v2485 = vadd.f32 %v2093, %v2362
        %v2486 = vadd.f32 %v2094, %v2368
        %v2487 = vadd.f32 %v2095, %v2374
        %v2488 = vadd.f32 %v2096, %v2380
        %v2489 = vadd.f32 %v2097, %v2386
        %v2490 = vadd.f32 %v2098, %v2392
        %v2491 = vadd.f32 %v2099, %v2398
        %v2492 = vadd.f32 %v2100, %v2404
        %v2493 = vadd.f32 %v2101, %v2410
        %v2494 = vadd.f32 %v2102, %v2416
        %v2495 = vadd.f32 %v2103, %v2422
        %v2496 = vadd.f32 %v2104, %v2428
        %v2497 = vadd.f32 %v2105, %v2434
        %v2498 = vadd.f32 %v2106, %v2440
        %v2499 = vadd.f32 %v2107, %v2446
        %v2500 = vadd.f32 %v2108, %v2452
        %v2501 = vld [vmem:[%s196 + $0x180] sm:$0x11]
        %v2502 = vld [vmem:[%s196 + $0x188] sm:$0x11]
        %v2503 = vld [vmem:[%s196 + $0x190] sm:$0x11]
        %v2504 = vld [vmem:[%s196 + $0x198] sm:$0x11]
        %v2505 = vld [vmem:[%s196 + $0x1a0] sm:$0x11]
        %v2506 = vld [vmem:[%s196 + $0x1a8] sm:$0x11]
        %v2507 = vld [vmem:[%s196 + $0x1b0] sm:$0x11]
        %v2508 = vld [vmem:[%s196 + $0x1b8] sm:$0x11]
        %v2509 = vunpack.c.l.bf16 %v2501
        %v2510 = vunpack.c.h.bf16 %v2501
        %v2511 = vunpack.c.l.bf16 %v2502
        %v2512 = vunpack.c.h.bf16 %v2502
        %v2513 = vunpack.c.l.bf16 %v2503
        %v2514 = vunpack.c.h.bf16 %v2503
        %v2515 = vunpack.c.l.bf16 %v2504
        %v2516 = vunpack.c.h.bf16 %v2504
        %v2517 = vunpack.c.l.bf16 %v2505
        %v2518 = vunpack.c.h.bf16 %v2505
        %v2519 = vunpack.c.l.bf16 %v2506
        %v2520 = vunpack.c.h.bf16 %v2506
        %v2521 = vunpack.c.l.bf16 %v2507
        %v2522 = vunpack.c.h.bf16 %v2507
        %v2523 = vunpack.c.l.bf16 %v2508
        %v2524 = vunpack.c.h.bf16 %v2508
        %v2525 = vadd.f32 %v2509, 0.0
        %v2526 = vadd.f32 %v2510, 0.0
        %v2527 = vadd.f32 %v2511, 0.0
        %v2528 = vadd.f32 %v2512, 0.0
        %v2529 = vadd.f32 %v2513, 0.0
        %v2530 = vadd.f32 %v2514, 0.0
        %v2531 = vadd.f32 %v2515, 0.0
        %v2532 = vadd.f32 %v2516, 0.0
        %v2533 = vadd.f32 %v2517, 0.0
        %v2534 = vadd.f32 %v2518, 0.0
        %v2535 = vadd.f32 %v2519, 0.0
        %v2536 = vadd.f32 %v2520, 0.0
        %v2537 = vadd.f32 %v2521, 0.0
        %v2538 = vadd.f32 %v2522, 0.0
        %v2539 = vadd.f32 %v2523, 0.0
        %v2540 = vadd.f32 %v2524, 0.0
        %v2541 = vmul.f32 %v2509, %v2509
        %v2542 = vmul.f32 %v2510, %v2510
        %v2543 = vmul.f32 %v2511, %v2511
        %v2544 = vmul.f32 %v2512, %v2512
        %v2545 = vmul.f32 %v2513, %v2513
        %v2546 = vmul.f32 %v2514, %v2514
        %v2547 = vmul.f32 %v2515, %v2515
        %v2548 = vmul.f32 %v2516, %v2516
        %v2549 = vmul.f32 %v2517, %v2517
        %v2550 = vmul.f32 %v2518, %v2518
        %v2551 = vmul.f32 %v2519, %v2519
        %v2552 = vmul.f32 %v2520, %v2520
        %v2553 = vmul.f32 %v2521, %v2521
        %v2554 = vmul.f32 %v2522, %v2522
        %v2555 = vmul.f32 %v2523, %v2523
        %v2556 = vmul.f32 %v2524, %v2524
        %v2557 = vmul.f32 %v2541, %v2509
        %v2558 = vmul.f32 %v2542, %v2510
        %v2559 = vmul.f32 %v2543, %v2511
        %v2560 = vmul.f32 %v2544, %v2512
        %v2561 = vmul.f32 %v2545, %v2513
        %v2562 = vmul.f32 %v2546, %v2514
        %v2563 = vmul.f32 %v2547, %v2515
        %v2564 = vmul.f32 %v2548, %v2516
        %v2565 = vmul.f32 %v2549, %v2517
        %v2566 = vmul.f32 %v2550, %v2518
        %v2567 = vmul.f32 %v2551, %v2519
        %v2568 = vmul.f32 %v2552, %v2520
        %v2569 = vmul.f32 %v2553, %v2521
        %v2570 = vmul.f32 %v2554, %v2522
        %v2571 = vmul.f32 %v2555, %v2523
        %v2572 = vmul.f32 %v2556, %v2524
        %v2573 = vadd.f32 %v2557, 0.0
        %v2574 = vadd.f32 %v2558, 0.0
        %v2575 = vadd.f32 %v2559, 0.0
        %v2576 = vadd.f32 %v2560, 0.0
        %v2577 = vadd.f32 %v2561, 0.0
        %v2578 = vadd.f32 %v2562, 0.0
        %v2579 = vadd.f32 %v2563, 0.0
        %v2580 = vadd.f32 %v2564, 0.0
        %v2581 = vadd.f32 %v2565, 0.0
        %v2582 = vadd.f32 %v2566, 0.0
        %v2583 = vadd.f32 %v2567, 0.0
        %v2584 = vadd.f32 %v2568, 0.0
        %v2585 = vadd.f32 %v2569, 0.0
        %v2586 = vadd.f32 %v2570, 0.0
        %v2587 = vadd.f32 %v2571, 0.0
        %v2588 = vadd.f32 %v2572, 0.0
        %v2589 = vmax.f32 %v2453, %v2509
        %v2590 = vmax.f32 %v2454, %v2510
        %v2591 = vmax.f32 %v2455, %v2511
        %v2592 = vmax.f32 %v2456, %v2512
        %v2593 = vmax.f32 %v2457, %v2513
        %v2594 = vmax.f32 %v2458, %v2514
        %v2595 = vmax.f32 %v2459, %v2515
        %v2596 = vmax.f32 %v2460, %v2516
        %v2597 = vmax.f32 %v2461, %v2517
        %v2598 = vmax.f32 %v2462, %v2518
        %v2599 = vmax.f32 %v2463, %v2519
        %v2600 = vmax.f32 %v2464, %v2520
        %v2601 = vmax.f32 %v2465, %v2521
        %v2602 = vmax.f32 %v2466, %v2522
        %v2603 = vmax.f32 %v2467, %v2523
        %v2604 = vmax.f32 %v2468, %v2524
        %v2605 = vadd.f32 %v2469, %v2525
        %v2606 = vadd.f32 %v2470, %v2526
        %v2607 = vadd.f32 %v2471, %v2527
        %v2608 = vadd.f32 %v2472, %v2528
        %v2609 = vadd.f32 %v2473, %v2529
        %v2610 = vadd.f32 %v2474, %v2530
        %v2611 = vadd.f32 %v2475, %v2531
        %v2612 = vadd.f32 %v2476, %v2532
        %v2613 = vadd.f32 %v2477, %v2533
        %v2614 = vadd.f32 %v2478, %v2534
        %v2615 = vadd.f32 %v2479, %v2535
        %v2616 = vadd.f32 %v2480, %v2536
        %v2617 = vadd.f32 %v2481, %v2537
        %v2618 = vadd.f32 %v2482, %v2538
        %v2619 = vadd.f32 %v2483, %v2539
        %v2620 = vadd.f32 %v2484, %v2540
        %v2621 = vadd.f32 %v2485, %v2573
        %v2622 = vadd.f32 %v2486, %v2574
        %v2623 = vadd.f32 %v2487, %v2575
        %v2624 = vadd.f32 %v2488, %v2576
        %v2625 = vadd.f32 %v2489, %v2577
        %v2626 = vadd.f32 %v2490, %v2578
        %v2627 = vadd.f32 %v2491, %v2579
        %v2628 = vadd.f32 %v2492, %v2580
        %v2629 = vadd.f32 %v2493, %v2581
        %v2630 = vadd.f32 %v2494, %v2582
        %v2631 = vadd.f32 %v2495, %v2583
        %v2632 = vadd.f32 %v2496, %v2584
        %v2633 = vadd.f32 %v2497, %v2585
        %v2634 = vadd.f32 %v2498, %v2586
        %v2635 = vadd.f32 %v2499, %v2587
        %v2636 = vadd.f32 %v2500, %v2588
        %v2637 = vmul.f32 %v2605, 0.020408163
        %v2638 = vmul.f32 %v2606, 0.020408163
        %v2639 = vmul.f32 %v2607, 0.020408163
        %v2640 = vmul.f32 %v2608, 0.020408163
        %v2641 = vmul.f32 %v2609, 0.020408163
        %v2642 = vmul.f32 %v2610, 0.020408163
        %v2643 = vmul.f32 %v2611, 0.020408163
        %v2644 = vmul.f32 %v2612, 0.020408163
        %v2645 = vmul.f32 %v2613, 0.020408163
        %v2646 = vmul.f32 %v2614, 0.020408163
        %v2647 = vmul.f32 %v2615, 0.020408163
        %v2648 = vmul.f32 %v2616, 0.020408163
        %v2649 = vmul.f32 %v2617, 0.020408163
        %v2650 = vmul.f32 %v2618, 0.020408163
        %v2651 = vmul.f32 %v2619, 0.020408163
        %v2652 = vmul.f32 %v2620, 0.020408163
        %v2653 = vmul.f32 %v2621, 0.020408163
        %v2654 = vmul.f32 %v2622, 0.020408163
        %v2655 = vmul.f32 %v2623, 0.020408163
        %v2656 = vmul.f32 %v2624, 0.020408163
        %v2657 = vmul.f32 %v2625, 0.020408163
        %v2658 = vmul.f32 %v2626, 0.020408163
        %v2659 = vmul.f32 %v2627, 0.020408163
        %v2660 = vmul.f32 %v2628, 0.020408163
        %v2661 = vmul.f32 %v2629, 0.020408163
        %v2662 = vmul.f32 %v2630, 0.020408163
        %v2663 = vmul.f32 %v2631, 0.020408163
        %v2664 = vmul.f32 %v2632, 0.020408163
        %v2665 = vmul.f32 %v2633, 0.020408163
        %v2666 = vmul.f32 %v2634, 0.020408163
        %v2667 = vmul.f32 %v2635, 0.020408163
        %v2668 = vmul.f32 %v2636, 0.020408163
        %v2669 = vmax.f32 %v2653, 1e-18
        %v2670 = vmax.f32 %v2654, 1e-18
        %v2671 = vmax.f32 %v2655, 1e-18
        %v2672 = vmax.f32 %v2656, 1e-18
        %v2673 = vmax.f32 %v2657, 1e-18
        %v2674 = vmax.f32 %v2658, 1e-18
        %v2675 = vmax.f32 %v2659, 1e-18
        %v2676 = vmax.f32 %v2660, 1e-18
        %v2677 = vmax.f32 %v2661, 1e-18
        %v2678 = vmax.f32 %v2662, 1e-18
        %v2679 = vmax.f32 %v2663, 1e-18
        %v2680 = vmax.f32 %v2664, 1e-18
        %v2681 = vmax.f32 %v2665, 1e-18
        %v2682 = vmax.f32 %v2666, 1e-18
        %v2683 = vmax.f32 %v2667, 1e-18
        %v2684 = vmax.f32 %v2668, 1e-18
        %v2685 = vpow.f32 %v2669, 0.33333334
        %v2686 = vpow.f32 %v2670, 0.33333334
        %v2687 = vpow.f32 %v2671, 0.33333334
        %v2688 = vpow.f32 %v2672, 0.33333334
        %v2689 = vpow.f32 %v2673, 0.33333334
        %v2690 = vpow.f32 %v2674, 0.33333334
        %v2691 = vpow.f32 %v2675, 0.33333334
        %v2692 = vpow.f32 %v2676, 0.33333334
        %v2693 = vpow.f32 %v2677, 0.33333334
        %v2694 = vpow.f32 %v2678, 0.33333334
        %v2695 = vpow.f32 %v2679, 0.33333334
        %v2696 = vpow.f32 %v2680, 0.33333334
        %v2697 = vpow.f32 %v2681, 0.33333334
        %v2698 = vpow.f32 %v2682, 0.33333334
        %v2699 = vpow.f32 %v2683, 0.33333334
        %v2700 = vpow.f32 %v2684, 0.33333334
        %v2701 = vadd.f32 %v2589, %v2637
        %v2702 = vadd.f32 %v2590, %v2638
        %v2703 = vadd.f32 %v2591, %v2639
        %v2704 = vadd.f32 %v2592, %v2640
        %v2705 = vadd.f32 %v2593, %v2641
        %v2706 = vadd.f32 %v2594, %v2642
        %v2707 = vadd.f32 %v2595, %v2643
        %v2708 = vadd.f32 %v2596, %v2644
        %v2709 = vadd.f32 %v2597, %v2645
        %v2710 = vadd.f32 %v2598, %v2646
        %v2711 = vadd.f32 %v2599, %v2647
        %v2712 = vadd.f32 %v2600, %v2648
        %v2713 = vadd.f32 %v2601, %v2649
        %v2714 = vadd.f32 %v2602, %v2650
        %v2715 = vadd.f32 %v2603, %v2651
        %v2716 = vadd.f32 %v2604, %v2652
        %v2717 = vadd.f32 %v2701, %v2685
        %v2718 = vadd.f32 %v2702, %v2686
        %v2719 = vadd.f32 %v2703, %v2687
        %v2720 = vadd.f32 %v2704, %v2688
        %v2721 = vadd.f32 %v2705, %v2689
        %v2722 = vadd.f32 %v2706, %v2690
        %v2723 = vadd.f32 %v2707, %v2691
        %v2724 = vadd.f32 %v2708, %v2692
        %v2725 = vadd.f32 %v2709, %v2693
        %v2726 = vadd.f32 %v2710, %v2694
        %v2727 = vadd.f32 %v2711, %v2695
        %v2728 = vadd.f32 %v2712, %v2696
        %v2729 = vadd.f32 %v2713, %v2697
        %v2730 = vadd.f32 %v2714, %v2698
        %v2731 = vadd.f32 %v2715, %v2699
        %v2732 = vadd.f32 %v2716, %v2700
        %v2733 = vld [vmem:[#allocation2] sm:$0xff]
        %v2734 = vld [vmem:[#allocation2 + $0x8] sm:$0xff]
        %v2735 = vld [vmem:[#allocation2 + $0x10] sm:$0xff]
        %v2736 = vld [vmem:[#allocation2 + $0x18] sm:$0xff]
        %v2737 = vld [vmem:[#allocation2 + $0x20] sm:$0xff]
        %v2738 = vld [vmem:[#allocation2 + $0x28] sm:$0xff]
        %v2739 = vld [vmem:[#allocation2 + $0x30] sm:$0xff]
        %v2740 = vld [vmem:[#allocation2 + $0x38] sm:$0xff]
        %v2741 = vld [vmem:[#allocation2 + $0x40] sm:$0xff]
        %v2742 = vld [vmem:[#allocation2 + $0x48] sm:$0xff]
        %v2743 = vld [vmem:[#allocation2 + $0x50] sm:$0xff]
        %v2744 = vld [vmem:[#allocation2 + $0x58] sm:$0xff]
        %v2745 = vld [vmem:[#allocation2 + $0x60] sm:$0xff]
        %v2746 = vld [vmem:[#allocation2 + $0x68] sm:$0xff]
        %v2747 = vld [vmem:[#allocation2 + $0x70] sm:$0xff]
        %v2748 = vld [vmem:[#allocation2 + $0x78] sm:$0xff]
        %v2749 = vld [vmem:[#allocation2 + $0x80] sm:$0xff]
        %v2750 = vld [vmem:[#allocation2 + $0x88] sm:$0xff]
        %v2751 = vld [vmem:[#allocation2 + $0x90] sm:$0xff]
        %v2752 = vld [vmem:[#allocation2 + $0x98] sm:$0xff]
        %v2753 = vld [vmem:[#allocation2 + $0xa0] sm:$0xff]
        %v2754 = vld [vmem:[#allocation2 + $0xa8] sm:$0xff]
        %v2755 = vld [vmem:[#allocation2 + $0xb0] sm:$0xff]
        %v2756 = vld [vmem:[#allocation2 + $0xb8] sm:$0xff]
        %v2757 = vld [vmem:[#allocation2 + $0xc0] sm:$0xff]
        %v2758 = vld [vmem:[#allocation2 + $0xc8] sm:$0xff]
        %v2759 = vld [vmem:[#allocation2 + $0xd0] sm:$0xff]
        %v2760 = vld [vmem:[#allocation2 + $0xd8] sm:$0xff]
        %v2761 = vld [vmem:[#allocation2 + $0xe0] sm:$0xff]
        %v2762 = vld [vmem:[#allocation2 + $0xe8] sm:$0xff]
        %v2763 = vld [vmem:[#allocation2 + $0xf0] sm:$0xff]
        %v2764 = vld [vmem:[#allocation2 + $0xf8] sm:$0xff]
        %v2765 = vld [vmem:[#allocation2 + $0x100] sm:$0xff]
        %v2766 = vld [vmem:[#allocation2 + $0x108] sm:$0xff]
        %v2767 = vld [vmem:[#allocation2 + $0x110] sm:$0xff]
        %v2768 = vld [vmem:[#allocation2 + $0x118] sm:$0xff]
        %v2769 = vld [vmem:[#allocation2 + $0x120] sm:$0xff]
        %v2770 = vld [vmem:[#allocation2 + $0x128] sm:$0xff]
        %v2771 = vld [vmem:[#allocation2 + $0x130] sm:$0xff]
        %v2772 = vld [vmem:[#allocation2 + $0x138] sm:$0xff]
        %v2773 = vld [vmem:[#allocation2 + $0x140] sm:$0xff]
        %v2774 = vld [vmem:[#allocation2 + $0x148] sm:$0xff]
        %v2775 = vld [vmem:[#allocation2 + $0x150] sm:$0xff]
        %v2776 = vld [vmem:[#allocation2 + $0x158] sm:$0xff]
        %v2777 = vld [vmem:[#allocation2 + $0x160] sm:$0xff]
        %v2778 = vld [vmem:[#allocation2 + $0x168] sm:$0xff]
        %v2779 = vld [vmem:[#allocation2 + $0x170] sm:$0xff]
        %v2780 = vld [vmem:[#allocation2 + $0x178] sm:$0xff]
        %v2781 = vld [vmem:[#allocation2 + $0x180] sm:$0xff]
        %v2782 = vld [vmem:[#allocation2 + $0x188] sm:$0xff]
        %v2783 = vld [vmem:[#allocation2 + $0x190] sm:$0xff]
        %v2784 = vld [vmem:[#allocation2 + $0x198] sm:$0xff]
        %v2785 = vld [vmem:[#allocation2 + $0x1a0] sm:$0xff]
        %v2786 = vld [vmem:[#allocation2 + $0x1a8] sm:$0xff]
        %v2787 = vld [vmem:[#allocation2 + $0x1b0] sm:$0xff]
        %v2788 = vld [vmem:[#allocation2 + $0x1b8] sm:$0xff]
        %v2789 = vld [vmem:[#allocation2 + $0x1c0] sm:$0xff]
        %v2790 = vld [vmem:[#allocation2 + $0x1c8] sm:$0xff]
        %v2791 = vld [vmem:[#allocation2 + $0x1d0] sm:$0xff]
        %v2792 = vld [vmem:[#allocation2 + $0x1d8] sm:$0xff]
        %v2793 = vld [vmem:[#allocation2 + $0x1e0] sm:$0xff]
        %v2794 = vld [vmem:[#allocation2 + $0x1e8] sm:$0xff]
        %v2795 = vld [vmem:[#allocation2 + $0x1f0] sm:$0xff]
        %v2796 = vld [vmem:[#allocation2 + $0x1f8] sm:$0xff]
        %v2797 = vld [vmem:[#allocation2 + $0x200] sm:$0xff]
        %v2798 = vld [vmem:[#allocation2 + $0x208] sm:$0xff]
        %v2799 = vld [vmem:[#allocation2 + $0x210] sm:$0xff]
        %v2800 = vld [vmem:[#allocation2 + $0x218] sm:$0xff]
        %v2801 = vld [vmem:[#allocation2 + $0x220] sm:$0xff]
        %v2802 = vld [vmem:[#allocation2 + $0x228] sm:$0xff]
        %v2803 = vld [vmem:[#allocation2 + $0x230] sm:$0xff]
        %v2804 = vld [vmem:[#allocation2 + $0x238] sm:$0xff]
        %v2805 = vld [vmem:[#allocation2 + $0x240] sm:$0xff]
        %v2806 = vld [vmem:[#allocation2 + $0x248] sm:$0xff]
        %v2807 = vld [vmem:[#allocation2 + $0x250] sm:$0xff]
        %v2808 = vld [vmem:[#allocation2 + $0x258] sm:$0xff]
        %v2809 = vld [vmem:[#allocation2 + $0x260] sm:$0xff]
        %v2810 = vld [vmem:[#allocation2 + $0x268] sm:$0xff]
        %v2811 = vld [vmem:[#allocation2 + $0x270] sm:$0xff]
        %v2812 = vld [vmem:[#allocation2 + $0x278] sm:$0xff]
        %v2813 = vld [vmem:[#allocation2 + $0x280] sm:$0xff]
        %v2814 = vld [vmem:[#allocation2 + $0x288] sm:$0xff]
        %v2815 = vld [vmem:[#allocation2 + $0x290] sm:$0xff]
        %v2816 = vld [vmem:[#allocation2 + $0x298] sm:$0xff]
        %v2817 = vld [vmem:[#allocation2 + $0x2a0] sm:$0xff]
        %v2818 = vld [vmem:[#allocation2 + $0x2a8] sm:$0xff]
        %v2819 = vld [vmem:[#allocation2 + $0x2b0] sm:$0xff]
        %v2820 = vld [vmem:[#allocation2 + $0x2b8] sm:$0xff]
        %v2821 = vld [vmem:[#allocation2 + $0x2c0] sm:$0xff]
        %v2822 = vld [vmem:[#allocation2 + $0x2c8] sm:$0xff]
        %v2823 = vld [vmem:[#allocation2 + $0x2d0] sm:$0xff]
        %v2824 = vld [vmem:[#allocation2 + $0x2d8] sm:$0xff]
        %v2825 = vld [vmem:[#allocation2 + $0x2e0] sm:$0xff]
        %v2826 = vld [vmem:[#allocation2 + $0x2e8] sm:$0xff]
        %v2827 = vld [vmem:[#allocation2 + $0x2f0] sm:$0xff]
        %v2828 = vld [vmem:[#allocation2 + $0x2f8] sm:$0xff]
        %v2829 = vld [vmem:[#allocation2 + $0x300] sm:$0xff]
        %v2830 = vld [vmem:[#allocation2 + $0x308] sm:$0xff]
        %v2831 = vld [vmem:[#allocation2 + $0x310] sm:$0xff]
        %v2832 = vld [vmem:[#allocation2 + $0x318] sm:$0xff]
        %v2833 = vld [vmem:[#allocation2 + $0x320] sm:$0xff]
        %v2834 = vld [vmem:[#allocation2 + $0x328] sm:$0xff]
        %v2835 = vld [vmem:[#allocation2 + $0x330] sm:$0xff]
        %v2836 = vld [vmem:[#allocation2 + $0x338] sm:$0xff]
        %v2837 = vld [vmem:[#allocation2 + $0x340] sm:$0xff]
        %v2838 = vld [vmem:[#allocation2 + $0x348] sm:$0xff]
        %v2839 = vld [vmem:[#allocation2 + $0x350] sm:$0xff]
        %v2840 = vld [vmem:[#allocation2 + $0x358] sm:$0xff]
        %v2841 = vld [vmem:[#allocation2 + $0x360] sm:$0xff]
        %v2842 = vld [vmem:[#allocation2 + $0x368] sm:$0xff]
        %v2843 = vld [vmem:[#allocation2 + $0x370] sm:$0xff]
        %v2844 = vld [vmem:[#allocation2 + $0x378] sm:$0xff]
        %v2845 = vld [vmem:[#allocation2 + $0x380] sm:$0xff]
        %v2846 = vld [vmem:[#allocation2 + $0x388] sm:$0xff]
        %v2847 = vld [vmem:[#allocation2 + $0x390] sm:$0xff]
        %v2848 = vld [vmem:[#allocation2 + $0x398] sm:$0xff]
        %v2849 = vld [vmem:[#allocation2 + $0x3a0] sm:$0xff]
        %v2850 = vld [vmem:[#allocation2 + $0x3a8] sm:$0xff]
        %v2851 = vld [vmem:[#allocation2 + $0x3b0] sm:$0xff]
        %v2852 = vld [vmem:[#allocation2 + $0x3b8] sm:$0xff]
        %v2853 = vld [vmem:[#allocation2 + $0x3c0] sm:$0xff]
        %v2854 = vld [vmem:[#allocation2 + $0x3c8] sm:$0xff]
        %v2855 = vld [vmem:[#allocation2 + $0x3d0] sm:$0xff]
        %v2856 = vld [vmem:[#allocation2 + $0x3d8] sm:$0xff]
        %v2857 = vld [vmem:[#allocation2 + $0x3e0] sm:$0xff]
        %v2858 = vld [vmem:[#allocation2 + $0x3e8] sm:$0xff]
        %v2859 = vld [vmem:[#allocation2 + $0x3f0] sm:$0xff]
        %v2860 = vld [vmem:[#allocation2 + $0x3f8] sm:$0xff]
        %v2861 = vld [vmem:[#allocation2 + $0x400] sm:$0xff]
        %v2862 = vld [vmem:[#allocation2 + $0x408] sm:$0xff]
        %v2863 = vld [vmem:[#allocation2 + $0x410] sm:$0xff]
        %v2864 = vld [vmem:[#allocation2 + $0x418] sm:$0xff]
        %v2865 = vld [vmem:[#allocation2 + $0x420] sm:$0xff]
        %v2866 = vld [vmem:[#allocation2 + $0x428] sm:$0xff]
        %v2867 = vld [vmem:[#allocation2 + $0x430] sm:$0xff]
        %v2868 = vld [vmem:[#allocation2 + $0x438] sm:$0xff]
        %v2869 = vld [vmem:[#allocation2 + $0x440] sm:$0xff]
        %v2870 = vld [vmem:[#allocation2 + $0x448] sm:$0xff]
        %v2871 = vld [vmem:[#allocation2 + $0x450] sm:$0xff]
        %v2872 = vld [vmem:[#allocation2 + $0x458] sm:$0xff]
        %v2873 = vld [vmem:[#allocation2 + $0x460] sm:$0xff]
        %v2874 = vld [vmem:[#allocation2 + $0x468] sm:$0xff]
        %v2875 = vld [vmem:[#allocation2 + $0x470] sm:$0xff]
        %v2876 = vld [vmem:[#allocation2 + $0x478] sm:$0xff]
        %v2877 = vld [vmem:[#allocation2 + $0x480] sm:$0xff]
        %v2878 = vld [vmem:[#allocation2 + $0x488] sm:$0xff]
        %v2879 = vld [vmem:[#allocation2 + $0x490] sm:$0xff]
        %v2880 = vld [vmem:[#allocation2 + $0x498] sm:$0xff]
        %v2881 = vld [vmem:[#allocation2 + $0x4a0] sm:$0xff]
        %v2882 = vld [vmem:[#allocation2 + $0x4a8] sm:$0xff]
        %v2883 = vld [vmem:[#allocation2 + $0x4b0] sm:$0xff]
        %v2884 = vld [vmem:[#allocation2 + $0x4b8] sm:$0xff]
        %v2885 = vld [vmem:[#allocation2 + $0x4c0] sm:$0xff]
        %v2886 = vld [vmem:[#allocation2 + $0x4c8] sm:$0xff]
        %v2887 = vld [vmem:[#allocation2 + $0x4d0] sm:$0xff]
        %v2888 = vld [vmem:[#allocation2 + $0x4d8] sm:$0xff]
        %v2889 = vld [vmem:[#allocation2 + $0x4e0] sm:$0xff]
        %v2890 = vld [vmem:[#allocation2 + $0x4e8] sm:$0xff]
        %v2891 = vld [vmem:[#allocation2 + $0x4f0] sm:$0xff]
        %v2892 = vld [vmem:[#allocation2 + $0x4f8] sm:$0xff]
        %v2893 = vld [vmem:[#allocation2 + $0x500] sm:$0xff]
        %v2894 = vld [vmem:[#allocation2 + $0x508] sm:$0xff]
        %v2895 = vld [vmem:[#allocation2 + $0x510] sm:$0xff]
        %v2896 = vld [vmem:[#allocation2 + $0x518] sm:$0xff]
        %v2897 = vld [vmem:[#allocation2 + $0x520] sm:$0xff]
        %v2898 = vld [vmem:[#allocation2 + $0x528] sm:$0xff]
        %v2899 = vld [vmem:[#allocation2 + $0x530] sm:$0xff]
        %v2900 = vld [vmem:[#allocation2 + $0x538] sm:$0xff]
        %v2901 = vld [vmem:[#allocation2 + $0x540] sm:$0xff]
        %v2902 = vld [vmem:[#allocation2 + $0x548] sm:$0xff]
        %v2903 = vld [vmem:[#allocation2 + $0x550] sm:$0xff]
        %v2904 = vld [vmem:[#allocation2 + $0x558] sm:$0xff]
        %v2905 = vld [vmem:[#allocation2 + $0x560] sm:$0xff]
        %v2906 = vld [vmem:[#allocation2 + $0x568] sm:$0xff]
        %v2907 = vld [vmem:[#allocation2 + $0x570] sm:$0xff]
        %v2908 = vld [vmem:[#allocation2 + $0x578] sm:$0xff]
        %v2909 = vld [vmem:[#allocation2 + $0x580] sm:$0xff]
        %v2910 = vld [vmem:[#allocation2 + $0x588] sm:$0xff]
        %v2911 = vld [vmem:[#allocation2 + $0x590] sm:$0xff]
        %v2912 = vld [vmem:[#allocation2 + $0x598] sm:$0xff]
        %v2913 = vld [vmem:[#allocation2 + $0x5a0] sm:$0xff]
        %v2914 = vld [vmem:[#allocation2 + $0x5a8] sm:$0xff]
        %v2915 = vld [vmem:[#allocation2 + $0x5b0] sm:$0xff]
        %v2916 = vld [vmem:[#allocation2 + $0x5b8] sm:$0xff]
        %v2917 = vld [vmem:[#allocation2 + $0x5c0] sm:$0xff]
        %v2918 = vld [vmem:[#allocation2 + $0x5c8] sm:$0xff]
        %v2919 = vld [vmem:[#allocation2 + $0x5d0] sm:$0xff]
        %v2920 = vld [vmem:[#allocation2 + $0x5d8] sm:$0xff]
        %v2921 = vld [vmem:[#allocation2 + $0x5e0] sm:$0xff]
        %v2922 = vld [vmem:[#allocation2 + $0x5e8] sm:$0xff]
        %v2923 = vld [vmem:[#allocation2 + $0x5f0] sm:$0xff]
        %v2924 = vld [vmem:[#allocation2 + $0x5f8] sm:$0xff]
        %v2925 = vld [vmem:[#allocation2 + $0x600] sm:$0xff]
        %v2926 = vld [vmem:[#allocation2 + $0x608] sm:$0xff]
        %v2927 = vld [vmem:[#allocation2 + $0x610] sm:$0xff]
        %v2928 = vld [vmem:[#allocation2 + $0x618] sm:$0xff]
        %v2929 = vld [vmem:[#allocation2 + $0x620] sm:$0xff]
        %v2930 = vld [vmem:[#allocation2 + $0x628] sm:$0xff]
        %v2931 = vld [vmem:[#allocation2 + $0x630] sm:$0xff]
        %v2932 = vld [vmem:[#allocation2 + $0x638] sm:$0xff]
        %v2933 = vld [vmem:[#allocation2 + $0x640] sm:$0xff]
        %v2934 = vld [vmem:[#allocation2 + $0x648] sm:$0xff]
        %v2935 = vld [vmem:[#allocation2 + $0x650] sm:$0xff]
        %v2936 = vld [vmem:[#allocation2 + $0x658] sm:$0xff]
        %v2937 = vld [vmem:[#allocation2 + $0x660] sm:$0xff]
        %v2938 = vld [vmem:[#allocation2 + $0x668] sm:$0xff]
        %v2939 = vld [vmem:[#allocation2 + $0x670] sm:$0xff]
        %v2940 = vld [vmem:[#allocation2 + $0x678] sm:$0xff]
        %v2941 = vld [vmem:[#allocation2 + $0x680] sm:$0xff]
        %v2942 = vld [vmem:[#allocation2 + $0x688] sm:$0xff]
        %v2943 = vld [vmem:[#allocation2 + $0x690] sm:$0xff]
        %v2944 = vld [vmem:[#allocation2 + $0x698] sm:$0xff]
        %v2945 = vld [vmem:[#allocation2 + $0x6a0] sm:$0xff]
        %v2946 = vld [vmem:[#allocation2 + $0x6a8] sm:$0xff]
        %v2947 = vld [vmem:[#allocation2 + $0x6b0] sm:$0xff]
        %v2948 = vld [vmem:[#allocation2 + $0x6b8] sm:$0xff]
        %v2949 = vld [vmem:[#allocation2 + $0x6c0] sm:$0xff]
        %v2950 = vld [vmem:[#allocation2 + $0x6c8] sm:$0xff]
        %v2951 = vld [vmem:[#allocation2 + $0x6d0] sm:$0xff]
        %v2952 = vld [vmem:[#allocation2 + $0x6d8] sm:$0xff]
        %v2953 = vld [vmem:[#allocation2 + $0x6e0] sm:$0xff]
        %v2954 = vld [vmem:[#allocation2 + $0x6e8] sm:$0xff]
        %v2955 = vld [vmem:[#allocation2 + $0x6f0] sm:$0xff]
        %v2956 = vld [vmem:[#allocation2 + $0x6f8] sm:$0xff]
        %v2957 = vld [vmem:[#allocation2 + $0x700] sm:$0xff]
        %v2958 = vld [vmem:[#allocation2 + $0x708] sm:$0xff]
        %v2959 = vld [vmem:[#allocation2 + $0x710] sm:$0xff]
        %v2960 = vld [vmem:[#allocation2 + $0x718] sm:$0xff]
        %v2961 = vld [vmem:[#allocation2 + $0x720] sm:$0xff]
        %v2962 = vld [vmem:[#allocation2 + $0x728] sm:$0xff]
        %v2963 = vld [vmem:[#allocation2 + $0x730] sm:$0xff]
        %v2964 = vld [vmem:[#allocation2 + $0x738] sm:$0xff]
        %v2965 = vld [vmem:[#allocation2 + $0x740] sm:$0xff]
        %v2966 = vld [vmem:[#allocation2 + $0x748] sm:$0xff]
        %v2967 = vld [vmem:[#allocation2 + $0x750] sm:$0xff]
        %v2968 = vld [vmem:[#allocation2 + $0x758] sm:$0xff]
        %v2969 = vld [vmem:[#allocation2 + $0x760] sm:$0xff]
        %v2970 = vld [vmem:[#allocation2 + $0x768] sm:$0xff]
        %v2971 = vld [vmem:[#allocation2 + $0x770] sm:$0xff]
        %v2972 = vld [vmem:[#allocation2 + $0x778] sm:$0xff]
        %v2973 = vld [vmem:[#allocation2 + $0x780] sm:$0xff]
        %v2974 = vld [vmem:[#allocation2 + $0x788] sm:$0xff]
        %v2975 = vld [vmem:[#allocation2 + $0x790] sm:$0xff]
        %v2976 = vld [vmem:[#allocation2 + $0x798] sm:$0xff]
        %v2977 = vld [vmem:[#allocation2 + $0x7a0] sm:$0xff]
        %v2978 = vld [vmem:[#allocation2 + $0x7a8] sm:$0xff]
        %v2979 = vld [vmem:[#allocation2 + $0x7b0] sm:$0xff]
        %v2980 = vld [vmem:[#allocation2 + $0x7b8] sm:$0xff]
        %v2981 = vld [vmem:[#allocation2 + $0x7c0] sm:$0xff]
        %v2982 = vld [vmem:[#allocation2 + $0x7c8] sm:$0xff]
        %v2983 = vld [vmem:[#allocation2 + $0x7d0] sm:$0xff]
        %v2984 = vld [vmem:[#allocation2 + $0x7d8] sm:$0xff]
        %v2985 = vld [vmem:[#allocation2 + $0x7e0] sm:$0xff]
        %v2986 = vld [vmem:[#allocation2 + $0x7e8] sm:$0xff]
        %v2987 = vld [vmem:[#allocation2 + $0x7f0] sm:$0xff]
        %v2988 = vld [vmem:[#allocation2 + $0x7f8] sm:$0xff]
        %v2989 = vld [vmem:[#allocation2 + $0x800] sm:$0xff]
        %v2990 = vld [vmem:[#allocation2 + $0x808] sm:$0xff]
        %v2991 = vld [vmem:[#allocation2 + $0x810] sm:$0xff]
        %v2992 = vld [vmem:[#allocation2 + $0x818] sm:$0xff]
        %v2993 = vld [vmem:[#allocation2 + $0x820] sm:$0xff]
        %v2994 = vld [vmem:[#allocation2 + $0x828] sm:$0xff]
        %v2995 = vld [vmem:[#allocation2 + $0x830] sm:$0xff]
        %v2996 = vld [vmem:[#allocation2 + $0x838] sm:$0xff]
        %v2997 = vld [vmem:[#allocation2 + $0x840] sm:$0xff]
        %v2998 = vld [vmem:[#allocation2 + $0x848] sm:$0xff]
        %v2999 = vld [vmem:[#allocation2 + $0x850] sm:$0xff]
        %v3000 = vld [vmem:[#allocation2 + $0x858] sm:$0xff]
        %v3001 = vld [vmem:[#allocation2 + $0x860] sm:$0xff]
        %v3002 = vld [vmem:[#allocation2 + $0x868] sm:$0xff]
        %v3003 = vld [vmem:[#allocation2 + $0x870] sm:$0xff]
        %v3004 = vld [vmem:[#allocation2 + $0x878] sm:$0xff]
        %v3005 = vld [vmem:[#allocation2 + $0x880] sm:$0xff]
        %v3006 = vld [vmem:[#allocation2 + $0x888] sm:$0xff]
        %v3007 = vld [vmem:[#allocation2 + $0x890] sm:$0xff]
        %v3008 = vld [vmem:[#allocation2 + $0x898] sm:$0xff]
        %v3009 = vld [vmem:[#allocation2 + $0x8a0] sm:$0xff]
        %v3010 = vld [vmem:[#allocation2 + $0x8a8] sm:$0xff]
        %v3011 = vld [vmem:[#allocation2 + $0x8b0] sm:$0xff]
        %v3012 = vld [vmem:[#allocation2 + $0x8b8] sm:$0xff]
        %v3013 = vld [vmem:[#allocation2 + $0x8c0] sm:$0xff]
        %v3014 = vld [vmem:[#allocation2 + $0x8c8] sm:$0xff]
        %v3015 = vld [vmem:[#allocation2 + $0x8d0] sm:$0xff]
        %v3016 = vld [vmem:[#allocation2 + $0x8d8] sm:$0xff]
        %v3017 = vld [vmem:[#allocation2 + $0x8e0] sm:$0xff]
        %v3018 = vld [vmem:[#allocation2 + $0x8e8] sm:$0xff]
        %v3019 = vld [vmem:[#allocation2 + $0x8f0] sm:$0xff]
        %v3020 = vld [vmem:[#allocation2 + $0x8f8] sm:$0xff]
        %v3021 = vld [vmem:[#allocation2 + $0x900] sm:$0xff]
        %v3022 = vld [vmem:[#allocation2 + $0x908] sm:$0xff]
        %v3023 = vld [vmem:[#allocation2 + $0x910] sm:$0xff]
        %v3024 = vld [vmem:[#allocation2 + $0x918] sm:$0xff]
        %v3025 = vld [vmem:[#allocation2 + $0x920] sm:$0xff]
        %v3026 = vld [vmem:[#allocation2 + $0x928] sm:$0xff]
        %v3027 = vld [vmem:[#allocation2 + $0x930] sm:$0xff]
        %v3028 = vld [vmem:[#allocation2 + $0x938] sm:$0xff]
        %v3029 = vld [vmem:[#allocation2 + $0x940] sm:$0xff]
        %v3030 = vld [vmem:[#allocation2 + $0x948] sm:$0xff]
        %v3031 = vld [vmem:[#allocation2 + $0x950] sm:$0xff]
        %v3032 = vld [vmem:[#allocation2 + $0x958] sm:$0xff]
        %v3033 = vld [vmem:[#allocation2 + $0x960] sm:$0xff]
        %v3034 = vld [vmem:[#allocation2 + $0x968] sm:$0xff]
        %v3035 = vld [vmem:[#allocation2 + $0x970] sm:$0xff]
        %v3036 = vld [vmem:[#allocation2 + $0x978] sm:$0xff]
        %v3037 = vld [vmem:[#allocation2 + $0x980] sm:$0xff]
        %v3038 = vld [vmem:[#allocation2 + $0x988] sm:$0xff]
        %v3039 = vld [vmem:[#allocation2 + $0x990] sm:$0xff]
        %v3040 = vld [vmem:[#allocation2 + $0x998] sm:$0xff]
        %v3041 = vld [vmem:[#allocation2 + $0x9a0] sm:$0xff]
        %v3042 = vld [vmem:[#allocation2 + $0x9a8] sm:$0xff]
        %v3043 = vld [vmem:[#allocation2 + $0x9b0] sm:$0xff]
        %v3044 = vld [vmem:[#allocation2 + $0x9b8] sm:$0xff]
        %v3045 = vld [vmem:[#allocation2 + $0x9c0] sm:$0xff]
        %v3046 = vld [vmem:[#allocation2 + $0x9c8] sm:$0xff]
        %v3047 = vld [vmem:[#allocation2 + $0x9d0] sm:$0xff]
        %v3048 = vld [vmem:[#allocation2 + $0x9d8] sm:$0xff]
        %v3049 = vld [vmem:[#allocation2 + $0x9e0] sm:$0xff]
        %v3050 = vld [vmem:[#allocation2 + $0x9e8] sm:$0xff]
        %v3051 = vld [vmem:[#allocation2 + $0x9f0] sm:$0xff]
        %v3052 = vld [vmem:[#allocation2 + $0x9f8] sm:$0xff]
        %v3053 = vld [vmem:[#allocation2 + $0xa00] sm:$0xff]
        %v3054 = vld [vmem:[#allocation2 + $0xa08] sm:$0xff]
        %v3055 = vld [vmem:[#allocation2 + $0xa10] sm:$0xff]
        %v3056 = vld [vmem:[#allocation2 + $0xa18] sm:$0xff]
        %v3057 = vld [vmem:[#allocation2 + $0xa20] sm:$0xff]
        %v3058 = vld [vmem:[#allocation2 + $0xa28] sm:$0xff]
        %v3059 = vld [vmem:[#allocation2 + $0xa30] sm:$0xff]
        %v3060 = vld [vmem:[#allocation2 + $0xa38] sm:$0xff]
        %v3061 = vld [vmem:[#allocation2 + $0xa40] sm:$0xff]
        %v3062 = vld [vmem:[#allocation2 + $0xa48] sm:$0xff]
        %v3063 = vld [vmem:[#allocation2 + $0xa50] sm:$0xff]
        %v3064 = vld [vmem:[#allocation2 + $0xa58] sm:$0xff]
        %v3065 = vld [vmem:[#allocation2 + $0xa60] sm:$0xff]
        %v3066 = vld [vmem:[#allocation2 + $0xa68] sm:$0xff]
        %v3067 = vld [vmem:[#allocation2 + $0xa70] sm:$0xff]
        %v3068 = vld [vmem:[#allocation2 + $0xa78] sm:$0xff]
        %v3069 = vld [vmem:[#allocation2 + $0xa80] sm:$0xff]
        %v3070 = vld [vmem:[#allocation2 + $0xa88] sm:$0xff]
        %v3071 = vld [vmem:[#allocation2 + $0xa90] sm:$0xff]
        %v3072 = vld [vmem:[#allocation2 + $0xa98] sm:$0xff]
        %v3073 = vld [vmem:[#allocation2 + $0xaa0] sm:$0xff]
        %v3074 = vld [vmem:[#allocation2 + $0xaa8] sm:$0xff]
        %v3075 = vld [vmem:[#allocation2 + $0xab0] sm:$0xff]
        %v3076 = vld [vmem:[#allocation2 + $0xab8] sm:$0xff]
        %v3077 = vld [vmem:[#allocation2 + $0xac0] sm:$0xff]
        %v3078 = vld [vmem:[#allocation2 + $0xac8] sm:$0xff]
        %v3079 = vld [vmem:[#allocation2 + $0xad0] sm:$0xff]
        %v3080 = vld [vmem:[#allocation2 + $0xad8] sm:$0xff]
        %v3081 = vld [vmem:[#allocation2 + $0xae0] sm:$0xff]
        %v3082 = vld [vmem:[#allocation2 + $0xae8] sm:$0xff]
        %v3083 = vld [vmem:[#allocation2 + $0xaf0] sm:$0xff]
        %v3084 = vld [vmem:[#allocation2 + $0xaf8] sm:$0xff]
        %v3085 = vld [vmem:[#allocation2 + $0xb00] sm:$0xff]
        %v3086 = vld [vmem:[#allocation2 + $0xb08] sm:$0xff]
        %v3087 = vld [vmem:[#allocation2 + $0xb10] sm:$0xff]
        %v3088 = vld [vmem:[#allocation2 + $0xb18] sm:$0xff]
        %v3089 = vld [vmem:[#allocation2 + $0xb20] sm:$0xff]
        %v3090 = vld [vmem:[#allocation2 + $0xb28] sm:$0xff]
        %v3091 = vld [vmem:[#allocation2 + $0xb30] sm:$0xff]
        %v3092 = vld [vmem:[#allocation2 + $0xb38] sm:$0xff]
        %v3093 = vld [vmem:[#allocation2 + $0xb40] sm:$0xff]
        %v3094 = vld [vmem:[#allocation2 + $0xb48] sm:$0xff]
        %v3095 = vld [vmem:[#allocation2 + $0xb50] sm:$0xff]
        %v3096 = vld [vmem:[#allocation2 + $0xb58] sm:$0xff]
        %v3097 = vld [vmem:[#allocation2 + $0xb60] sm:$0xff]
        %v3098 = vld [vmem:[#allocation2 + $0xb68] sm:$0xff]
        %v3099 = vld [vmem:[#allocation2 + $0xb70] sm:$0xff]
        %v3100 = vld [vmem:[#allocation2 + $0xb78] sm:$0xff]
        %v3101 = vld [vmem:[#allocation2 + $0xb80] sm:$0xff]
        %v3102 = vld [vmem:[#allocation2 + $0xb88] sm:$0xff]
        %v3103 = vld [vmem:[#allocation2 + $0xb90] sm:$0xff]
        %v3104 = vld [vmem:[#allocation2 + $0xb98] sm:$0xff]
        %v3105 = vld [vmem:[#allocation2 + $0xba0] sm:$0xff]
        %v3106 = vld [vmem:[#allocation2 + $0xba8] sm:$0xff]
        %v3107 = vld [vmem:[#allocation2 + $0xbb0] sm:$0xff]
        %v3108 = vld [vmem:[#allocation2 + $0xbb8] sm:$0xff]
        %v3109 = vld [vmem:[#allocation2 + $0xbc0] sm:$0xff]
        %v3110 = vld [vmem:[#allocation2 + $0xbc8] sm:$0xff]
        %v3111 = vld [vmem:[#allocation2 + $0xbd0] sm:$0xff]
        %v3112 = vld [vmem:[#allocation2 + $0xbd8] sm:$0xff]
        %v3113 = vld [vmem:[#allocation2 + $0xbe0] sm:$0xff]
        %v3114 = vld [vmem:[#allocation2 + $0xbe8] sm:$0xff]
        %v3115 = vld [vmem:[#allocation2 + $0xbf0] sm:$0xff]
        %v3116 = vld [vmem:[#allocation2 + $0xbf8] sm:$0xff]
        %v3117 = vld [vmem:[#allocation2 + $0xc00] sm:$0xff]
        %v3118 = vld [vmem:[#allocation2 + $0xc08] sm:$0xff]
        %v3119 = vld [vmem:[#allocation2 + $0xc10] sm:$0xff]
        %v3120 = vld [vmem:[#allocation2 + $0xc18] sm:$0xff]
        %v3121 = vld [vmem:[#allocation2 + $0xc20] sm:$0xff]
        %v3122 = vld [vmem:[#allocation2 + $0xc28] sm:$0xff]
        %v3123 = vld [vmem:[#allocation2 + $0xc30] sm:$0xff]
        %v3124 = vld [vmem:[#allocation2 + $0xc38] sm:$0xff]
        %v3125 = vld [vmem:[#allocation2 + $0xc40] sm:$0xff]
        %v3126 = vld [vmem:[#allocation2 + $0xc48] sm:$0xff]
        %v3127 = vld [vmem:[#allocation2 + $0xc50] sm:$0xff]
        %v3128 = vld [vmem:[#allocation2 + $0xc58] sm:$0xff]
        %v3129 = vld [vmem:[#allocation2 + $0xc60] sm:$0xff]
        %v3130 = vld [vmem:[#allocation2 + $0xc68] sm:$0xff]
        %v3131 = vld [vmem:[#allocation2 + $0xc70] sm:$0xff]
        %v3132 = vld [vmem:[#allocation2 + $0xc78] sm:$0xff]
        %v3133 = vld [vmem:[#allocation2 + $0xc80] sm:$0xff]
        %v3134 = vld [vmem:[#allocation2 + $0xc88] sm:$0xff]
        %v3135 = vld [vmem:[#allocation2 + $0xc90] sm:$0xff]
        %v3136 = vld [vmem:[#allocation2 + $0xc98] sm:$0xff]
        %v3137 = vld [vmem:[#allocation2 + $0xca0] sm:$0xff]
        %v3138 = vld [vmem:[#allocation2 + $0xca8] sm:$0xff]
        %v3139 = vld [vmem:[#allocation2 + $0xcb0] sm:$0xff]
        %v3140 = vld [vmem:[#allocation2 + $0xcb8] sm:$0xff]
        %v3141 = vld [vmem:[#allocation2 + $0xcc0] sm:$0xff]
        %v3142 = vld [vmem:[#allocation2 + $0xcc8] sm:$0xff]
        %v3143 = vld [vmem:[#allocation2 + $0xcd0] sm:$0xff]
        %v3144 = vld [vmem:[#allocation2 + $0xcd8] sm:$0xff]
        %v3145 = vld [vmem:[#allocation2 + $0xce0] sm:$0xff]
        %v3146 = vld [vmem:[#allocation2 + $0xce8] sm:$0xff]
        %v3147 = vld [vmem:[#allocation2 + $0xcf0] sm:$0xff]
        %v3148 = vld [vmem:[#allocation2 + $0xcf8] sm:$0xff]
        %v3149 = vld [vmem:[#allocation2 + $0xd00] sm:$0xff]
        %v3150 = vld [vmem:[#allocation2 + $0xd08] sm:$0xff]
        %v3151 = vld [vmem:[#allocation2 + $0xd10] sm:$0xff]
        %v3152 = vld [vmem:[#allocation2 + $0xd18] sm:$0xff]
        %v3153 = vld [vmem:[#allocation2 + $0xd20] sm:$0xff]
        %v3154 = vld [vmem:[#allocation2 + $0xd28] sm:$0xff]
        %v3155 = vld [vmem:[#allocation2 + $0xd30] sm:$0xff]
        %v3156 = vld [vmem:[#allocation2 + $0xd38] sm:$0xff]
        %v3157 = vld [vmem:[#allocation2 + $0xd40] sm:$0xff]
        %v3158 = vld [vmem:[#allocation2 + $0xd48] sm:$0xff]
        %v3159 = vld [vmem:[#allocation2 + $0xd50] sm:$0xff]
        %v3160 = vld [vmem:[#allocation2 + $0xd58] sm:$0xff]
        %v3161 = vld [vmem:[#allocation2 + $0xd60] sm:$0xff]
        %v3162 = vld [vmem:[#allocation2 + $0xd68] sm:$0xff]
        %v3163 = vld [vmem:[#allocation2 + $0xd70] sm:$0xff]
        %v3164 = vld [vmem:[#allocation2 + $0xd78] sm:$0xff]
        %v3165 = vld [vmem:[#allocation2 + $0xd80] sm:$0xff]
        %v3166 = vld [vmem:[#allocation2 + $0xd88] sm:$0xff]
        %v3167 = vld [vmem:[#allocation2 + $0xd90] sm:$0xff]
        %v3168 = vld [vmem:[#allocation2 + $0xd98] sm:$0xff]
        %v3169 = vld [vmem:[#allocation2 + $0xda0] sm:$0xff]
        %v3170 = vld [vmem:[#allocation2 + $0xda8] sm:$0xff]
        %v3171 = vld [vmem:[#allocation2 + $0xdb0] sm:$0xff]
        %v3172 = vld [vmem:[#allocation2 + $0xdb8] sm:$0xff]
        %v3173 = vld [vmem:[#allocation2 + $0xdc0] sm:$0xff]
        %v3174 = vld [vmem:[#allocation2 + $0xdc8] sm:$0xff]
        %v3175 = vld [vmem:[#allocation2 + $0xdd0] sm:$0xff]
        %v3176 = vld [vmem:[#allocation2 + $0xdd8] sm:$0xff]
        %v3177 = vld [vmem:[#allocation2 + $0xde0] sm:$0xff]
        %v3178 = vld [vmem:[#allocation2 + $0xde8] sm:$0xff]
        %v3179 = vld [vmem:[#allocation2 + $0xdf0] sm:$0xff]
        %v3180 = vld [vmem:[#allocation2 + $0xdf8] sm:$0xff]
        %v3181 = vld [vmem:[#allocation2 + $0xe00] sm:$0xff]
        %v3182 = vld [vmem:[#allocation2 + $0xe08] sm:$0xff]
        %v3183 = vld [vmem:[#allocation2 + $0xe10] sm:$0xff]
        %v3184 = vld [vmem:[#allocation2 + $0xe18] sm:$0xff]
        %v3185 = vld [vmem:[#allocation2 + $0xe20] sm:$0xff]
        %v3186 = vld [vmem:[#allocation2 + $0xe28] sm:$0xff]
        %v3187 = vld [vmem:[#allocation2 + $0xe30] sm:$0xff]
        %v3188 = vld [vmem:[#allocation2 + $0xe38] sm:$0xff]
        %v3189 = vld [vmem:[#allocation2 + $0xe40] sm:$0xff]
        %v3190 = vld [vmem:[#allocation2 + $0xe48] sm:$0xff]
        %v3191 = vld [vmem:[#allocation2 + $0xe50] sm:$0xff]
        %v3192 = vld [vmem:[#allocation2 + $0xe58] sm:$0xff]
        %v3193 = vld [vmem:[#allocation2 + $0xe60] sm:$0xff]
        %v3194 = vld [vmem:[#allocation2 + $0xe68] sm:$0xff]
        %v3195 = vld [vmem:[#allocation2 + $0xe70] sm:$0xff]
        %v3196 = vld [vmem:[#allocation2 + $0xe78] sm:$0xff]
        %v3197 = vld [vmem:[#allocation2 + $0xe80] sm:$0xff]
        %v3198 = vld [vmem:[#allocation2 + $0xe88] sm:$0xff]
        %v3199 = vld [vmem:[#allocation2 + $0xe90] sm:$0xff]
        %v3200 = vld [vmem:[#allocation2 + $0xe98] sm:$0xff]
        %v3201 = vld [vmem:[#allocation2 + $0xea0] sm:$0xff]
        %v3202 = vld [vmem:[#allocation2 + $0xea8] sm:$0xff]
        %v3203 = vld [vmem:[#allocation2 + $0xeb0] sm:$0xff]
        %v3204 = vld [vmem:[#allocation2 + $0xeb8] sm:$0xff]
        %v3205 = vld [vmem:[#allocation2 + $0xec0] sm:$0xff]
        %v3206 = vld [vmem:[#allocation2 + $0xec8] sm:$0xff]
        %v3207 = vld [vmem:[#allocation2 + $0xed0] sm:$0xff]
        %v3208 = vld [vmem:[#allocation2 + $0xed8] sm:$0xff]
        %v3209 = vld [vmem:[#allocation2 + $0xee0] sm:$0xff]
        %v3210 = vld [vmem:[#allocation2 + $0xee8] sm:$0xff]
        %v3211 = vld [vmem:[#allocation2 + $0xef0] sm:$0xff]
        %v3212 = vld [vmem:[#allocation2 + $0xef8] sm:$0xff]
        %v3213 = vld [vmem:[#allocation2 + $0xf00] sm:$0xff]
        %v3214 = vld [vmem:[#allocation2 + $0xf08] sm:$0xff]
        %v3215 = vld [vmem:[#allocation2 + $0xf10] sm:$0xff]
        %v3216 = vld [vmem:[#allocation2 + $0xf18] sm:$0xff]
        %v3217 = vld [vmem:[#allocation2 + $0xf20] sm:$0xff]
        %v3218 = vld [vmem:[#allocation2 + $0xf28] sm:$0xff]
        %v3219 = vld [vmem:[#allocation2 + $0xf30] sm:$0xff]
        %v3220 = vld [vmem:[#allocation2 + $0xf38] sm:$0xff]
        %v3221 = vld [vmem:[#allocation2 + $0xf40] sm:$0xff]
        %v3222 = vld [vmem:[#allocation2 + $0xf48] sm:$0xff]
        %v3223 = vld [vmem:[#allocation2 + $0xf50] sm:$0xff]
        %v3224 = vld [vmem:[#allocation2 + $0xf58] sm:$0xff]
        %v3225 = vld [vmem:[#allocation2 + $0xf60] sm:$0xff]
        %v3226 = vld [vmem:[#allocation2 + $0xf68] sm:$0xff]
        %v3227 = vld [vmem:[#allocation2 + $0xf70] sm:$0xff]
        %v3228 = vld [vmem:[#allocation2 + $0xf78] sm:$0xff]
        %v3229 = vld [vmem:[#allocation2 + $0xf80] sm:$0xff]
        %v3230 = vld [vmem:[#allocation2 + $0xf88] sm:$0xff]
        %v3231 = vld [vmem:[#allocation2 + $0xf90] sm:$0xff]
        %v3232 = vld [vmem:[#allocation2 + $0xf98] sm:$0xff]
        %v3233 = vld [vmem:[#allocation2 + $0xfa0] sm:$0xff]
        %v3234 = vld [vmem:[#allocation2 + $0xfa8] sm:$0xff]
        %v3235 = vld [vmem:[#allocation2 + $0xfb0] sm:$0xff]
        %v3236 = vld [vmem:[#allocation2 + $0xfb8] sm:$0xff]
        %v3237 = vld [vmem:[#allocation2 + $0xfc0] sm:$0xff]
        %v3238 = vld [vmem:[#allocation2 + $0xfc8] sm:$0xff]
        %v3239 = vld [vmem:[#allocation2 + $0xfd0] sm:$0xff]
        %v3240 = vld [vmem:[#allocation2 + $0xfd8] sm:$0xff]
        %v3241 = vld [vmem:[#allocation2 + $0xfe0] sm:$0xff]
        %v3242 = vld [vmem:[#allocation2 + $0xfe8] sm:$0xff]
        %v3243 = vld [vmem:[#allocation2 + $0xff0] sm:$0xff]
        %v3244 = vld [vmem:[#allocation2 + $0xff8] sm:$0xff]
        %v3245 = vld [vmem:[#allocation2 + $0x1000] sm:$0xff]
        %v3246 = vld [vmem:[#allocation2 + $0x1008] sm:$0xff]
        %v3247 = vld [vmem:[#allocation2 + $0x1010] sm:$0xff]
        %v3248 = vld [vmem:[#allocation2 + $0x1018] sm:$0xff]
        %v3249 = vld [vmem:[#allocation2 + $0x1020] sm:$0xff]
        %v3250 = vld [vmem:[#allocation2 + $0x1028] sm:$0xff]
        %v3251 = vld [vmem:[#allocation2 + $0x1030] sm:$0xff]
        %v3252 = vld [vmem:[#allocation2 + $0x1038] sm:$0xff]
        %v3253 = vld [vmem:[#allocation2 + $0x1040] sm:$0xff]
        %v3254 = vld [vmem:[#allocation2 + $0x1048] sm:$0xff]
        %v3255 = vld [vmem:[#allocation2 + $0x1050] sm:$0xff]
        %v3256 = vld [vmem:[#allocation2 + $0x1058] sm:$0xff]
        %v3257 = vld [vmem:[#allocation2 + $0x1060] sm:$0xff]
        %v3258 = vld [vmem:[#allocation2 + $0x1068] sm:$0xff]
        %v3259 = vld [vmem:[#allocation2 + $0x1070] sm:$0xff]
        %v3260 = vld [vmem:[#allocation2 + $0x1078] sm:$0xff]
        %v3261 = vld [vmem:[#allocation2 + $0x1080] sm:$0xff]
        %v3262 = vld [vmem:[#allocation2 + $0x1088] sm:$0xff]
        %v3263 = vld [vmem:[#allocation2 + $0x1090] sm:$0xff]
        %v3264 = vld [vmem:[#allocation2 + $0x1098] sm:$0xff]
        %v3265 = vld [vmem:[#allocation2 + $0x10a0] sm:$0xff]
        %v3266 = vld [vmem:[#allocation2 + $0x10a8] sm:$0xff]
        %v3267 = vld [vmem:[#allocation2 + $0x10b0] sm:$0xff]
        %v3268 = vld [vmem:[#allocation2 + $0x10b8] sm:$0xff]
        %v3269 = vld [vmem:[#allocation2 + $0x10c0] sm:$0xff]
        %v3270 = vld [vmem:[#allocation2 + $0x10c8] sm:$0xff]
        %v3271 = vld [vmem:[#allocation2 + $0x10d0] sm:$0xff]
        %v3272 = vld [vmem:[#allocation2 + $0x10d8] sm:$0xff]
        %v3273 = vld [vmem:[#allocation2 + $0x10e0] sm:$0xff]
        %v3274 = vld [vmem:[#allocation2 + $0x10e8] sm:$0xff]
        %v3275 = vld [vmem:[#allocation2 + $0x10f0] sm:$0xff]
        %v3276 = vld [vmem:[#allocation2 + $0x10f8] sm:$0xff]
        %v3277 = vld [vmem:[#allocation2 + $0x1100] sm:$0xff]
        %v3278 = vld [vmem:[#allocation2 + $0x1108] sm:$0xff]
        %v3279 = vld [vmem:[#allocation2 + $0x1110] sm:$0xff]
        %v3280 = vld [vmem:[#allocation2 + $0x1118] sm:$0xff]
        %v3281 = vld [vmem:[#allocation2 + $0x1120] sm:$0xff]
        %v3282 = vld [vmem:[#allocation2 + $0x1128] sm:$0xff]
        %v3283 = vld [vmem:[#allocation2 + $0x1130] sm:$0xff]
        %v3284 = vld [vmem:[#allocation2 + $0x1138] sm:$0xff]
        %v3285 = vld [vmem:[#allocation2 + $0x1140] sm:$0xff]
        %v3286 = vld [vmem:[#allocation2 + $0x1148] sm:$0xff]
        %v3287 = vld [vmem:[#allocation2 + $0x1150] sm:$0xff]
        %v3288 = vld [vmem:[#allocation2 + $0x1158] sm:$0xff]
        %v3289 = vld [vmem:[#allocation2 + $0x1160] sm:$0xff]
        %v3290 = vld [vmem:[#allocation2 + $0x1168] sm:$0xff]
        %v3291 = vld [vmem:[#allocation2 + $0x1170] sm:$0xff]
        %v3292 = vld [vmem:[#allocation2 + $0x1178] sm:$0xff]
        %v3293 = vld [vmem:[#allocation2 + $0x1180] sm:$0xff]
        %v3294 = vld [vmem:[#allocation2 + $0x1188] sm:$0xff]
        %v3295 = vld [vmem:[#allocation2 + $0x1190] sm:$0xff]
        %v3296 = vld [vmem:[#allocation2 + $0x1198] sm:$0xff]
        %v3297 = vld [vmem:[#allocation2 + $0x11a0] sm:$0xff]
        %v3298 = vld [vmem:[#allocation2 + $0x11a8] sm:$0xff]
        %v3299 = vld [vmem:[#allocation2 + $0x11b0] sm:$0xff]
        %v3300 = vld [vmem:[#allocation2 + $0x11b8] sm:$0xff]
        %v3301 = vld [vmem:[#allocation2 + $0x11c0] sm:$0xff]
        %v3302 = vld [vmem:[#allocation2 + $0x11c8] sm:$0xff]
        %v3303 = vld [vmem:[#allocation2 + $0x11d0] sm:$0xff]
        %v3304 = vld [vmem:[#allocation2 + $0x11d8] sm:$0xff]
        %v3305 = vld [vmem:[#allocation2 + $0x11e0] sm:$0xff]
        %v3306 = vld [vmem:[#allocation2 + $0x11e8] sm:$0xff]
        %v3307 = vld [vmem:[#allocation2 + $0x11f0] sm:$0xff]
        %v3308 = vld [vmem:[#allocation2 + $0x11f8] sm:$0xff]
        %v3309 = vld [vmem:[#allocation2 + $0x1200] sm:$0xff]
        %v3310 = vld [vmem:[#allocation2 + $0x1208] sm:$0xff]
        %v3311 = vld [vmem:[#allocation2 + $0x1210] sm:$0xff]
        %v3312 = vld [vmem:[#allocation2 + $0x1218] sm:$0xff]
        %v3313 = vld [vmem:[#allocation2 + $0x1220] sm:$0xff]
        %v3314 = vld [vmem:[#allocation2 + $0x1228] sm:$0xff]
        %v3315 = vld [vmem:[#allocation2 + $0x1230] sm:$0xff]
        %v3316 = vld [vmem:[#allocation2 + $0x1238] sm:$0xff]
        %v3317 = vld [vmem:[#allocation2 + $0x1240] sm:$0xff]
        %v3318 = vld [vmem:[#allocation2 + $0x1248] sm:$0xff]
        %v3319 = vld [vmem:[#allocation2 + $0x1250] sm:$0xff]
        %v3320 = vld [vmem:[#allocation2 + $0x1258] sm:$0xff]
        %v3321 = vld [vmem:[#allocation2 + $0x1260] sm:$0xff]
        %v3322 = vld [vmem:[#allocation2 + $0x1268] sm:$0xff]
        %v3323 = vld [vmem:[#allocation2 + $0x1270] sm:$0xff]
        %v3324 = vld [vmem:[#allocation2 + $0x1278] sm:$0xff]
        %v3325 = vld [vmem:[#allocation2 + $0x1280] sm:$0xff]
        %v3326 = vld [vmem:[#allocation2 + $0x1288] sm:$0xff]
        %v3327 = vld [vmem:[#allocation2 + $0x1290] sm:$0xff]
        %v3328 = vld [vmem:[#allocation2 + $0x1298] sm:$0xff]
        %v3329 = vld [vmem:[#allocation2 + $0x12a0] sm:$0xff]
        %v3330 = vld [vmem:[#allocation2 + $0x12a8] sm:$0xff]
        %v3331 = vld [vmem:[#allocation2 + $0x12b0] sm:$0xff]
        %v3332 = vld [vmem:[#allocation2 + $0x12b8] sm:$0xff]
        %v3333 = vld [vmem:[#allocation2 + $0x12c0] sm:$0xff]
        %v3334 = vld [vmem:[#allocation2 + $0x12c8] sm:$0xff]
        %v3335 = vld [vmem:[#allocation2 + $0x12d0] sm:$0xff]
        %v3336 = vld [vmem:[#allocation2 + $0x12d8] sm:$0xff]
        %v3337 = vld [vmem:[#allocation2 + $0x12e0] sm:$0xff]
        %v3338 = vld [vmem:[#allocation2 + $0x12e8] sm:$0xff]
        %v3339 = vld [vmem:[#allocation2 + $0x12f0] sm:$0xff]
        %v3340 = vld [vmem:[#allocation2 + $0x12f8] sm:$0xff]
        %v3341 = vld [vmem:[#allocation2 + $0x1300] sm:$0xff]
        %v3342 = vld [vmem:[#allocation2 + $0x1308] sm:$0xff]
        %v3343 = vld [vmem:[#allocation2 + $0x1310] sm:$0xff]
        %v3344 = vld [vmem:[#allocation2 + $0x1318] sm:$0xff]
        %v3345 = vld [vmem:[#allocation2 + $0x1320] sm:$0xff]
        %v3346 = vld [vmem:[#allocation2 + $0x1328] sm:$0xff]
        %v3347 = vld [vmem:[#allocation2 + $0x1330] sm:$0xff]
        %v3348 = vld [vmem:[#allocation2 + $0x1338] sm:$0xff]
        %v3349 = vld [vmem:[#allocation2 + $0x1340] sm:$0xff]
        %v3350 = vld [vmem:[#allocation2 + $0x1348] sm:$0xff]
        %v3351 = vld [vmem:[#allocation2 + $0x1350] sm:$0xff]
        %v3352 = vld [vmem:[#allocation2 + $0x1358] sm:$0xff]
        %v3353 = vld [vmem:[#allocation2 + $0x1360] sm:$0xff]
        %v3354 = vld [vmem:[#allocation2 + $0x1368] sm:$0xff]
        %v3355 = vld [vmem:[#allocation2 + $0x1370] sm:$0xff]
        %v3356 = vld [vmem:[#allocation2 + $0x1378] sm:$0xff]
        %v3357 = vld [vmem:[#allocation2 + $0x1380] sm:$0xff]
        %v3358 = vld [vmem:[#allocation2 + $0x1388] sm:$0xff]
        %v3359 = vld [vmem:[#allocation2 + $0x1390] sm:$0xff]
        %v3360 = vld [vmem:[#allocation2 + $0x1398] sm:$0xff]
        %v3361 = vld [vmem:[#allocation2 + $0x13a0] sm:$0xff]
        %v3362 = vld [vmem:[#allocation2 + $0x13a8] sm:$0xff]
        %v3363 = vld [vmem:[#allocation2 + $0x13b0] sm:$0xff]
        %v3364 = vld [vmem:[#allocation2 + $0x13b8] sm:$0xff]
        %v3365 = vld [vmem:[#allocation2 + $0x13c0] sm:$0xff]
        %v3366 = vld [vmem:[#allocation2 + $0x13c8] sm:$0xff]
        %v3367 = vld [vmem:[#allocation2 + $0x13d0] sm:$0xff]
        %v3368 = vld [vmem:[#allocation2 + $0x13d8] sm:$0xff]
        %v3369 = vld [vmem:[#allocation2 + $0x13e0] sm:$0xff]
        %v3370 = vld [vmem:[#allocation2 + $0x13e8] sm:$0xff]
        %v3371 = vld [vmem:[#allocation2 + $0x13f0] sm:$0xff]
        %v3372 = vld [vmem:[#allocation2 + $0x13f8] sm:$0xff]
        %v3373 = vld [vmem:[#allocation2 + $0x1400] sm:$0xff]
        %v3374 = vld [vmem:[#allocation2 + $0x1408] sm:$0xff]
        %v3375 = vld [vmem:[#allocation2 + $0x1410] sm:$0xff]
        %v3376 = vld [vmem:[#allocation2 + $0x1418] sm:$0xff]
        %v3377 = vld [vmem:[#allocation2 + $0x1420] sm:$0xff]
        %v3378 = vld [vmem:[#allocation2 + $0x1428] sm:$0xff]
        %v3379 = vld [vmem:[#allocation2 + $0x1430] sm:$0xff]
        %v3380 = vld [vmem:[#allocation2 + $0x1438] sm:$0xff]
        %v3381 = vld [vmem:[#allocation2 + $0x1440] sm:$0xff]
        %v3382 = vld [vmem:[#allocation2 + $0x1448] sm:$0xff]
        %v3383 = vld [vmem:[#allocation2 + $0x1450] sm:$0xff]
        %v3384 = vld [vmem:[#allocation2 + $0x1458] sm:$0xff]
        %v3385 = vld [vmem:[#allocation2 + $0x1460] sm:$0xff]
        %v3386 = vld [vmem:[#allocation2 + $0x1468] sm:$0xff]
        %v3387 = vld [vmem:[#allocation2 + $0x1470] sm:$0xff]
        %v3388 = vld [vmem:[#allocation2 + $0x1478] sm:$0xff]
        %v3389 = vld [vmem:[#allocation2 + $0x1480] sm:$0xff]
        %v3390 = vld [vmem:[#allocation2 + $0x1488] sm:$0xff]
        %v3391 = vld [vmem:[#allocation2 + $0x1490] sm:$0xff]
        %v3392 = vld [vmem:[#allocation2 + $0x1498] sm:$0xff]
        %v3393 = vld [vmem:[#allocation2 + $0x14a0] sm:$0xff]
        %v3394 = vld [vmem:[#allocation2 + $0x14a8] sm:$0xff]
        %v3395 = vld [vmem:[#allocation2 + $0x14b0] sm:$0xff]
        %v3396 = vld [vmem:[#allocation2 + $0x14b8] sm:$0xff]
        %v3397 = vld [vmem:[#allocation2 + $0x14c0] sm:$0xff]
        %v3398 = vld [vmem:[#allocation2 + $0x14c8] sm:$0xff]
        %v3399 = vld [vmem:[#allocation2 + $0x14d0] sm:$0xff]
        %v3400 = vld [vmem:[#allocation2 + $0x14d8] sm:$0xff]
        %v3401 = vld [vmem:[#allocation2 + $0x14e0] sm:$0xff]
        %v3402 = vld [vmem:[#allocation2 + $0x14e8] sm:$0xff]
        %v3403 = vld [vmem:[#allocation2 + $0x14f0] sm:$0xff]
        %v3404 = vld [vmem:[#allocation2 + $0x14f8] sm:$0xff]
        %v3405 = vld [vmem:[#allocation2 + $0x1500] sm:$0xff]
        %v3406 = vld [vmem:[#allocation2 + $0x1508] sm:$0xff]
        %v3407 = vld [vmem:[#allocation2 + $0x1510] sm:$0xff]
        %v3408 = vld [vmem:[#allocation2 + $0x1518] sm:$0xff]
        %v3409 = vld [vmem:[#allocation2 + $0x1520] sm:$0xff]
        %v3410 = vld [vmem:[#allocation2 + $0x1528] sm:$0xff]
        %v3411 = vld [vmem:[#allocation2 + $0x1530] sm:$0xff]
        %v3412 = vld [vmem:[#allocation2 + $0x1538] sm:$0xff]
        %v3413 = vld [vmem:[#allocation2 + $0x1540] sm:$0xff]
        %v3414 = vld [vmem:[#allocation2 + $0x1548] sm:$0xff]
        %v3415 = vld [vmem:[#allocation2 + $0x1550] sm:$0xff]
        %v3416 = vld [vmem:[#allocation2 + $0x1558] sm:$0xff]
        %v3417 = vld [vmem:[#allocation2 + $0x1560] sm:$0xff]
        %v3418 = vld [vmem:[#allocation2 + $0x1568] sm:$0xff]
        %v3419 = vld [vmem:[#allocation2 + $0x1570] sm:$0xff]
        %v3420 = vld [vmem:[#allocation2 + $0x1578] sm:$0xff]
        %v3421 = vld [vmem:[#allocation2 + $0x1580] sm:$0xff]
        %v3422 = vld [vmem:[#allocation2 + $0x1588] sm:$0xff]
        %v3423 = vld [vmem:[#allocation2 + $0x1590] sm:$0xff]
        %v3424 = vld [vmem:[#allocation2 + $0x1598] sm:$0xff]
        %v3425 = vld [vmem:[#allocation2 + $0x15a0] sm:$0xff]
        %v3426 = vld [vmem:[#allocation2 + $0x15a8] sm:$0xff]
        %v3427 = vld [vmem:[#allocation2 + $0x15b0] sm:$0xff]
        %v3428 = vld [vmem:[#allocation2 + $0x15b8] sm:$0xff]
        %v3429 = vld [vmem:[#allocation2 + $0x15c0] sm:$0xff]
        %v3430 = vld [vmem:[#allocation2 + $0x15c8] sm:$0xff]
        %v3431 = vld [vmem:[#allocation2 + $0x15d0] sm:$0xff]
        %v3432 = vld [vmem:[#allocation2 + $0x15d8] sm:$0xff]
        %v3433 = vld [vmem:[#allocation2 + $0x15e0] sm:$0xff]
        %v3434 = vld [vmem:[#allocation2 + $0x15e8] sm:$0xff]
        %v3435 = vld [vmem:[#allocation2 + $0x15f0] sm:$0xff]
        %v3436 = vld [vmem:[#allocation2 + $0x15f8] sm:$0xff]
        %v3437 = vld [vmem:[#allocation2 + $0x1600] sm:$0xff]
        %v3438 = vld [vmem:[#allocation2 + $0x1608] sm:$0xff]
        %v3439 = vld [vmem:[#allocation2 + $0x1610] sm:$0xff]
        %v3440 = vld [vmem:[#allocation2 + $0x1618] sm:$0xff]
        %v3441 = vld [vmem:[#allocation2 + $0x1620] sm:$0xff]
        %v3442 = vld [vmem:[#allocation2 + $0x1628] sm:$0xff]
        %v3443 = vld [vmem:[#allocation2 + $0x1630] sm:$0xff]
        %v3444 = vld [vmem:[#allocation2 + $0x1638] sm:$0xff]
        %v3445 = vld [vmem:[#allocation2 + $0x1640] sm:$0xff]
        %v3446 = vld [vmem:[#allocation2 + $0x1648] sm:$0xff]
        %v3447 = vld [vmem:[#allocation2 + $0x1650] sm:$0xff]
        %v3448 = vld [vmem:[#allocation2 + $0x1658] sm:$0xff]
        %v3449 = vld [vmem:[#allocation2 + $0x1660] sm:$0xff]
        %v3450 = vld [vmem:[#allocation2 + $0x1668] sm:$0xff]
        %v3451 = vld [vmem:[#allocation2 + $0x1670] sm:$0xff]
        %v3452 = vld [vmem:[#allocation2 + $0x1678] sm:$0xff]
        %v3453 = vld [vmem:[#allocation2 + $0x1680] sm:$0xff]
        %v3454 = vld [vmem:[#allocation2 + $0x1688] sm:$0xff]
        %v3455 = vld [vmem:[#allocation2 + $0x1690] sm:$0xff]
        %v3456 = vld [vmem:[#allocation2 + $0x1698] sm:$0xff]
        %v3457 = vld [vmem:[#allocation2 + $0x16a0] sm:$0xff]
        %v3458 = vld [vmem:[#allocation2 + $0x16a8] sm:$0xff]
        %v3459 = vld [vmem:[#allocation2 + $0x16b0] sm:$0xff]
        %v3460 = vld [vmem:[#allocation2 + $0x16b8] sm:$0xff]
        %v3461 = vld [vmem:[#allocation2 + $0x16c0] sm:$0xff]
        %v3462 = vld [vmem:[#allocation2 + $0x16c8] sm:$0xff]
        %v3463 = vld [vmem:[#allocation2 + $0x16d0] sm:$0xff]
        %v3464 = vld [vmem:[#allocation2 + $0x16d8] sm:$0xff]
        %v3465 = vld [vmem:[#allocation2 + $0x16e0] sm:$0xff]
        %v3466 = vld [vmem:[#allocation2 + $0x16e8] sm:$0xff]
        %v3467 = vld [vmem:[#allocation2 + $0x16f0] sm:$0xff]
        %v3468 = vld [vmem:[#allocation2 + $0x16f8] sm:$0xff]
        %v3469 = vld [vmem:[#allocation2 + $0x1700] sm:$0xff]
        %v3470 = vld [vmem:[#allocation2 + $0x1708] sm:$0xff]
        %v3471 = vld [vmem:[#allocation2 + $0x1710] sm:$0xff]
        %v3472 = vld [vmem:[#allocation2 + $0x1718] sm:$0xff]
        %v3473 = vld [vmem:[#allocation2 + $0x1720] sm:$0xff]
        %v3474 = vld [vmem:[#allocation2 + $0x1728] sm:$0xff]
        %v3475 = vld [vmem:[#allocation2 + $0x1730] sm:$0xff]
        %v3476 = vld [vmem:[#allocation2 + $0x1738] sm:$0xff]
        %v3477 = vld [vmem:[#allocation2 + $0x1740] sm:$0xff]
        %v3478 = vld [vmem:[#allocation2 + $0x1748] sm:$0xff]
        %v3479 = vld [vmem:[#allocation2 + $0x1750] sm:$0xff]
        %v3480 = vld [vmem:[#allocation2 + $0x1758] sm:$0xff]
        %v3481 = vld [vmem:[#allocation2 + $0x1760] sm:$0xff]
        %v3482 = vld [vmem:[#allocation2 + $0x1768] sm:$0xff]
        %v3483 = vld [vmem:[#allocation2 + $0x1770] sm:$0xff]
        %v3484 = vld [vmem:[#allocation2 + $0x1778] sm:$0xff]
        %v3485 = vld [vmem:[#allocation2 + $0x1780] sm:$0xff]
        %v3486 = vld [vmem:[#allocation2 + $0x1788] sm:$0xff]
        %v3487 = vld [vmem:[#allocation2 + $0x1790] sm:$0xff]
        %v3488 = vld [vmem:[#allocation2 + $0x1798] sm:$0xff]
        %v3489 = vld [vmem:[#allocation2 + $0x17a0] sm:$0xff]
        %v3490 = vld [vmem:[#allocation2 + $0x17a8] sm:$0xff]
        %v3491 = vld [vmem:[#allocation2 + $0x17b0] sm:$0xff]
        %v3492 = vld [vmem:[#allocation2 + $0x17b8] sm:$0xff]
        %v3493 = vld [vmem:[#allocation2 + $0x17c0] sm:$0xff]
        %v3494 = vld [vmem:[#allocation2 + $0x17c8] sm:$0xff]
        %v3495 = vld [vmem:[#allocation2 + $0x17d0] sm:$0xff]
        %v3496 = vld [vmem:[#allocation2 + $0x17d8] sm:$0xff]
        %v3497 = vld [vmem:[#allocation2 + $0x17e0] sm:$0xff]
        %v3498 = vld [vmem:[#allocation2 + $0x17e8] sm:$0xff]
        %v3499 = vld [vmem:[#allocation2 + $0x17f0] sm:$0xff]
        %v3500 = vld [vmem:[#allocation2 + $0x17f8] sm:$0xff]
        %v3501 = vld [vmem:[#allocation2 + $0x1800] sm:$0xff]
        %v3502 = vld [vmem:[#allocation2 + $0x1808] sm:$0xff]
        %v3503 = vld [vmem:[#allocation2 + $0x1810] sm:$0xff]
        %v3504 = vld [vmem:[#allocation2 + $0x1818] sm:$0xff]
        %v3505 = vld [vmem:[#allocation2 + $0x1820] sm:$0xff]
        %v3506 = vld [vmem:[#allocation2 + $0x1828] sm:$0xff]
        %v3507 = vld [vmem:[#allocation2 + $0x1830] sm:$0xff]
        %v3508 = vld [vmem:[#allocation2 + $0x1838] sm:$0xff]
        %v3509 = vld [vmem:[#allocation2 + $0x1840] sm:$0xff]
        %v3510 = vld [vmem:[#allocation2 + $0x1848] sm:$0xff]
        %v3511 = vld [vmem:[#allocation2 + $0x1850] sm:$0xff]
        %v3512 = vld [vmem:[#allocation2 + $0x1858] sm:$0xff]
        %v3513 = vld [vmem:[#allocation2 + $0x1860] sm:$0xff]
        %v3514 = vld [vmem:[#allocation2 + $0x1868] sm:$0xff]
        %v3515 = vld [vmem:[#allocation2 + $0x1870] sm:$0xff]
        %v3516 = vld [vmem:[#allocation2 + $0x1878] sm:$0xff]
        %v3517 = vld [vmem:[#allocation2 + $0x1880] sm:$0xff]
        %v3518 = vld [vmem:[#allocation2 + $0x1888] sm:$0xff]
        %v3519 = vld [vmem:[#allocation2 + $0x1890] sm:$0xff]
        %v3520 = vld [vmem:[#allocation2 + $0x1898] sm:$0xff]
        %v3521 = vld [vmem:[#allocation2 + $0x18a0] sm:$0xff]
        %v3522 = vld [vmem:[#allocation2 + $0x18a8] sm:$0xff]
        %v3523 = vld [vmem:[#allocation2 + $0x18b0] sm:$0xff]
        %v3524 = vld [vmem:[#allocation2 + $0x18b8] sm:$0xff]
        %v3525 = vld [vmem:[#allocation2 + $0x18c0] sm:$0xff]
        %v3526 = vld [vmem:[#allocation2 + $0x18c8] sm:$0xff]
        %v3527 = vld [vmem:[#allocation2 + $0x18d0] sm:$0xff]
        %v3528 = vld [vmem:[#allocation2 + $0x18d8] sm:$0xff]
        %v3529 = vld [vmem:[#allocation2 + $0x18e0] sm:$0xff]
        %v3530 = vld [vmem:[#allocation2 + $0x18e8] sm:$0xff]
        %v3531 = vld [vmem:[#allocation2 + $0x18f0] sm:$0xff]
        %v3532 = vld [vmem:[#allocation2 + $0x18f8] sm:$0xff]
        %v3533 = vld [vmem:[#allocation2 + $0x1900] sm:$0xff]
        %v3534 = vld [vmem:[#allocation2 + $0x1908] sm:$0xff]
        %v3535 = vld [vmem:[#allocation2 + $0x1910] sm:$0xff]
        %v3536 = vld [vmem:[#allocation2 + $0x1918] sm:$0xff]
        %v3537 = vld [vmem:[#allocation2 + $0x1920] sm:$0xff]
        %v3538 = vld [vmem:[#allocation2 + $0x1928] sm:$0xff]
        %v3539 = vld [vmem:[#allocation2 + $0x1930] sm:$0xff]
        %v3540 = vld [vmem:[#allocation2 + $0x1938] sm:$0xff]
        %v3541 = vld [vmem:[#allocation2 + $0x1940] sm:$0xff]
        %v3542 = vld [vmem:[#allocation2 + $0x1948] sm:$0xff]
        %v3543 = vld [vmem:[#allocation2 + $0x1950] sm:$0xff]
        %v3544 = vld [vmem:[#allocation2 + $0x1958] sm:$0xff]
        %v3545 = vld [vmem:[#allocation2 + $0x1960] sm:$0xff]
        %v3546 = vld [vmem:[#allocation2 + $0x1968] sm:$0xff]
        %v3547 = vld [vmem:[#allocation2 + $0x1970] sm:$0xff]
        %v3548 = vld [vmem:[#allocation2 + $0x1978] sm:$0xff]
        %v3549 = vld [vmem:[#allocation2 + $0x1980] sm:$0xff]
        %v3550 = vld [vmem:[#allocation2 + $0x1988] sm:$0xff]
        %v3551 = vld [vmem:[#allocation2 + $0x1990] sm:$0xff]
        %v3552 = vld [vmem:[#allocation2 + $0x1998] sm:$0xff]
        %v3553 = vld [vmem:[#allocation2 + $0x19a0] sm:$0xff]
        %v3554 = vld [vmem:[#allocation2 + $0x19a8] sm:$0xff]
        %v3555 = vld [vmem:[#allocation2 + $0x19b0] sm:$0xff]
        %v3556 = vld [vmem:[#allocation2 + $0x19b8] sm:$0xff]
        %v3557 = vld [vmem:[#allocation2 + $0x19c0] sm:$0xff]
        %v3558 = vld [vmem:[#allocation2 + $0x19c8] sm:$0xff]
        %v3559 = vld [vmem:[#allocation2 + $0x19d0] sm:$0xff]
        %v3560 = vld [vmem:[#allocation2 + $0x19d8] sm:$0xff]
        %v3561 = vld [vmem:[#allocation2 + $0x19e0] sm:$0xff]
        %v3562 = vld [vmem:[#allocation2 + $0x19e8] sm:$0xff]
        %v3563 = vld [vmem:[#allocation2 + $0x19f0] sm:$0xff]
        %v3564 = vld [vmem:[#allocation2 + $0x19f8] sm:$0xff]
        %v3565 = vld [vmem:[#allocation2 + $0x1a00] sm:$0xff]
        %v3566 = vld [vmem:[#allocation2 + $0x1a08] sm:$0xff]
        %v3567 = vld [vmem:[#allocation2 + $0x1a10] sm:$0xff]
        %v3568 = vld [vmem:[#allocation2 + $0x1a18] sm:$0xff]
        %v3569 = vld [vmem:[#allocation2 + $0x1a20] sm:$0xff]
        %v3570 = vld [vmem:[#allocation2 + $0x1a28] sm:$0xff]
        %v3571 = vld [vmem:[#allocation2 + $0x1a30] sm:$0xff]
        %v3572 = vld [vmem:[#allocation2 + $0x1a38] sm:$0xff]
        %v3573 = vld [vmem:[#allocation2 + $0x1a40] sm:$0xff]
        %v3574 = vld [vmem:[#allocation2 + $0x1a48] sm:$0xff]
        %v3575 = vld [vmem:[#allocation2 + $0x1a50] sm:$0xff]
        %v3576 = vld [vmem:[#allocation2 + $0x1a58] sm:$0xff]
        %v3577 = vld [vmem:[#allocation2 + $0x1a60] sm:$0xff]
        %v3578 = vld [vmem:[#allocation2 + $0x1a68] sm:$0xff]
        %v3579 = vld [vmem:[#allocation2 + $0x1a70] sm:$0xff]
        %v3580 = vld [vmem:[#allocation2 + $0x1a78] sm:$0xff]
        %v3581 = vld [vmem:[#allocation2 + $0x1a80] sm:$0xff]
        %v3582 = vld [vmem:[#allocation2 + $0x1a88] sm:$0xff]
        %v3583 = vld [vmem:[#allocation2 + $0x1a90] sm:$0xff]
        %v3584 = vld [vmem:[#allocation2 + $0x1a98] sm:$0xff]
        %v3585 = vld [vmem:[#allocation2 + $0x1aa0] sm:$0xff]
        %v3586 = vld [vmem:[#allocation2 + $0x1aa8] sm:$0xff]
        %v3587 = vld [vmem:[#allocation2 + $0x1ab0] sm:$0xff]
        %v3588 = vld [vmem:[#allocation2 + $0x1ab8] sm:$0xff]
        %v3589 = vld [vmem:[#allocation2 + $0x1ac0] sm:$0xff]
        %v3590 = vld [vmem:[#allocation2 + $0x1ac8] sm:$0xff]
        %v3591 = vld [vmem:[#allocation2 + $0x1ad0] sm:$0xff]
        %v3592 = vld [vmem:[#allocation2 + $0x1ad8] sm:$0xff]
        %v3593 = vld [vmem:[#allocation2 + $0x1ae0] sm:$0xff]
        %v3594 = vld [vmem:[#allocation2 + $0x1ae8] sm:$0xff]
        %v3595 = vld [vmem:[#allocation2 + $0x1af0] sm:$0xff]
        %v3596 = vld [vmem:[#allocation2 + $0x1af8] sm:$0xff]
        %v3597 = vld [vmem:[#allocation2 + $0x1b00] sm:$0xff]
        %v3598 = vld [vmem:[#allocation2 + $0x1b08] sm:$0xff]
        %v3599 = vld [vmem:[#allocation2 + $0x1b10] sm:$0xff]
        %v3600 = vld [vmem:[#allocation2 + $0x1b18] sm:$0xff]
        %v3601 = vld [vmem:[#allocation2 + $0x1b20] sm:$0xff]
        %v3602 = vld [vmem:[#allocation2 + $0x1b28] sm:$0xff]
        %v3603 = vld [vmem:[#allocation2 + $0x1b30] sm:$0xff]
        %v3604 = vld [vmem:[#allocation2 + $0x1b38] sm:$0xff]
        %v3605 = vld [vmem:[#allocation2 + $0x1b40] sm:$0xff]
        %v3606 = vld [vmem:[#allocation2 + $0x1b48] sm:$0xff]
        %v3607 = vld [vmem:[#allocation2 + $0x1b50] sm:$0xff]
        %v3608 = vld [vmem:[#allocation2 + $0x1b58] sm:$0xff]
        %v3609 = vld [vmem:[#allocation2 + $0x1b60] sm:$0xff]
        %v3610 = vld [vmem:[#allocation2 + $0x1b68] sm:$0xff]
        %v3611 = vld [vmem:[#allocation2 + $0x1b70] sm:$0xff]
        %v3612 = vld [vmem:[#allocation2 + $0x1b78] sm:$0xff]
        %v3613 = vld [vmem:[#allocation2 + $0x1b80] sm:$0xff]
        %v3614 = vld [vmem:[#allocation2 + $0x1b88] sm:$0xff]
        %v3615 = vld [vmem:[#allocation2 + $0x1b90] sm:$0xff]
        %v3616 = vld [vmem:[#allocation2 + $0x1b98] sm:$0xff]
        %v3617 = vld [vmem:[#allocation2 + $0x1ba0] sm:$0xff]
        %v3618 = vld [vmem:[#allocation2 + $0x1ba8] sm:$0xff]
        %v3619 = vld [vmem:[#allocation2 + $0x1bb0] sm:$0xff]
        %v3620 = vld [vmem:[#allocation2 + $0x1bb8] sm:$0xff]
        %v3621 = vld [vmem:[#allocation2 + $0x1bc0] sm:$0xff]
        %v3622 = vld [vmem:[#allocation2 + $0x1bc8] sm:$0xff]
        %v3623 = vld [vmem:[#allocation2 + $0x1bd0] sm:$0xff]
        %v3624 = vld [vmem:[#allocation2 + $0x1bd8] sm:$0xff]
        %v3625 = vld [vmem:[#allocation2 + $0x1be0] sm:$0xff]
        %v3626 = vld [vmem:[#allocation2 + $0x1be8] sm:$0xff]
        %v3627 = vld [vmem:[#allocation2 + $0x1bf0] sm:$0xff]
        %v3628 = vld [vmem:[#allocation2 + $0x1bf8] sm:$0xff]
        %v3629 = vld [vmem:[#allocation2 + $0x1c00] sm:$0xff]
        %v3630 = vld [vmem:[#allocation2 + $0x1c08] sm:$0xff]
        %v3631 = vld [vmem:[#allocation2 + $0x1c10] sm:$0xff]
        %v3632 = vld [vmem:[#allocation2 + $0x1c18] sm:$0xff]
        %v3633 = vld [vmem:[#allocation2 + $0x1c20] sm:$0xff]
        %v3634 = vld [vmem:[#allocation2 + $0x1c28] sm:$0xff]
        %v3635 = vld [vmem:[#allocation2 + $0x1c30] sm:$0xff]
        %v3636 = vld [vmem:[#allocation2 + $0x1c38] sm:$0xff]
        %v3637 = vld [vmem:[#allocation2 + $0x1c40] sm:$0xff]
        %v3638 = vld [vmem:[#allocation2 + $0x1c48] sm:$0xff]
        %v3639 = vld [vmem:[#allocation2 + $0x1c50] sm:$0xff]
        %v3640 = vld [vmem:[#allocation2 + $0x1c58] sm:$0xff]
        %v3641 = vld [vmem:[#allocation2 + $0x1c60] sm:$0xff]
        %v3642 = vld [vmem:[#allocation2 + $0x1c68] sm:$0xff]
        %v3643 = vld [vmem:[#allocation2 + $0x1c70] sm:$0xff]
        %v3644 = vld [vmem:[#allocation2 + $0x1c78] sm:$0xff]
        %v3645 = vld [vmem:[#allocation2 + $0x1c80] sm:$0xff]
        %v3646 = vld [vmem:[#allocation2 + $0x1c88] sm:$0xff]
        %v3647 = vld [vmem:[#allocation2 + $0x1c90] sm:$0xff]
        %v3648 = vld [vmem:[#allocation2 + $0x1c98] sm:$0xff]
        %v3649 = vld [vmem:[#allocation2 + $0x1ca0] sm:$0xff]
        %v3650 = vld [vmem:[#allocation2 + $0x1ca8] sm:$0xff]
        %v3651 = vld [vmem:[#allocation2 + $0x1cb0] sm:$0xff]
        %v3652 = vld [vmem:[#allocation2 + $0x1cb8] sm:$0xff]
        %v3653 = vld [vmem:[#allocation2 + $0x1cc0] sm:$0xff]
        %v3654 = vld [vmem:[#allocation2 + $0x1cc8] sm:$0xff]
        %v3655 = vld [vmem:[#allocation2 + $0x1cd0] sm:$0xff]
        %v3656 = vld [vmem:[#allocation2 + $0x1cd8] sm:$0xff]
        %v3657 = vld [vmem:[#allocation2 + $0x1ce0] sm:$0xff]
        %v3658 = vld [vmem:[#allocation2 + $0x1ce8] sm:$0xff]
        %v3659 = vld [vmem:[#allocation2 + $0x1cf0] sm:$0xff]
        %v3660 = vld [vmem:[#allocation2 + $0x1cf8] sm:$0xff]
        %v3661 = vld [vmem:[#allocation2 + $0x1d00] sm:$0xff]
        %v3662 = vld [vmem:[#allocation2 + $0x1d08] sm:$0xff]
        %v3663 = vld [vmem:[#allocation2 + $0x1d10] sm:$0xff]
        %v3664 = vld [vmem:[#allocation2 + $0x1d18] sm:$0xff]
        %v3665 = vld [vmem:[#allocation2 + $0x1d20] sm:$0xff]
        %v3666 = vld [vmem:[#allocation2 + $0x1d28] sm:$0xff]
        %v3667 = vld [vmem:[#allocation2 + $0x1d30] sm:$0xff]
        %v3668 = vld [vmem:[#allocation2 + $0x1d38] sm:$0xff]
        %v3669 = vld [vmem:[#allocation2 + $0x1d40] sm:$0xff]
        %v3670 = vld [vmem:[#allocation2 + $0x1d48] sm:$0xff]
        %v3671 = vld [vmem:[#allocation2 + $0x1d50] sm:$0xff]
        %v3672 = vld [vmem:[#allocation2 + $0x1d58] sm:$0xff]
        %v3673 = vld [vmem:[#allocation2 + $0x1d60] sm:$0xff]
        %v3674 = vld [vmem:[#allocation2 + $0x1d68] sm:$0xff]
        %v3675 = vld [vmem:[#allocation2 + $0x1d70] sm:$0xff]
        %v3676 = vld [vmem:[#allocation2 + $0x1d78] sm:$0xff]
        %v3677 = vld [vmem:[#allocation2 + $0x1d80] sm:$0xff]
        %v3678 = vld [vmem:[#allocation2 + $0x1d88] sm:$0xff]
        %v3679 = vld [vmem:[#allocation2 + $0x1d90] sm:$0xff]
        %v3680 = vld [vmem:[#allocation2 + $0x1d98] sm:$0xff]
        %v3681 = vld [vmem:[#allocation2 + $0x1da0] sm:$0xff]
        %v3682 = vld [vmem:[#allocation2 + $0x1da8] sm:$0xff]
        %v3683 = vld [vmem:[#allocation2 + $0x1db0] sm:$0xff]
        %v3684 = vld [vmem:[#allocation2 + $0x1db8] sm:$0xff]
        %v3685 = vld [vmem:[#allocation2 + $0x1dc0] sm:$0xff]
        %v3686 = vld [vmem:[#allocation2 + $0x1dc8] sm:$0xff]
        %v3687 = vld [vmem:[#allocation2 + $0x1dd0] sm:$0xff]
        %v3688 = vld [vmem:[#allocation2 + $0x1dd8] sm:$0xff]
        %v3689 = vld [vmem:[#allocation2 + $0x1de0] sm:$0xff]
        %v3690 = vld [vmem:[#allocation2 + $0x1de8] sm:$0xff]
        %v3691 = vld [vmem:[#allocation2 + $0x1df0] sm:$0xff]
        %v3692 = vld [vmem:[#allocation2 + $0x1df8] sm:$0xff]
        %v3693 = vld [vmem:[#allocation2 + $0x1e00] sm:$0xff]
        %v3694 = vld [vmem:[#allocation2 + $0x1e08] sm:$0xff]
        %v3695 = vld [vmem:[#allocation2 + $0x1e10] sm:$0xff]
        %v3696 = vld [vmem:[#allocation2 + $0x1e18] sm:$0xff]
        %v3697 = vld [vmem:[#allocation2 + $0x1e20] sm:$0xff]
        %v3698 = vld [vmem:[#allocation2 + $0x1e28] sm:$0xff]
        %v3699 = vld [vmem:[#allocation2 + $0x1e30] sm:$0xff]
        %v3700 = vld [vmem:[#allocation2 + $0x1e38] sm:$0xff]
        %v3701 = vld [vmem:[#allocation2 + $0x1e40] sm:$0xff]
        %v3702 = vld [vmem:[#allocation2 + $0x1e48] sm:$0xff]
        %v3703 = vld [vmem:[#allocation2 + $0x1e50] sm:$0xff]
        %v3704 = vld [vmem:[#allocation2 + $0x1e58] sm:$0xff]
        %v3705 = vld [vmem:[#allocation2 + $0x1e60] sm:$0xff]
        %v3706 = vld [vmem:[#allocation2 + $0x1e68] sm:$0xff]
        %v3707 = vld [vmem:[#allocation2 + $0x1e70] sm:$0xff]
        %v3708 = vld [vmem:[#allocation2 + $0x1e78] sm:$0xff]
        %v3709 = vld [vmem:[#allocation2 + $0x1e80] sm:$0xff]
        %v3710 = vld [vmem:[#allocation2 + $0x1e88] sm:$0xff]
        %v3711 = vld [vmem:[#allocation2 + $0x1e90] sm:$0xff]
        %v3712 = vld [vmem:[#allocation2 + $0x1e98] sm:$0xff]
        %v3713 = vld [vmem:[#allocation2 + $0x1ea0] sm:$0xff]
        %v3714 = vld [vmem:[#allocation2 + $0x1ea8] sm:$0xff]
        %v3715 = vld [vmem:[#allocation2 + $0x1eb0] sm:$0xff]
        %v3716 = vld [vmem:[#allocation2 + $0x1eb8] sm:$0xff]
        %v3717 = vld [vmem:[#allocation2 + $0x1ec0] sm:$0xff]
        %v3718 = vld [vmem:[#allocation2 + $0x1ec8] sm:$0xff]
        %v3719 = vld [vmem:[#allocation2 + $0x1ed0] sm:$0xff]
        %v3720 = vld [vmem:[#allocation2 + $0x1ed8] sm:$0xff]
        %v3721 = vld [vmem:[#allocation2 + $0x1ee0] sm:$0xff]
        %v3722 = vld [vmem:[#allocation2 + $0x1ee8] sm:$0xff]
        %v3723 = vld [vmem:[#allocation2 + $0x1ef0] sm:$0xff]
        %v3724 = vld [vmem:[#allocation2 + $0x1ef8] sm:$0xff]
        %v3725 = vld [vmem:[#allocation2 + $0x1f00] sm:$0xff]
        %v3726 = vld [vmem:[#allocation2 + $0x1f08] sm:$0xff]
        %v3727 = vld [vmem:[#allocation2 + $0x1f10] sm:$0xff]
        %v3728 = vld [vmem:[#allocation2 + $0x1f18] sm:$0xff]
        %v3729 = vld [vmem:[#allocation2 + $0x1f20] sm:$0xff]
        %v3730 = vld [vmem:[#allocation2 + $0x1f28] sm:$0xff]
        %v3731 = vld [vmem:[#allocation2 + $0x1f30] sm:$0xff]
        %v3732 = vld [vmem:[#allocation2 + $0x1f38] sm:$0xff]
        %v3733 = vld [vmem:[#allocation2 + $0x1f40] sm:$0xff]
        %v3734 = vld [vmem:[#allocation2 + $0x1f48] sm:$0xff]
        %v3735 = vld [vmem:[#allocation2 + $0x1f50] sm:$0xff]
        %v3736 = vld [vmem:[#allocation2 + $0x1f58] sm:$0xff]
        %v3737 = vld [vmem:[#allocation2 + $0x1f60] sm:$0xff]
        %v3738 = vld [vmem:[#allocation2 + $0x1f68] sm:$0xff]
        %v3739 = vld [vmem:[#allocation2 + $0x1f70] sm:$0xff]
        %v3740 = vld [vmem:[#allocation2 + $0x1f78] sm:$0xff]
        %v3741 = vld [vmem:[#allocation2 + $0x1f80] sm:$0xff]
        %v3742 = vld [vmem:[#allocation2 + $0x1f88] sm:$0xff]
        %v3743 = vld [vmem:[#allocation2 + $0x1f90] sm:$0xff]
        %v3744 = vld [vmem:[#allocation2 + $0x1f98] sm:$0xff]
        %v3745 = vld [vmem:[#allocation2 + $0x1fa0] sm:$0xff]
        %v3746 = vld [vmem:[#allocation2 + $0x1fa8] sm:$0xff]
        %v3747 = vld [vmem:[#allocation2 + $0x1fb0] sm:$0xff]
        %v3748 = vld [vmem:[#allocation2 + $0x1fb8] sm:$0xff]
        %v3749 = vld [vmem:[#allocation2 + $0x1fc0] sm:$0xff]
        %v3750 = vld [vmem:[#allocation2 + $0x1fc8] sm:$0xff]
        %v3751 = vld [vmem:[#allocation2 + $0x1fd0] sm:$0xff]
        %v3752 = vld [vmem:[#allocation2 + $0x1fd8] sm:$0xff]
        %v3753 = vld [vmem:[#allocation2 + $0x1fe0] sm:$0xff]
        %v3754 = vld [vmem:[#allocation2 + $0x1fe8] sm:$0xff]
        %v3755 = vld [vmem:[#allocation2 + $0x1ff0] sm:$0xff]
        %v3756 = vld [vmem:[#allocation2 + $0x1ff8] sm:$0xff]
        %v3757 = vld [vmem:[#allocation5] sm:$0xf]
        %v3759 = vlaneseq
        %v3760 = vshrl.u32 %v3759, 7
        %v3761 = vsub.s32 0, %v3760
        %v3762 = vrot.slane %v3757, %v3761
        %v3763 = vlaneseq
        %v3764 = vshrl.u32 %v3763, 7
        %v3765 = vsub.s32 1, %v3764
        %v3766 = vrot.slane %v3757, %v3765
        %v3767 = vlaneseq
        %v3768 = vshrl.u32 %v3767, 7
        %v3769 = vsub.s32 2, %v3768
        %v3770 = vrot.slane %v3757, %v3769
        %v3771 = vlaneseq
        %v3772 = vshrl.u32 %v3771, 7
        %v3773 = vsub.s32 3, %v3772
        %v3774 = vrot.slane %v3757, %v3773
        %3779 = vmatprep.subr.mxu0 %v2734
        %3780 = vmatpush1.msra.mxu0 %v2733
        %3781 = vmatprep.subr.mxu0 %v2738
        %3782 = vmatpush1.msra.mxu0 %v2737
        %3783 = vmatprep.subr.mxu0 %v2742
        %3784 = vmatpush1.msra.mxu0 %v2741
        %3785 = vmatprep.subr.mxu0 %v2746
        %3786 = vmatpush1.msra.mxu0 %v2745
        %3787 = vmatprep.subr.mxu0 %v2750
        %3788 = vmatpush1.msra.mxu0 %v2749
        %3789 = vmatprep.subr.mxu0 %v2754
        %3790 = vmatpush1.msra.mxu0 %v2753
        %3791 = vmatprep.subr.mxu0 %v2758
        %3792 = vmatpush1.msra.mxu0 %v2757
        %3793 = vmatprep.subr.mxu0 %v2762
        %3794 = vmatpush1.msra.mxu0 %v2761
        %3795 = vmatprep.subr.mxu0 %v2766
        %3796 = vmatpush1.msra.mxu0 %v2765
        %3797 = vmatprep.subr.mxu0 %v2770
        %3798 = vmatpush1.msra.mxu0 %v2769
        %3799 = vmatprep.subr.mxu0 %v2774
        %3800 = vmatpush1.msra.mxu0 %v2773
        %3801 = vmatprep.subr.mxu0 %v2778
        %3802 = vmatpush1.msra.mxu0 %v2777
        %3803 = vmatprep.subr.mxu0 %v2782
        %3804 = vmatpush1.msra.mxu0 %v2781
        %3805 = vmatprep.subr.mxu0 %v2786
        %3806 = vmatpush1.msra.mxu0 %v2785
        %3807 = vmatprep.subr.mxu0 %v2790
        %3808 = vmatpush1.msra.mxu0 %v2789
        %3809 = vmatprep.subr.mxu0 %v2794
        %3810 = vmatpush1.msra.mxu0 %v2793
        %3811 = vmatprep.subr.mxu0 %v2798
        %3812 = vmatpush1.msra.mxu0 %v2797
        %3813 = vmatprep.subr.mxu0 %v2802
        %3814 = vmatpush1.msra.mxu0 %v2801
        %3815 = vmatprep.subr.mxu0 %v2806
        %3816 = vmatpush1.msra.mxu0 %v2805
        %3817 = vmatprep.subr.mxu0 %v2810
        %3818 = vmatpush1.msra.mxu0 %v2809
        %3819 = vmatprep.subr.mxu0 %v2814
        %3820 = vmatpush1.msra.mxu0 %v2813
        %3821 = vmatprep.subr.mxu0 %v2818
        %3822 = vmatpush1.msra.mxu0 %v2817
        %3823 = vmatprep.subr.mxu0 %v2822
        %3824 = vmatpush1.msra.mxu0 %v2821
        %3825 = vmatprep.subr.mxu0 %v2826
        %3826 = vmatpush1.msra.mxu0 %v2825
        %3827 = vmatprep.subr.mxu0 %v2830
        %3828 = vmatpush1.msra.mxu0 %v2829
        %3829 = vmatprep.subr.mxu0 %v2834
        %3830 = vmatpush1.msra.mxu0 %v2833
        %3831 = vmatprep.subr.mxu0 %v2838
        %3832 = vmatpush1.msra.mxu0 %v2837
        %3833 = vmatprep.subr.mxu0 %v2842
        %3834 = vmatpush1.msra.mxu0 %v2841
        %3835 = vmatprep.subr.mxu0 %v2846
        %3836 = vmatpush1.msra.mxu0 %v2845
        %3837 = vmatprep.subr.mxu0 %v2850
        %3838 = vmatpush1.msra.mxu0 %v2849
        %3839 = vmatprep.subr.mxu0 %v2854
        %3840 = vmatpush1.msra.mxu0 %v2853
        %3841 = vmatprep.subr.mxu0 %v2858
        %3842 = vmatpush1.msra.mxu0 %v2857
        %3843 = vmatprep.mubr.f32.mxu0 %v2718
        %3844 = vmatmul.mubr.f32.gmra.mrb[0].mxu0 %v2717
        %v3845 = vpop.f32.mrb[0].mxu0
        %v3846 = vadd.f32 %v3762, %v3845
        %v3847 = vpop.f32.mrb[0].mxu0
        %v3848 = vadd.f32 %v3766, %v3847
        %3849 = vdwg.mxu0
        %3850 = vmatprep.subr.mxu0 %v2862
        %3851 = vmatpush1.msra.mxu0 %v2861
        %3852 = vmatprep.subr.mxu0 %v2866
        %3853 = vmatpush1.msra.mxu0 %v2865
        %3854 = vmatprep.subr.mxu0 %v2870
        %3855 = vmatpush1.msra.mxu0 %v2869
        %3856 = vmatprep.subr.mxu0 %v2874
        %3857 = vmatpush1.msra.mxu0 %v2873
        %3858 = vmatprep.subr.mxu0 %v2878
        %3859 = vmatpush1.msra.mxu0 %v2877
        %3860 = vmatprep.subr.mxu0 %v2882
        %3861 = vmatpush1.msra.mxu0 %v2881
        %3862 = vmatprep.subr.mxu0 %v2886
        %3863 = vmatpush1.msra.mxu0 %v2885
        %3864 = vmatprep.subr.mxu0 %v2890
        %3865 = vmatpush1.msra.mxu0 %v2889
        %3866 = vmatprep.subr.mxu0 %v2894
        %3867 = vmatpush1.msra.mxu0 %v2893
        %3868 = vmatprep.subr.mxu0 %v2898
        %3869 = vmatpush1.msra.mxu0 %v2897
        %3870 = vmatprep.subr.mxu0 %v2902
        %3871 = vmatpush1.msra.mxu0 %v2901
        %3872 = vmatprep.subr.mxu0 %v2906
        %3873 = vmatpush1.msra.mxu0 %v2905
        %3874 = vmatprep.subr.mxu0 %v2910
        %3875 = vmatpush1.msra.mxu0 %v2909
        %3876 = vmatprep.subr.mxu0 %v2914
        %3877 = vmatpush1.msra.mxu0 %v2913
        %3878 = vmatprep.subr.mxu0 %v2918
        %3879 = vmatpush1.msra.mxu0 %v2917
        %3880 = vmatprep.subr.mxu0 %v2922
        %3881 = vmatpush1.msra.mxu0 %v2921
        %3882 = vmatprep.subr.mxu0 %v2926
        %3883 = vmatpush1.msra.mxu0 %v2925
        %3884 = vmatprep.subr.mxu0 %v2930
        %3885 = vmatpush1.msra.mxu0 %v2929
        %3886 = vmatprep.subr.mxu0 %v2934
        %3887 = vmatpush1.msra.mxu0 %v2933
        %3888 = vmatprep.subr.mxu0 %v2938
        %3889 = vmatpush1.msra.mxu0 %v2937
        %3890 = vmatprep.subr.mxu0 %v2942
        %3891 = vmatpush1.msra.mxu0 %v2941
        %3892 = vmatprep.subr.mxu0 %v2946
        %3893 = vmatpush1.msra.mxu0 %v2945
        %3894 = vmatprep.subr.mxu0 %v2950
        %3895 = vmatpush1.msra.mxu0 %v2949
        %3896 = vmatprep.subr.mxu0 %v2954
        %3897 = vmatpush1.msra.mxu0 %v2953
        %3898 = vmatprep.subr.mxu0 %v2958
        %3899 = vmatpush1.msra.mxu0 %v2957
        %3900 = vmatprep.subr.mxu0 %v2962
        %3901 = vmatpush1.msra.mxu0 %v2961
        %3902 = vmatprep.subr.mxu0 %v2966
        %3903 = vmatpush1.msra.mxu0 %v2965
        %3904 = vmatprep.subr.mxu0 %v2970
        %3905 = vmatpush1.msra.mxu0 %v2969
        %3906 = vmatprep.subr.mxu0 %v2974
        %3907 = vmatpush1.msra.mxu0 %v2973
        %3908 = vmatprep.subr.mxu0 %v2978
        %3909 = vmatpush1.msra.mxu0 %v2977
        %3910 = vmatprep.subr.mxu0 %v2982
        %3911 = vmatpush1.msra.mxu0 %v2981
        %3912 = vmatprep.subr.mxu0 %v2986
        %3913 = vmatpush1.msra.mxu0 %v2985
        %3914 = vmatprep.mubr.f32.mxu0 %v2720
        %3915 = vmatmul.mubr.f32.gmra.mrb[0].mxu0 %v2719
        %v3916 = vpop.f32.mrb[0].mxu0
        %v3917 = vadd.f32 %v3846, %v3916
        %v3918 = vpop.f32.mrb[0].mxu0
        %v3919 = vadd.f32 %v3848, %v3918
        %3920 = vdwg.mxu0
        %3921 = vmatprep.subr.mxu0 %v2990
        %3922 = vmatpush1.msra.mxu0 %v2989
        %3923 = vmatprep.subr.mxu0 %v2994
        %3924 = vmatpush1.msra.mxu0 %v2993
        %3925 = vmatprep.subr.mxu0 %v2998
        %3926 = vmatpush1.msra.mxu0 %v2997
        %3927 = vmatprep.subr.mxu0 %v3002
        %3928 = vmatpush1.msra.mxu0 %v3001
        %3929 = vmatprep.subr.mxu0 %v3006
        %3930 = vmatpush1.msra.mxu0 %v3005
        %3931 = vmatprep.subr.mxu0 %v3010
        %3932 = vmatpush1.msra.mxu0 %v3009
        %3933 = vmatprep.subr.mxu0 %v3014
        %3934 = vmatpush1.msra.mxu0 %v3013
        %3935 = vmatprep.subr.mxu0 %v3018
        %3936 = vmatpush1.msra.mxu0 %v3017
        %3937 = vmatprep.subr.mxu0 %v3022
        %3938 = vmatpush1.msra.mxu0 %v3021
        %3939 = vmatprep.subr.mxu0 %v3026
        %3940 = vmatpush1.msra.mxu0 %v3025
        %3941 = vmatprep.subr.mxu0 %v3030
        %3942 = vmatpush1.msra.mxu0 %v3029
        %3943 = vmatprep.subr.mxu0 %v3034
        %3944 = vmatpush1.msra.mxu0 %v3033
        %3945 = vmatprep.subr.mxu0 %v3038
        %3946 = vmatpush1.msra.mxu0 %v3037
        %3947 = vmatprep.subr.mxu0 %v3042
        %3948 = vmatpush1.msra.mxu0 %v3041
        %3949 = vmatprep.subr.mxu0 %v3046
        %3950 = vmatpush1.msra.mxu0 %v3045
        %3951 = vmatprep.subr.mxu0 %v3050
        %3952 = vmatpush1.msra.mxu0 %v3049
        %3953 = vmatprep.subr.mxu0 %v3054
        %3954 = vmatpush1.msra.mxu0 %v3053
        %3955 = vmatprep.subr.mxu0 %v3058
        %3956 = vmatpush1.msra.mxu0 %v3057
        %3957 = vmatprep.subr.mxu0 %v3062
        %3958 = vmatpush1.msra.mxu0 %v3061
        %3959 = vmatprep.subr.mxu0 %v3066
        %3960 = vmatpush1.msra.mxu0 %v3065
        %3961 = vmatprep.subr.mxu0 %v3070
        %3962 = vmatpush1.msra.mxu0 %v3069
        %3963 = vmatprep.subr.mxu0 %v3074
        %3964 = vmatpush1.msra.mxu0 %v3073
        %3965 = vmatprep.subr.mxu0 %v3078
        %3966 = vmatpush1.msra.mxu0 %v3077
        %3967 = vmatprep.subr.mxu0 %v3082
        %3968 = vmatpush1.msra.mxu0 %v3081
        %3969 = vmatprep.subr.mxu0 %v3086
        %3970 = vmatpush1.msra.mxu0 %v3085
        %3971 = vmatprep.subr.mxu0 %v3090
        %3972 = vmatpush1.msra.mxu0 %v3089
        %3973 = vmatprep.subr.mxu0 %v3094
        %3974 = vmatpush1.msra.mxu0 %v3093
        %3975 = vmatprep.subr.mxu0 %v3098
        %3976 = vmatpush1.msra.mxu0 %v3097
        %3977 = vmatprep.subr.mxu0 %v3102
        %3978 = vmatpush1.msra.mxu0 %v3101
        %3979 = vmatprep.subr.mxu0 %v3106
        %3980 = vmatpush1.msra.mxu0 %v3105
        %3981 = vmatprep.subr.mxu0 %v3110
        %3982 = vmatpush1.msra.mxu0 %v3109
        %3983 = vmatprep.subr.mxu0 %v3114
        %3984 = vmatpush1.msra.mxu0 %v3113
        %3985 = vmatprep.mubr.f32.mxu0 %v2722
        %3986 = vmatmul.mubr.f32.gmra.mrb[0].mxu0 %v2721
        %v3987 = vpop.f32.mrb[0].mxu0
        %v3988 = vadd.f32 %v3917, %v3987
        %v3989 = vpop.f32.mrb[0].mxu0
        %v3990 = vadd.f32 %v3919, %v3989
        %3991 = vdwg.mxu0
        %3992 = vmatprep.subr.mxu0 %v3118
        %3993 = vmatpush1.msra.mxu0 %v3117
        %3994 = vmatprep.subr.mxu0 %v3122
        %3995 = vmatpush1.msra.mxu0 %v3121
        %3996 = vmatprep.subr.mxu0 %v3126
        %3997 = vmatpush1.msra.mxu0 %v3125
        %3998 = vmatprep.subr.mxu0 %v3130
        %3999 = vmatpush1.msra.mxu0 %v3129
        %4000 = vmatprep.subr.mxu0 %v3134
        %4001 = vmatpush1.msra.mxu0 %v3133
        %4002 = vmatprep.subr.mxu0 %v3138
        %4003 = vmatpush1.msra.mxu0 %v3137
        %4004 = vmatprep.subr.mxu0 %v3142
        %4005 = vmatpush1.msra.mxu0 %v3141
        %4006 = vmatprep.subr.mxu0 %v3146
        %4007 = vmatpush1.msra.mxu0 %v3145
        %4008 = vmatprep.subr.mxu0 %v3150
        %4009 = vmatpush1.msra.mxu0 %v3149
        %4010 = vmatprep.subr.mxu0 %v3154
        %4011 = vmatpush1.msra.mxu0 %v3153
        %4012 = vmatprep.subr.mxu0 %v3158
        %4013 = vmatpush1.msra.mxu0 %v3157
        %4014 = vmatprep.subr.mxu0 %v3162
        %4015 = vmatpush1.msra.mxu0 %v3161
        %4016 = vmatprep.subr.mxu0 %v3166
        %4017 = vmatpush1.msra.mxu0 %v3165
        %4018 = vmatprep.subr.mxu0 %v3170
        %4019 = vmatpush1.msra.mxu0 %v3169
        %4020 = vmatprep.subr.mxu0 %v3174
        %4021 = vmatpush1.msra.mxu0 %v3173
        %4022 = vmatprep.subr.mxu0 %v3178
        %4023 = vmatpush1.msra.mxu0 %v3177
        %4024 = vmatprep.subr.mxu0 %v3182
        %4025 = vmatpush1.msra.mxu0 %v3181
        %4026 = vmatprep.subr.mxu0 %v3186
        %4027 = vmatpush1.msra.mxu0 %v3185
        %4028 = vmatprep.subr.mxu0 %v3190
        %4029 = vmatpush1.msra.mxu0 %v3189
        %4030 = vmatprep.subr.mxu0 %v3194
        %4031 = vmatpush1.msra.mxu0 %v3193
        %4032 = vmatprep.subr.mxu0 %v3198
        %4033 = vmatpush1.msra.mxu0 %v3197
        %4034 = vmatprep.subr.mxu0 %v3202
        %4035 = vmatpush1.msra.mxu0 %v3201
        %4036 = vmatprep.subr.mxu0 %v3206
        %4037 = vmatpush1.msra.mxu0 %v3205
        %4038 = vmatprep.subr.mxu0 %v3210
        %4039 = vmatpush1.msra.mxu0 %v3209
        %4040 = vmatprep.subr.mxu0 %v3214
        %4041 = vmatpush1.msra.mxu0 %v3213
        %4042 = vmatprep.subr.mxu0 %v3218
        %4043 = vmatpush1.msra.mxu0 %v3217
        %4044 = vmatprep.subr.mxu0 %v3222
        %4045 = vmatpush1.msra.mxu0 %v3221
        %4046 = vmatprep.subr.mxu0 %v3226
        %4047 = vmatpush1.msra.mxu0 %v3225
        %4048 = vmatprep.subr.mxu0 %v3230
        %4049 = vmatpush1.msra.mxu0 %v3229
        %4050 = vmatprep.subr.mxu0 %v3234
        %4051 = vmatpush1.msra.mxu0 %v3233
        %4052 = vmatprep.subr.mxu0 %v3238
        %4053 = vmatpush1.msra.mxu0 %v3237
        %4054 = vmatprep.subr.mxu0 %v3242
        %4055 = vmatpush1.msra.mxu0 %v3241
        %4056 = vmatprep.mubr.f32.mxu0 %v2724
        %4057 = vmatmul.mubr.f32.gmra.mrb[0].mxu0 %v2723
        %v4058 = vpop.f32.mrb[0].mxu0
        %v4059 = vadd.f32 %v3988, %v4058
        %v4060 = vpop.f32.mrb[0].mxu0
        %v4061 = vadd.f32 %v3990, %v4060
        %4062 = vdwg.mxu0
        %4063 = vmatprep.subr.mxu0 %v3246
        %4064 = vmatpush1.msra.mxu0 %v3245
        %4065 = vmatprep.subr.mxu0 %v3250
        %4066 = vmatpush1.msra.mxu0 %v3249
        %4067 = vmatprep.subr.mxu0 %v3254
        %4068 = vmatpush1.msra.mxu0 %v3253
        %4069 = vmatprep.subr.mxu0 %v3258
        %4070 = vmatpush1.msra.mxu0 %v3257
        %4071 = vmatprep.subr.mxu0 %v3262
        %4072 = vmatpush1.msra.mxu0 %v3261
        %4073 = vmatprep.subr.mxu0 %v3266
        %4074 = vmatpush1.msra.mxu0 %v3265
        %4075 = vmatprep.subr.mxu0 %v3270
        %4076 = vmatpush1.msra.mxu0 %v3269
        %4077 = vmatprep.subr.mxu0 %v3274
        %4078 = vmatpush1.msra.mxu0 %v3273
        %4079 = vmatprep.subr.mxu0 %v3278
        %4080 = vmatpush1.msra.mxu0 %v3277
        %4081 = vmatprep.subr.mxu0 %v3282
        %4082 = vmatpush1.msra.mxu0 %v3281
        %4083 = vmatprep.subr.mxu0 %v3286
        %4084 = vmatpush1.msra.mxu0 %v3285
        %4085 = vmatprep.subr.mxu0 %v3290
        %4086 = vmatpush1.msra.mxu0 %v3289
        %4087 = vmatprep.subr.mxu0 %v3294
        %4088 = vmatpush1.msra.mxu0 %v3293
        %4089 = vmatprep.subr.mxu0 %v3298
        %4090 = vmatpush1.msra.mxu0 %v3297
        %4091 = vmatprep.subr.mxu0 %v3302
        %4092 = vmatpush1.msra.mxu0 %v3301
        %4093 = vmatprep.subr.mxu0 %v3306
        %4094 = vmatpush1.msra.mxu0 %v3305
        %4095 = vmatprep.subr.mxu0 %v3310
        %4096 = vmatpush1.msra.mxu0 %v3309
        %4097 = vmatprep.subr.mxu0 %v3314
        %4098 = vmatpush1.msra.mxu0 %v3313
        %4099 = vmatprep.subr.mxu0 %v3318
        %4100 = vmatpush1.msra.mxu0 %v3317
        %4101 = vmatprep.subr.mxu0 %v3322
        %4102 = vmatpush1.msra.mxu0 %v3321
        %4103 = vmatprep.subr.mxu0 %v3326
        %4104 = vmatpush1.msra.mxu0 %v3325
        %4105 = vmatprep.subr.mxu0 %v3330
        %4106 = vmatpush1.msra.mxu0 %v3329
        %4107 = vmatprep.subr.mxu0 %v3334
        %4108 = vmatpush1.msra.mxu0 %v3333
        %4109 = vmatprep.subr.mxu0 %v3338
        %4110 = vmatpush1.msra.mxu0 %v3337
        %4111 = vmatprep.subr.mxu0 %v3342
        %4112 = vmatpush1.msra.mxu0 %v3341
        %4113 = vmatprep.subr.mxu0 %v3346
        %4114 = vmatpush1.msra.mxu0 %v3345
        %4115 = vmatprep.subr.mxu0 %v3350
        %4116 = vmatpush1.msra.mxu0 %v3349
        %4117 = vmatprep.subr.mxu0 %v3354
        %4118 = vmatpush1.msra.mxu0 %v3353
        %4119 = vmatprep.subr.mxu0 %v3358
        %4120 = vmatpush1.msra.mxu0 %v3357
        %4121 = vmatprep.subr.mxu0 %v3362
        %4122 = vmatpush1.msra.mxu0 %v3361
        %4123 = vmatprep.subr.mxu0 %v3366
        %4124 = vmatpush1.msra.mxu0 %v3365
        %4125 = vmatprep.subr.mxu0 %v3370
        %4126 = vmatpush1.msra.mxu0 %v3369
        %4127 = vmatprep.mubr.f32.mxu0 %v2726
        %4128 = vmatmul.mubr.f32.gmra.mrb[0].mxu0 %v2725
        %v4129 = vpop.f32.mrb[0].mxu0
        %v4130 = vadd.f32 %v4059, %v4129
        %v4131 = vpop.f32.mrb[0].mxu0
        %v4132 = vadd.f32 %v4061, %v4131
        %4133 = vdwg.mxu0
        %4134 = vmatprep.subr.mxu0 %v3374
        %4135 = vmatpush1.msra.mxu0 %v3373
        %4136 = vmatprep.subr.mxu0 %v3378
        %4137 = vmatpush1.msra.mxu0 %v3377
        %4138 = vmatprep.subr.mxu0 %v3382
        %4139 = vmatpush1.msra.mxu0 %v3381
        %4140 = vmatprep.subr.mxu0 %v3386
        %4141 = vmatpush1.msra.mxu0 %v3385
        %4142 = vmatprep.subr.mxu0 %v3390
        %4143 = vmatpush1.msra.mxu0 %v3389
        %4144 = vmatprep.subr.mxu0 %v3394
        %4145 = vmatpush1.msra.mxu0 %v3393
        %4146 = vmatprep.subr.mxu0 %v3398
        %4147 = vmatpush1.msra.mxu0 %v3397
        %4148 = vmatprep.subr.mxu0 %v3402
        %4149 = vmatpush1.msra.mxu0 %v3401
        %4150 = vmatprep.subr.mxu0 %v3406
        %4151 = vmatpush1.msra.mxu0 %v3405
        %4152 = vmatprep.subr.mxu0 %v3410
        %4153 = vmatpush1.msra.mxu0 %v3409
        %4154 = vmatprep.subr.mxu0 %v3414
        %4155 = vmatpush1.msra.mxu0 %v3413
        %4156 = vmatprep.subr.mxu0 %v3418
        %4157 = vmatpush1.msra.mxu0 %v3417
        %4158 = vmatprep.subr.mxu0 %v3422
        %4159 = vmatpush1.msra.mxu0 %v3421
        %4160 = vmatprep.subr.mxu0 %v3426
        %4161 = vmatpush1.msra.mxu0 %v3425
        %4162 = vmatprep.subr.mxu0 %v3430
        %4163 = vmatpush1.msra.mxu0 %v3429
        %4164 = vmatprep.subr.mxu0 %v3434
        %4165 = vmatpush1.msra.mxu0 %v3433
        %4166 = vmatprep.subr.mxu0 %v3438
        %4167 = vmatpush1.msra.mxu0 %v3437
        %4168 = vmatprep.subr.mxu0 %v3442
        %4169 = vmatpush1.msra.mxu0 %v3441
        %4170 = vmatprep.subr.mxu0 %v3446
        %4171 = vmatpush1.msra.mxu0 %v3445
        %4172 = vmatprep.subr.mxu0 %v3450
        %4173 = vmatpush1.msra.mxu0 %v3449
        %4174 = vmatprep.subr.mxu0 %v3454
        %4175 = vmatpush1.msra.mxu0 %v3453
        %4176 = vmatprep.subr.mxu0 %v3458
        %4177 = vmatpush1.msra.mxu0 %v3457
        %4178 = vmatprep.subr.mxu0 %v3462
        %4179 = vmatpush1.msra.mxu0 %v3461
        %4180 = vmatprep.subr.mxu0 %v3466
        %4181 = vmatpush1.msra.mxu0 %v3465
        %4182 = vmatprep.subr.mxu0 %v3470
        %4183 = vmatpush1.msra.mxu0 %v3469
        %4184 = vmatprep.subr.mxu0 %v3474
        %4185 = vmatpush1.msra.mxu0 %v3473
        %4186 = vmatprep.subr.mxu0 %v3478
        %4187 = vmatpush1.msra.mxu0 %v3477
        %4188 = vmatprep.subr.mxu0 %v3482
        %4189 = vmatpush1.msra.mxu0 %v3481
        %4190 = vmatprep.subr.mxu0 %v3486
        %4191 = vmatpush1.msra.mxu0 %v3485
        %4192 = vmatprep.subr.mxu0 %v3490
        %4193 = vmatpush1.msra.mxu0 %v3489
        %4194 = vmatprep.subr.mxu0 %v3494
        %4195 = vmatpush1.msra.mxu0 %v3493
        %4196 = vmatprep.subr.mxu0 %v3498
        %4197 = vmatpush1.msra.mxu0 %v3497
        %4198 = vmatprep.mubr.f32.mxu0 %v2728
        %4199 = vmatmul.mubr.f32.gmra.mrb[0].mxu0 %v2727
        %v4200 = vpop.f32.mrb[0].mxu0
        %v4201 = vadd.f32 %v4130, %v4200
        %v4202 = vpop.f32.mrb[0].mxu0
        %v4203 = vadd.f32 %v4132, %v4202
        %4204 = vdwg.mxu0
        %4205 = vmatprep.subr.mxu0 %v3502
        %4206 = vmatpush1.msra.mxu0 %v3501
        %4207 = vmatprep.subr.mxu0 %v3506
        %4208 = vmatpush1.msra.mxu0 %v3505
        %4209 = vmatprep.subr.mxu0 %v3510
        %4210 = vmatpush1.msra.mxu0 %v3509
        %4211 = vmatprep.subr.mxu0 %v3514
        %4212 = vmatpush1.msra.mxu0 %v3513
        %4213 = vmatprep.subr.mxu0 %v3518
        %4214 = vmatpush1.msra.mxu0 %v3517
        %4215 = vmatprep.subr.mxu0 %v3522
        %4216 = vmatpush1.msra.mxu0 %v3521
        %4217 = vmatprep.subr.mxu0 %v3526
        %4218 = vmatpush1.msra.mxu0 %v3525
        %4219 = vmatprep.subr.mxu0 %v3530
        %4220 = vmatpush1.msra.mxu0 %v3529
        %4221 = vmatprep.subr.mxu0 %v3534
        %4222 = vmatpush1.msra.mxu0 %v3533
        %4223 = vmatprep.subr.mxu0 %v3538
        %4224 = vmatpush1.msra.mxu0 %v3537
        %4225 = vmatprep.subr.mxu0 %v3542
        %4226 = vmatpush1.msra.mxu0 %v3541
        %4227 = vmatprep.subr.mxu0 %v3546
        %4228 = vmatpush1.msra.mxu0 %v3545
        %4229 = vmatprep.subr.mxu0 %v3550
        %4230 = vmatpush1.msra.mxu0 %v3549
        %4231 = vmatprep.subr.mxu0 %v3554
        %4232 = vmatpush1.msra.mxu0 %v3553
        %4233 = vmatprep.subr.mxu0 %v3558
        %4234 = vmatpush1.msra.mxu0 %v3557
        %4235 = vmatprep.subr.mxu0 %v3562
        %4236 = vmatpush1.msra.mxu0 %v3561
        %4237 = vmatprep.subr.mxu0 %v3566
        %4238 = vmatpush1.msra.mxu0 %v3565
        %4239 = vmatprep.subr.mxu0 %v3570
        %4240 = vmatpush1.msra.mxu0 %v3569
        %4241 = vmatprep.subr.mxu0 %v3574
        %4242 = vmatpush1.msra.mxu0 %v3573
        %4243 = vmatprep.subr.mxu0 %v3578
        %4244 = vmatpush1.msra.mxu0 %v3577
        %4245 = vmatprep.subr.mxu0 %v3582
        %4246 = vmatpush1.msra.mxu0 %v3581
        %4247 = vmatprep.subr.mxu0 %v3586
        %4248 = vmatpush1.msra.mxu0 %v3585
        %4249 = vmatprep.subr.mxu0 %v3590
        %4250 = vmatpush1.msra.mxu0 %v3589
        %4251 = vmatprep.subr.mxu0 %v3594
        %4252 = vmatpush1.msra.mxu0 %v3593
        %4253 = vmatprep.subr.mxu0 %v3598
        %4254 = vmatpush1.msra.mxu0 %v3597
        %4255 = vmatprep.subr.mxu0 %v3602
        %4256 = vmatpush1.msra.mxu0 %v3601
        %4257 = vmatprep.subr.mxu0 %v3606
        %4258 = vmatpush1.msra.mxu0 %v3605
        %4259 = vmatprep.subr.mxu0 %v3610
        %4260 = vmatpush1.msra.mxu0 %v3609
        %4261 = vmatprep.subr.mxu0 %v3614
        %4262 = vmatpush1.msra.mxu0 %v3613
        %4263 = vmatprep.subr.mxu0 %v3618
        %4264 = vmatpush1.msra.mxu0 %v3617
        %4265 = vmatprep.subr.mxu0 %v3622
        %4266 = vmatpush1.msra.mxu0 %v3621
        %4267 = vmatprep.subr.mxu0 %v3626
        %4268 = vmatpush1.msra.mxu0 %v3625
        %4269 = vmatprep.mubr.f32.mxu0 %v2730
        %4270 = vmatmul.mubr.f32.gmra.mrb[0].mxu0 %v2729
        %v4271 = vpop.f32.mrb[0].mxu0
        %v4272 = vadd.f32 %v4201, %v4271
        %v4273 = vpop.f32.mrb[0].mxu0
        %v4274 = vadd.f32 %v4203, %v4273
        %4275 = vdwg.mxu0
        %4276 = vmatprep.subr.mxu0 %v3630
        %4277 = vmatpush1.msra.mxu0 %v3629
        %4278 = vmatprep.subr.mxu0 %v3634
        %4279 = vmatpush1.msra.mxu0 %v3633
        %4280 = vmatprep.subr.mxu0 %v3638
        %4281 = vmatpush1.msra.mxu0 %v3637
        %4282 = vmatprep.subr.mxu0 %v3642
        %4283 = vmatpush1.msra.mxu0 %v3641
        %4284 = vmatprep.subr.mxu0 %v3646
        %4285 = vmatpush1.msra.mxu0 %v3645
        %4286 = vmatprep.subr.mxu0 %v3650
        %4287 = vmatpush1.msra.mxu0 %v3649
        %4288 = vmatprep.subr.mxu0 %v3654
        %4289 = vmatpush1.msra.mxu0 %v3653
        %4290 = vmatprep.subr.mxu0 %v3658
        %4291 = vmatpush1.msra.mxu0 %v3657
        %4292 = vmatprep.subr.mxu0 %v3662
        %4293 = vmatpush1.msra.mxu0 %v3661
        %4294 = vmatprep.subr.mxu0 %v3666
        %4295 = vmatpush1.msra.mxu0 %v3665
        %4296 = vmatprep.subr.mxu0 %v3670
        %4297 = vmatpush1.msra.mxu0 %v3669
        %4298 = vmatprep.subr.mxu0 %v3674
        %4299 = vmatpush1.msra.mxu0 %v3673
        %4300 = vmatprep.subr.mxu0 %v3678
        %4301 = vmatpush1.msra.mxu0 %v3677
        %4302 = vmatprep.subr.mxu0 %v3682
        %4303 = vmatpush1.msra.mxu0 %v3681
        %4304 = vmatprep.subr.mxu0 %v3686
        %4305 = vmatpush1.msra.mxu0 %v3685
        %4306 = vmatprep.subr.mxu0 %v3690
        %4307 = vmatpush1.msra.mxu0 %v3689
        %4308 = vmatprep.subr.mxu0 %v3694
        %4309 = vmatpush1.msra.mxu0 %v3693
        %4310 = vmatprep.subr.mxu0 %v3698
        %4311 = vmatpush1.msra.mxu0 %v3697
        %4312 = vmatprep.subr.mxu0 %v3702
        %4313 = vmatpush1.msra.mxu0 %v3701
        %4314 = vmatprep.subr.mxu0 %v3706
        %4315 = vmatpush1.msra.mxu0 %v3705
        %4316 = vmatprep.subr.mxu0 %v3710
        %4317 = vmatpush1.msra.mxu0 %v3709
        %4318 = vmatprep.subr.mxu0 %v3714
        %4319 = vmatpush1.msra.mxu0 %v3713
        %4320 = vmatprep.subr.mxu0 %v3718
        %4321 = vmatpush1.msra.mxu0 %v3717
        %4322 = vmatprep.subr.mxu0 %v3722
        %4323 = vmatpush1.msra.mxu0 %v3721
        %4324 = vmatprep.subr.mxu0 %v3726
        %4325 = vmatpush1.msra.mxu0 %v3725
        %4326 = vmatprep.subr.mxu0 %v3730
        %4327 = vmatpush1.msra.mxu0 %v3729
        %4328 = vmatprep.subr.mxu0 %v3734
        %4329 = vmatpush1.msra.mxu0 %v3733
        %4330 = vmatprep.subr.mxu0 %v3738
        %4331 = vmatpush1.msra.mxu0 %v3737
        %4332 = vmatprep.subr.mxu0 %v3742
        %4333 = vmatpush1.msra.mxu0 %v3741
        %4334 = vmatprep.subr.mxu0 %v3746
        %4335 = vmatpush1.msra.mxu0 %v3745
        %4336 = vmatprep.subr.mxu0 %v3750
        %4337 = vmatpush1.msra.mxu0 %v3749
        %4338 = vmatprep.subr.mxu0 %v3754
        %4339 = vmatpush1.msra.mxu0 %v3753
        %4340 = vmatprep.mubr.f32.mxu0 %v2732
        %4341 = vmatmul.mubr.f32.gmra.mrb[0].mxu0 %v2731
        %v4342 = vpop.f32.mrb[0].mxu0
        %v4343 = vadd.f32 %v4272, %v4342
        %v4344 = vpop.f32.mrb[0].mxu0
        %v4345 = vadd.f32 %v4274, %v4344
        %4346 = vdwg.mxu0
        %4347 = vmatprep.subr.mxu0 %v2736
        %4348 = vmatpush1.msra.mxu0 %v2735
        %4349 = vmatprep.subr.mxu0 %v2740
        %4350 = vmatpush1.msra.mxu0 %v2739
        %4351 = vmatprep.subr.mxu0 %v2744
        %4352 = vmatpush1.msra.mxu0 %v2743
        %4353 = vmatprep.subr.mxu0 %v2748
        %4354 = vmatpush1.msra.mxu0 %v2747
        %4355 = vmatprep.subr.mxu0 %v2752
        %4356 = vmatpush1.msra.mxu0 %v2751
        %4357 = vmatprep.subr.mxu0 %v2756
        %4358 = vmatpush1.msra.mxu0 %v2755
        %4359 = vmatprep.subr.mxu0 %v2760
        %4360 = vmatpush1.msra.mxu0 %v2759
        %4361 = vmatprep.subr.mxu0 %v2764
        %4362 = vmatpush1.msra.mxu0 %v2763
        %4363 = vmatprep.subr.mxu0 %v2768
        %4364 = vmatpush1.msra.mxu0 %v2767
        %4365 = vmatprep.subr.mxu0 %v2772
        %4366 = vmatpush1.msra.mxu0 %v2771
        %4367 = vmatprep.subr.mxu0 %v2776
        %4368 = vmatpush1.msra.mxu0 %v2775
        %4369 = vmatprep.subr.mxu0 %v2780
        %4370 = vmatpush1.msra.mxu0 %v2779
        %4371 = vmatprep.subr.mxu0 %v2784
        %4372 = vmatpush1.msra.mxu0 %v2783
        %4373 = vmatprep.subr.mxu0 %v2788
        %4374 = vmatpush1.msra.mxu0 %v2787
        %4375 = vmatprep.subr.mxu0 %v2792
        %4376 = vmatpush1.msra.mxu0 %v2791
        %4377 = vmatprep.subr.mxu0 %v2796
        %4378 = vmatpush1.msra.mxu0 %v2795
        %4379 = vmatprep.subr.mxu0 %v2800
        %4380 = vmatpush1.msra.mxu0 %v2799
        %4381 = vmatprep.subr.mxu0 %v2804
        %4382 = vmatpush1.msra.mxu0 %v2803
        %4383 = vmatprep.subr.mxu0 %v2808
        %4384 = vmatpush1.msra.mxu0 %v2807
        %4385 = vmatprep.subr.mxu0 %v2812
        %4386 = vmatpush1.msra.mxu0 %v2811
        %4387 = vmatprep.subr.mxu0 %v2816
        %4388 = vmatpush1.msra.mxu0 %v2815
        %4389 = vmatprep.subr.mxu0 %v2820
        %4390 = vmatpush1.msra.mxu0 %v2819
        %4391 = vmatprep.subr.mxu0 %v2824
        %4392 = vmatpush1.msra.mxu0 %v2823
        %4393 = vmatprep.subr.mxu0 %v2828
        %4394 = vmatpush1.msra.mxu0 %v2827
        %4395 = vmatprep.subr.mxu0 %v2832
        %4396 = vmatpush1.msra.mxu0 %v2831
        %4397 = vmatprep.subr.mxu0 %v2836
        %4398 = vmatpush1.msra.mxu0 %v2835
        %4399 = vmatprep.subr.mxu0 %v2840
        %4400 = vmatpush1.msra.mxu0 %v2839
        %4401 = vmatprep.subr.mxu0 %v2844
        %4402 = vmatpush1.msra.mxu0 %v2843
        %4403 = vmatprep.subr.mxu0 %v2848
        %4404 = vmatpush1.msra.mxu0 %v2847
        %4405 = vmatprep.subr.mxu0 %v2852
        %4406 = vmatpush1.msra.mxu0 %v2851
        %4407 = vmatprep.subr.mxu0 %v2856
        %4408 = vmatpush1.msra.mxu0 %v2855
        %4409 = vmatprep.subr.mxu0 %v2860
        %4410 = vmatpush1.msra.mxu0 %v2859
        %4411 = vmatprep.mubr.f32.mxu0 %v2718
        %4412 = vmatmul.mubr.f32.gmra.mrb[0].mxu0 %v2717
        %v4413 = vpop.f32.mrb[0].mxu0
        %v4414 = vadd.f32 %v3770, %v4413
        %v4415 = vpop.f32.mrb[0].mxu0
        %v4416 = vadd.f32 %v3774, %v4415
        %4417 = vdwg.mxu0
        %4418 = vmatprep.subr.mxu0 %v2864
        %4419 = vmatpush1.msra.mxu0 %v2863
        %4420 = vmatprep.subr.mxu0 %v2868
        %4421 = vmatpush1.msra.mxu0 %v2867
        %4422 = vmatprep.subr.mxu0 %v2872
        %4423 = vmatpush1.msra.mxu0 %v2871
        %4424 = vmatprep.subr.mxu0 %v2876
        %4425 = vmatpush1.msra.mxu0 %v2875
        %4426 = vmatprep.subr.mxu0 %v2880
        %4427 = vmatpush1.msra.mxu0 %v2879
        %4428 = vmatprep.subr.mxu0 %v2884
        %4429 = vmatpush1.msra.mxu0 %v2883
        %4430 = vmatprep.subr.mxu0 %v2888
        %4431 = vmatpush1.msra.mxu0 %v2887
        %4432 = vmatprep.subr.mxu0 %v2892
        %4433 = vmatpush1.msra.mxu0 %v2891
        %4434 = vmatprep.subr.mxu0 %v2896
        %4435 = vmatpush1.msra.mxu0 %v2895
        %4436 = vmatprep.subr.mxu0 %v2900
        %4437 = vmatpush1.msra.mxu0 %v2899
        %4438 = vmatprep.subr.mxu0 %v2904
        %4439 = vmatpush1.msra.mxu0 %v2903
        %4440 = vmatprep.subr.mxu0 %v2908
        %4441 = vmatpush1.msra.mxu0 %v2907
        %4442 = vmatprep.subr.mxu0 %v2912
        %4443 = vmatpush1.msra.mxu0 %v2911
        %4444 = vmatprep.subr.mxu0 %v2916
        %4445 = vmatpush1.msra.mxu0 %v2915
        %4446 = vmatprep.subr.mxu0 %v2920
        %4447 = vmatpush1.msra.mxu0 %v2919
        %4448 = vmatprep.subr.mxu0 %v2924
        %4449 = vmatpush1.msra.mxu0 %v2923
        %4450 = vmatprep.subr.mxu0 %v2928
        %4451 = vmatpush1.msra.mxu0 %v2927
        %4452 = vmatprep.subr.mxu0 %v2932
        %4453 = vmatpush1.msra.mxu0 %v2931
        %4454 = vmatprep.subr.mxu0 %v2936
        %4455 = vmatpush1.msra.mxu0 %v2935
        %4456 = vmatprep.subr.mxu0 %v2940
        %4457 = vmatpush1.msra.mxu0 %v2939
        %4458 = vmatprep.subr.mxu0 %v2944
        %4459 = vmatpush1.msra.mxu0 %v2943
        %4460 = vmatprep.subr.mxu0 %v2948
        %4461 = vmatpush1.msra.mxu0 %v2947
        %4462 = vmatprep.subr.mxu0 %v2952
        %4463 = vmatpush1.msra.mxu0 %v2951
        %4464 = vmatprep.subr.mxu0 %v2956
        %4465 = vmatpush1.msra.mxu0 %v2955
        %4466 = vmatprep.subr.mxu0 %v2960
        %4467 = vmatpush1.msra.mxu0 %v2959
        %4468 = vmatprep.subr.mxu0 %v2964
        %4469 = vmatpush1.msra.mxu0 %v2963
        %4470 = vmatprep.subr.mxu0 %v2968
        %4471 = vmatpush1.msra.mxu0 %v2967
        %4472 = vmatprep.subr.mxu0 %v2972
        %4473 = vmatpush1.msra.mxu0 %v2971
        %4474 = vmatprep.subr.mxu0 %v2976
        %4475 = vmatpush1.msra.mxu0 %v2975
        %4476 = vmatprep.subr.mxu0 %v2980
        %4477 = vmatpush1.msra.mxu0 %v2979
        %4478 = vmatprep.subr.mxu0 %v2984
        %4479 = vmatpush1.msra.mxu0 %v2983
        %4480 = vmatprep.subr.mxu0 %v2988
        %4481 = vmatpush1.msra.mxu0 %v2987
        %4482 = vmatprep.mubr.f32.mxu0 %v2720
        %4483 = vmatmul.mubr.f32.gmra.mrb[0].mxu0 %v2719
        %v4484 = vpop.f32.mrb[0].mxu0
        %v4485 = vadd.f32 %v4414, %v4484
        %v4486 = vpop.f32.mrb[0].mxu0
        %v4487 = vadd.f32 %v4416, %v4486
        %4488 = vdwg.mxu0
        %4489 = vmatprep.subr.mxu0 %v2992
        %4490 = vmatpush1.msra.mxu0 %v2991
        %4491 = vmatprep.subr.mxu0 %v2996
        %4492 = vmatpush1.msra.mxu0 %v2995
        %4493 = vmatprep.subr.mxu0 %v3000
        %4494 = vmatpush1.msra.mxu0 %v2999
        %4495 = vmatprep.subr.mxu0 %v3004
        %4496 = vmatpush1.msra.mxu0 %v3003
        %4497 = vmatprep.subr.mxu0 %v3008
        %4498 = vmatpush1.msra.mxu0 %v3007
        %4499 = vmatprep.subr.mxu0 %v3012
        %4500 = vmatpush1.msra.mxu0 %v3011
        %4501 = vmatprep.subr.mxu0 %v3016
        %4502 = vmatpush1.msra.mxu0 %v3015
        %4503 = vmatprep.subr.mxu0 %v3020
        %4504 = vmatpush1.msra.mxu0 %v3019
        %4505 = vmatprep.subr.mxu0 %v3024
        %4506 = vmatpush1.msra.mxu0 %v3023
        %4507 = vmatprep.subr.mxu0 %v3028
        %4508 = vmatpush1.msra.mxu0 %v3027
        %4509 = vmatprep.subr.mxu0 %v3032
        %4510 = vmatpush1.msra.mxu0 %v3031
        %4511 = vmatprep.subr.mxu0 %v3036
        %4512 = vmatpush1.msra.mxu0 %v3035
        %4513 = vmatprep.subr.mxu0 %v3040
        %4514 = vmatpush1.msra.mxu0 %v3039
        %4515 = vmatprep.subr.mxu0 %v3044
        %4516 = vmatpush1.msra.mxu0 %v3043
        %4517 = vmatprep.subr.mxu0 %v3048
        %4518 = vmatpush1.msra.mxu0 %v3047
        %4519 = vmatprep.subr.mxu0 %v3052
        %4520 = vmatpush1.msra.mxu0 %v3051
        %4521 = vmatprep.subr.mxu0 %v3056
        %4522 = vmatpush1.msra.mxu0 %v3055
        %4523 = vmatprep.subr.mxu0 %v3060
        %4524 = vmatpush1.msra.mxu0 %v3059
        %4525 = vmatprep.subr.mxu0 %v3064
        %4526 = vmatpush1.msra.mxu0 %v3063
        %4527 = vmatprep.subr.mxu0 %v3068
        %4528 = vmatpush1.msra.mxu0 %v3067
        %4529 = vmatprep.subr.mxu0 %v3072
        %4530 = vmatpush1.msra.mxu0 %v3071
        %4531 = vmatprep.subr.mxu0 %v3076
        %4532 = vmatpush1.msra.mxu0 %v3075
        %4533 = vmatprep.subr.mxu0 %v3080
        %4534 = vmatpush1.msra.mxu0 %v3079
        %4535 = vmatprep.subr.mxu0 %v3084
        %4536 = vmatpush1.msra.mxu0 %v3083
        %4537 = vmatprep.subr.mxu0 %v3088
        %4538 = vmatpush1.msra.mxu0 %v3087
        %4539 = vmatprep.subr.mxu0 %v3092
        %4540 = vmatpush1.msra.mxu0 %v3091
        %4541 = vmatprep.subr.mxu0 %v3096
        %4542 = vmatpush1.msra.mxu0 %v3095
        %4543 = vmatprep.subr.mxu0 %v3100
        %4544 = vmatpush1.msra.mxu0 %v3099
        %4545 = vmatprep.subr.mxu0 %v3104
        %4546 = vmatpush1.msra.mxu0 %v3103
        %4547 = vmatprep.subr.mxu0 %v3108
        %4548 = vmatpush1.msra.mxu0 %v3107
        %4549 = vmatprep.subr.mxu0 %v3112
        %4550 = vmatpush1.msra.mxu0 %v3111
        %4551 = vmatprep.subr.mxu0 %v3116
        %4552 = vmatpush1.msra.mxu0 %v3115
        %4553 = vmatprep.mubr.f32.mxu0 %v2722
        %4554 = vmatmul.mubr.f32.gmra.mrb[0].mxu0 %v2721
        %v4555 = vpop.f32.mrb[0].mxu0
        %v4556 = vadd.f32 %v4485, %v4555
        %v4557 = vpop.f32.mrb[0].mxu0
        %v4558 = vadd.f32 %v4487, %v4557
        %4559 = vdwg.mxu0
        %4560 = vmatprep.subr.mxu0 %v3120
        %4561 = vmatpush1.msra.mxu0 %v3119
        %4562 = vmatprep.subr.mxu0 %v3124
        %4563 = vmatpush1.msra.mxu0 %v3123
        %4564 = vmatprep.subr.mxu0 %v3128
        %4565 = vmatpush1.msra.mxu0 %v3127
        %4566 = vmatprep.subr.mxu0 %v3132
        %4567 = vmatpush1.msra.mxu0 %v3131
        %4568 = vmatprep.subr.mxu0 %v3136
        %4569 = vmatpush1.msra.mxu0 %v3135
        %4570 = vmatprep.subr.mxu0 %v3140
        %4571 = vmatpush1.msra.mxu0 %v3139
        %4572 = vmatprep.subr.mxu0 %v3144
        %4573 = vmatpush1.msra.mxu0 %v3143
        %4574 = vmatprep.subr.mxu0 %v3148
        %4575 = vmatpush1.msra.mxu0 %v3147
        %4576 = vmatprep.subr.mxu0 %v3152
        %4577 = vmatpush1.msra.mxu0 %v3151
        %4578 = vmatprep.subr.mxu0 %v3156
        %4579 = vmatpush1.msra.mxu0 %v3155
        %4580 = vmatprep.subr.mxu0 %v3160
        %4581 = vmatpush1.msra.mxu0 %v3159
        %4582 = vmatprep.subr.mxu0 %v3164
        %4583 = vmatpush1.msra.mxu0 %v3163
        %4584 = vmatprep.subr.mxu0 %v3168
        %4585 = vmatpush1.msra.mxu0 %v3167
        %4586 = vmatprep.subr.mxu0 %v3172
        %4587 = vmatpush1.msra.mxu0 %v3171
        %4588 = vmatprep.subr.mxu0 %v3176
        %4589 = vmatpush1.msra.mxu0 %v3175
        %4590 = vmatprep.subr.mxu0 %v3180
        %4591 = vmatpush1.msra.mxu0 %v3179
        %4592 = vmatprep.subr.mxu0 %v3184
        %4593 = vmatpush1.msra.mxu0 %v3183
        %4594 = vmatprep.subr.mxu0 %v3188
        %4595 = vmatpush1.msra.mxu0 %v3187
        %4596 = vmatprep.subr.mxu0 %v3192
        %4597 = vmatpush1.msra.mxu0 %v3191
        %4598 = vmatprep.subr.mxu0 %v3196
        %4599 = vmatpush1.msra.mxu0 %v3195
        %4600 = vmatprep.subr.mxu0 %v3200
        %4601 = vmatpush1.msra.mxu0 %v3199
        %4602 = vmatprep.subr.mxu0 %v3204
        %4603 = vmatpush1.msra.mxu0 %v3203
        %4604 = vmatprep.subr.mxu0 %v3208
        %4605 = vmatpush1.msra.mxu0 %v3207
        %4606 = vmatprep.subr.mxu0 %v3212
        %4607 = vmatpush1.msra.mxu0 %v3211
        %4608 = vmatprep.subr.mxu0 %v3216
        %4609 = vmatpush1.msra.mxu0 %v3215
        %4610 = vmatprep.subr.mxu0 %v3220
        %4611 = vmatpush1.msra.mxu0 %v3219
        %4612 = vmatprep.subr.mxu0 %v3224
        %4613 = vmatpush1.msra.mxu0 %v3223
        %4614 = vmatprep.subr.mxu0 %v3228
        %4615 = vmatpush1.msra.mxu0 %v3227
        %4616 = vmatprep.subr.mxu0 %v3232
        %4617 = vmatpush1.msra.mxu0 %v3231
        %4618 = vmatprep.subr.mxu0 %v3236
        %4619 = vmatpush1.msra.mxu0 %v3235
        %4620 = vmatprep.subr.mxu0 %v3240
        %4621 = vmatpush1.msra.mxu0 %v3239
        %4622 = vmatprep.subr.mxu0 %v3244
        %4623 = vmatpush1.msra.mxu0 %v3243
        %4624 = vmatprep.mubr.f32.mxu0 %v2724
        %4625 = vmatmul.mubr.f32.gmra.mrb[0].mxu0 %v2723
        %v4626 = vpop.f32.mrb[0].mxu0
        %v4627 = vadd.f32 %v4556, %v4626
        %v4628 = vpop.f32.mrb[0].mxu0
        %v4629 = vadd.f32 %v4558, %v4628
        %4630 = vdwg.mxu0
        %4631 = vmatprep.subr.mxu0 %v3248
        %4632 = vmatpush1.msra.mxu0 %v3247
        %4633 = vmatprep.subr.mxu0 %v3252
        %4634 = vmatpush1.msra.mxu0 %v3251
        %4635 = vmatprep.subr.mxu0 %v3256
        %4636 = vmatpush1.msra.mxu0 %v3255
        %4637 = vmatprep.subr.mxu0 %v3260
        %4638 = vmatpush1.msra.mxu0 %v3259
        %4639 = vmatprep.subr.mxu0 %v3264
        %4640 = vmatpush1.msra.mxu0 %v3263
        %4641 = vmatprep.subr.mxu0 %v3268
        %4642 = vmatpush1.msra.mxu0 %v3267
        %4643 = vmatprep.subr.mxu0 %v3272
        %4644 = vmatpush1.msra.mxu0 %v3271
        %4645 = vmatprep.subr.mxu0 %v3276
        %4646 = vmatpush1.msra.mxu0 %v3275
        %4647 = vmatprep.subr.mxu0 %v3280
        %4648 = vmatpush1.msra.mxu0 %v3279
        %4649 = vmatprep.subr.mxu0 %v3284
        %4650 = vmatpush1.msra.mxu0 %v3283
        %4651 = vmatprep.subr.mxu0 %v3288
        %4652 = vmatpush1.msra.mxu0 %v3287
        %4653 = vmatprep.subr.mxu0 %v3292
        %4654 = vmatpush1.msra.mxu0 %v3291
        %4655 = vmatprep.subr.mxu0 %v3296
        %4656 = vmatpush1.msra.mxu0 %v3295
        %4657 = vmatprep.subr.mxu0 %v3300
        %4658 = vmatpush1.msra.mxu0 %v3299
        %4659 = vmatprep.subr.mxu0 %v3304
        %4660 = vmatpush1.msra.mxu0 %v3303
        %4661 = vmatprep.subr.mxu0 %v3308
        %4662 = vmatpush1.msra.mxu0 %v3307
        %4663 = vmatprep.subr.mxu0 %v3312
        %4664 = vmatpush1.msra.mxu0 %v3311
        %4665 = vmatprep.subr.mxu0 %v3316
        %4666 = vmatpush1.msra.mxu0 %v3315
        %4667 = vmatprep.subr.mxu0 %v3320
        %4668 = vmatpush1.msra.mxu0 %v3319
        %4669 = vmatprep.subr.mxu0 %v3324
        %4670 = vmatpush1.msra.mxu0 %v3323
        %4671 = vmatprep.subr.mxu0 %v3328
        %4672 = vmatpush1.msra.mxu0 %v3327
        %4673 = vmatprep.subr.mxu0 %v3332
        %4674 = vmatpush1.msra.mxu0 %v3331
        %4675 = vmatprep.subr.mxu0 %v3336
        %4676 = vmatpush1.msra.mxu0 %v3335
        %4677 = vmatprep.subr.mxu0 %v3340
        %4678 = vmatpush1.msra.mxu0 %v3339
        %4679 = vmatprep.subr.mxu0 %v3344
        %4680 = vmatpush1.msra.mxu0 %v3343
        %4681 = vmatprep.subr.mxu0 %v3348
        %4682 = vmatpush1.msra.mxu0 %v3347
        %4683 = vmatprep.subr.mxu0 %v3352
        %4684 = vmatpush1.msra.mxu0 %v3351
        %4685 = vmatprep.subr.mxu0 %v3356
        %4686 = vmatpush1.msra.mxu0 %v3355
        %4687 = vmatprep.subr.mxu0 %v3360
        %4688 = vmatpush1.msra.mxu0 %v3359
        %4689 = vmatprep.subr.mxu0 %v3364
        %4690 = vmatpush1.msra.mxu0 %v3363
        %4691 = vmatprep.subr.mxu0 %v3368
        %4692 = vmatpush1.msra.mxu0 %v3367
        %4693 = vmatprep.subr.mxu0 %v3372
        %4694 = vmatpush1.msra.mxu0 %v3371
        %4695 = vmatprep.mubr.f32.mxu0 %v2726
        %4696 = vmatmul.mubr.f32.gmra.mrb[0].mxu0 %v2725
        %v4697 = vpop.f32.mrb[0].mxu0
        %v4698 = vadd.f32 %v4627, %v4697
        %v4699 = vpop.f32.mrb[0].mxu0
        %v4700 = vadd.f32 %v4629, %v4699
        %4701 = vdwg.mxu0
        %4702 = vmatprep.subr.mxu0 %v3376
        %4703 = vmatpush1.msra.mxu0 %v3375
        %4704 = vmatprep.subr.mxu0 %v3380
        %4705 = vmatpush1.msra.mxu0 %v3379
        %4706 = vmatprep.subr.mxu0 %v3384
        %4707 = vmatpush1.msra.mxu0 %v3383
        %4708 = vmatprep.subr.mxu0 %v3388
        %4709 = vmatpush1.msra.mxu0 %v3387
        %4710 = vmatprep.subr.mxu0 %v3392
        %4711 = vmatpush1.msra.mxu0 %v3391
        %4712 = vmatprep.subr.mxu0 %v3396
        %4713 = vmatpush1.msra.mxu0 %v3395
        %4714 = vmatprep.subr.mxu0 %v3400
        %4715 = vmatpush1.msra.mxu0 %v3399
        %4716 = vmatprep.subr.mxu0 %v3404
        %4717 = vmatpush1.msra.mxu0 %v3403
        %4718 = vmatprep.subr.mxu0 %v3408
        %4719 = vmatpush1.msra.mxu0 %v3407
        %4720 = vmatprep.subr.mxu0 %v3412
        %4721 = vmatpush1.msra.mxu0 %v3411
        %4722 = vmatprep.subr.mxu0 %v3416
        %4723 = vmatpush1.msra.mxu0 %v3415
        %4724 = vmatprep.subr.mxu0 %v3420
        %4725 = vmatpush1.msra.mxu0 %v3419
        %4726 = vmatprep.subr.mxu0 %v3424
        %4727 = vmatpush1.msra.mxu0 %v3423
        %4728 = vmatprep.subr.mxu0 %v3428
        %4729 = vmatpush1.msra.mxu0 %v3427
        %4730 = vmatprep.subr.mxu0 %v3432
        %4731 = vmatpush1.msra.mxu0 %v3431
        %4732 = vmatprep.subr.mxu0 %v3436
        %4733 = vmatpush1.msra.mxu0 %v3435
        %4734 = vmatprep.subr.mxu0 %v3440
        %4735 = vmatpush1.msra.mxu0 %v3439
        %4736 = vmatprep.subr.mxu0 %v3444
        %4737 = vmatpush1.msra.mxu0 %v3443
        %4738 = vmatprep.subr.mxu0 %v3448
        %4739 = vmatpush1.msra.mxu0 %v3447
        %4740 = vmatprep.subr.mxu0 %v3452
        %4741 = vmatpush1.msra.mxu0 %v3451
        %4742 = vmatprep.subr.mxu0 %v3456
        %4743 = vmatpush1.msra.mxu0 %v3455
        %4744 = vmatprep.subr.mxu0 %v3460
        %4745 = vmatpush1.msra.mxu0 %v3459
        %4746 = vmatprep.subr.mxu0 %v3464
        %4747 = vmatpush1.msra.mxu0 %v3463
        %4748 = vmatprep.subr.mxu0 %v3468
        %4749 = vmatpush1.msra.mxu0 %v3467
        %4750 = vmatprep.subr.mxu0 %v3472
        %4751 = vmatpush1.msra.mxu0 %v3471
        %4752 = vmatprep.subr.mxu0 %v3476
        %4753 = vmatpush1.msra.mxu0 %v3475
        %4754 = vmatprep.subr.mxu0 %v3480
        %4755 = vmatpush1.msra.mxu0 %v3479
        %4756 = vmatprep.subr.mxu0 %v3484
        %4757 = vmatpush1.msra.mxu0 %v3483
        %4758 = vmatprep.subr.mxu0 %v3488
        %4759 = vmatpush1.msra.mxu0 %v3487
        %4760 = vmatprep.subr.mxu0 %v3492
        %4761 = vmatpush1.msra.mxu0 %v3491
        %4762 = vmatprep.subr.mxu0 %v3496
        %4763 = vmatpush1.msra.mxu0 %v3495
        %4764 = vmatprep.subr.mxu0 %v3500
        %4765 = vmatpush1.msra.mxu0 %v3499
        %4766 = vmatprep.mubr.f32.mxu0 %v2728
        %4767 = vmatmul.mubr.f32.gmra.mrb[0].mxu0 %v2727
        %v4768 = vpop.f32.mrb[0].mxu0
        %v4769 = vadd.f32 %v4698, %v4768
        %v4770 = vpop.f32.mrb[0].mxu0
        %v4771 = vadd.f32 %v4700, %v4770
        %4772 = vdwg.mxu0
        %4773 = vmatprep.subr.mxu0 %v3504
        %4774 = vmatpush1.msra.mxu0 %v3503
        %4775 = vmatprep.subr.mxu0 %v3508
        %4776 = vmatpush1.msra.mxu0 %v3507
        %4777 = vmatprep.subr.mxu0 %v3512
        %4778 = vmatpush1.msra.mxu0 %v3511
        %4779 = vmatprep.subr.mxu0 %v3516
        %4780 = vmatpush1.msra.mxu0 %v3515
        %4781 = vmatprep.subr.mxu0 %v3520
        %4782 = vmatpush1.msra.mxu0 %v3519
        %4783 = vmatprep.subr.mxu0 %v3524
        %4784 = vmatpush1.msra.mxu0 %v3523
        %4785 = vmatprep.subr.mxu0 %v3528
        %4786 = vmatpush1.msra.mxu0 %v3527
        %4787 = vmatprep.subr.mxu0 %v3532
        %4788 = vmatpush1.msra.mxu0 %v3531
        %4789 = vmatprep.subr.mxu0 %v3536
        %4790 = vmatpush1.msra.mxu0 %v3535
        %4791 = vmatprep.subr.mxu0 %v3540
        %4792 = vmatpush1.msra.mxu0 %v3539
        %4793 = vmatprep.subr.mxu0 %v3544
        %4794 = vmatpush1.msra.mxu0 %v3543
        %4795 = vmatprep.subr.mxu0 %v3548
        %4796 = vmatpush1.msra.mxu0 %v3547
        %4797 = vmatprep.subr.mxu0 %v3552
        %4798 = vmatpush1.msra.mxu0 %v3551
        %4799 = vmatprep.subr.mxu0 %v3556
        %4800 = vmatpush1.msra.mxu0 %v3555
        %4801 = vmatprep.subr.mxu0 %v3560
        %4802 = vmatpush1.msra.mxu0 %v3559
        %4803 = vmatprep.subr.mxu0 %v3564
        %4804 = vmatpush1.msra.mxu0 %v3563
        %4805 = vmatprep.subr.mxu0 %v3568
        %4806 = vmatpush1.msra.mxu0 %v3567
        %4807 = vmatprep.subr.mxu0 %v3572
        %4808 = vmatpush1.msra.mxu0 %v3571
        %4809 = vmatprep.subr.mxu0 %v3576
        %4810 = vmatpush1.msra.mxu0 %v3575
        %4811 = vmatprep.subr.mxu0 %v3580
        %4812 = vmatpush1.msra.mxu0 %v3579
        %4813 = vmatprep.subr.mxu0 %v3584
        %4814 = vmatpush1.msra.mxu0 %v3583
        %4815 = vmatprep.subr.mxu0 %v3588
        %4816 = vmatpush1.msra.mxu0 %v3587
        %4817 = vmatprep.subr.mxu0 %v3592
        %4818 = vmatpush1.msra.mxu0 %v3591
        %4819 = vmatprep.subr.mxu0 %v3596
        %4820 = vmatpush1.msra.mxu0 %v3595
        %4821 = vmatprep.subr.mxu0 %v3600
        %4822 = vmatpush1.msra.mxu0 %v3599
        %4823 = vmatprep.subr.mxu0 %v3604
        %4824 = vmatpush1.msra.mxu0 %v3603
        %4825 = vmatprep.subr.mxu0 %v3608
        %4826 = vmatpush1.msra.mxu0 %v3607
        %4827 = vmatprep.subr.mxu0 %v3612
        %4828 = vmatpush1.msra.mxu0 %v3611
        %4829 = vmatprep.subr.mxu0 %v3616
        %4830 = vmatpush1.msra.mxu0 %v3615
        %4831 = vmatprep.subr.mxu0 %v3620
        %4832 = vmatpush1.msra.mxu0 %v3619
        %4833 = vmatprep.subr.mxu0 %v3624
        %4834 = vmatpush1.msra.mxu0 %v3623
        %4835 = vmatprep.subr.mxu0 %v3628
        %4836 = vmatpush1.msra.mxu0 %v3627
        %4837 = vmatprep.mubr.f32.mxu0 %v2730
        %4838 = vmatmul.mubr.f32.gmra.mrb[0].mxu0 %v2729
        %v4839 = vpop.f32.mrb[0].mxu0
        %v4840 = vadd.f32 %v4769, %v4839
        %v4841 = vpop.f32.mrb[0].mxu0
        %v4842 = vadd.f32 %v4771, %v4841
        %4843 = vdwg.mxu0
        %4844 = vmatprep.subr.mxu0 %v3632
        %4845 = vmatpush1.msra.mxu0 %v3631
        %4846 = vmatprep.subr.mxu0 %v3636
        %4847 = vmatpush1.msra.mxu0 %v3635
        %4848 = vmatprep.subr.mxu0 %v3640
        %4849 = vmatpush1.msra.mxu0 %v3639
        %4850 = vmatprep.subr.mxu0 %v3644
        %4851 = vmatpush1.msra.mxu0 %v3643
        %4852 = vmatprep.subr.mxu0 %v3648
        %4853 = vmatpush1.msra.mxu0 %v3647
        %4854 = vmatprep.subr.mxu0 %v3652
        %4855 = vmatpush1.msra.mxu0 %v3651
        %4856 = vmatprep.subr.mxu0 %v3656
        %4857 = vmatpush1.msra.mxu0 %v3655
        %4858 = vmatprep.subr.mxu0 %v3660
        %4859 = vmatpush1.msra.mxu0 %v3659
        %4860 = vmatprep.subr.mxu0 %v3664
        %4861 = vmatpush1.msra.mxu0 %v3663
        %4862 = vmatprep.subr.mxu0 %v3668
        %4863 = vmatpush1.msra.mxu0 %v3667
        %4864 = vmatprep.subr.mxu0 %v3672
        %4865 = vmatpush1.msra.mxu0 %v3671
        %4866 = vmatprep.subr.mxu0 %v3676
        %4867 = vmatpush1.msra.mxu0 %v3675
        %4868 = vmatprep.subr.mxu0 %v3680
        %4869 = vmatpush1.msra.mxu0 %v3679
        %4870 = vmatprep.subr.mxu0 %v3684
        %4871 = vmatpush1.msra.mxu0 %v3683
        %4872 = vmatprep.subr.mxu0 %v3688
        %4873 = vmatpush1.msra.mxu0 %v3687
        %4874 = vmatprep.subr.mxu0 %v3692
        %4875 = vmatpush1.msra.mxu0 %v3691
        %4876 = vmatprep.subr.mxu0 %v3696
        %4877 = vmatpush1.msra.mxu0 %v3695
        %4878 = vmatprep.subr.mxu0 %v3700
        %4879 = vmatpush1.msra.mxu0 %v3699
        %4880 = vmatprep.subr.mxu0 %v3704
        %4881 = vmatpush1.msra.mxu0 %v3703
        %4882 = vmatprep.subr.mxu0 %v3708
        %4883 = vmatpush1.msra.mxu0 %v3707
        %4884 = vmatprep.subr.mxu0 %v3712
        %4885 = vmatpush1.msra.mxu0 %v3711
        %4886 = vmatprep.subr.mxu0 %v3716
        %4887 = vmatpush1.msra.mxu0 %v3715
        %4888 = vmatprep.subr.mxu0 %v3720
        %4889 = vmatpush1.msra.mxu0 %v3719
        %4890 = vmatprep.subr.mxu0 %v3724
        %4891 = vmatpush1.msra.mxu0 %v3723
        %4892 = vmatprep.subr.mxu0 %v3728
        %4893 = vmatpush1.msra.mxu0 %v3727
        %4894 = vmatprep.subr.mxu0 %v3732
        %4895 = vmatpush1.msra.mxu0 %v3731
        %4896 = vmatprep.subr.mxu0 %v3736
        %4897 = vmatpush1.msra.mxu0 %v3735
        %4898 = vmatprep.subr.mxu0 %v3740
        %4899 = vmatpush1.msra.mxu0 %v3739
        %4900 = vmatprep.subr.mxu0 %v3744
        %4901 = vmatpush1.msra.mxu0 %v3743
        %4902 = vmatprep.subr.mxu0 %v3748
        %4903 = vmatpush1.msra.mxu0 %v3747
        %4904 = vmatprep.subr.mxu0 %v3752
        %4905 = vmatpush1.msra.mxu0 %v3751
        %4906 = vmatprep.subr.mxu0 %v3756
        %4907 = vmatpush1.msra.mxu0 %v3755
        %4908 = vmatprep.mubr.f32.mxu0 %v2732
        %4909 = vmatmul.mubr.f32.gmra.mrb[0].mxu0 %v2731
        %v4910 = vpop.f32.mrb[0].mxu0
        %v4911 = vadd.f32 %v4840, %v4910
        %v4912 = vpop.f32.mrb[0].mxu0
        %v4913 = vadd.f32 %v4842, %v4912
        %4914 = vdwg.mxu0
        %v4915 = vmul.f32 %v4343, %v4343
        %v4916 = vmul.f32 %v4345, %v4345
        %vm4917 = vcmask 1040384
        %v4918 = vsel %vm4917, %v4915, 0.0
        %v4919 = vsel %vm4917, %v4916, 0.0
        %v4920 = vadd.f32 %v4918, %v4919
        %4921 = vadd.xlane.f32.xlu0 %v4920
        %v4922 = vpop.xlane.xlu0 %4921
        %v4923 = vadd.f32 %v4922, 1e-12
        %v4924 = vrsqrt.pop %v4923
        %v4925 = vmul.f32 %v4911, %v4911
        %v4926 = vmul.f32 %v4913, %v4913
        %v4927 = vsel %vm4917, %v4925, 0.0
        %v4928 = vsel %vm4917, %v4926, 0.0
        %v4929 = vadd.f32 %v4927, %v4928
        %4930 = vadd.xlane.f32.xlu0 %v4929
        %v4931 = vpop.xlane.xlu0 %4930
        %v4932 = vadd.f32 %v4931, 1e-12
        %v4933 = vrsqrt.pop %v4932
        %v4934 = vmul.f32 %v4343, %v4924
        %v4935 = vmul.f32 %v4345, %v4924
        %v4938 = vcombine.low %v4934, %v4935
        %v4940 = vunpack.c.l.s4 1966171168
        %v4941 = vunpack.c.0.s8 %v4940
        %v4942 = vlaneseq
        %v4943 = vshrl.u32 %v4942, 7
        %v4944 = vsub.s32 %v4941, %v4943
        %v4945 = vrot.slane %v4938, %v4944
        %v4947 = vunpack.c.l.s4 1966171168
        %v4948 = vunpack.c.0.s8 %v4947
        %v4949 = vlaneseq
        %v4950 = vshrl.u32 %v4949, 7
        %v4951 = vsub.s32 %v4948, %v4950
        %v4952 = vrot.slane %v4945, %v4951
        %v4954 = vlaneseq
        %vm4955 = vcmp.ge.s32.totalorder %v4954, 0
        %vm4956 = vcmp.lt.s32.totalorder %v4954, 256
        %vm4957 = vmand %vm4955, %vm4956
        %4958 = vst.msk [vmem:[%s191] sm:$0x3] %vm4957, %v4952
        %v4959 = vmul.f32 %v4911, %v4933
        %v4960 = vmul.f32 %v4913, %v4933
        %v4963 = vcombine.low %v4959, %v4960
        %v4965 = vunpack.c.l.s4 1966171168
        %v4966 = vunpack.c.0.s8 %v4965
        %v4967 = vlaneseq
        %v4968 = vshrl.u32 %v4967, 7
        %v4969 = vsub.s32 %v4966, %v4968
        %v4970 = vrot.slane %v4963, %v4969
        %v4972 = vunpack.c.l.s4 1966171168
        %v4973 = vunpack.c.0.s8 %v4972
        %v4974 = vlaneseq
        %v4975 = vshrl.u32 %v4974, 7
        %v4976 = vsub.s32 %v4973, %v4975
        %v4977 = vrot.slane %v4970, %v4976
        %4979 = vst.msk [vmem:[%s191 + $0x2] sm:$0x3] %vm4957, %v4977
        %s4980 = sand.u32 %s95, 1
        %s4981 = scalar_lea.sflag [#allocation4], %s4980
        %s4982 = sand.u32 %s95, 1
        %s4983 = smul.addr %s4982, 4
        %s4984 = scalar_lea.vmem [#allocation7], %s4983
        // Predicated region
        $region41: #{tpu_custom_call.1} parent=31 // pred_check
          %p4985 = pneg %p105
        $region42: #{tpu_custom_call.1} parent=31 // pred_check_branch
          %4987 = sbr.rel (%p4985) target = $region44
        $region43: #{tpu_custom_call.1} parent=31 // pred_region
          %s4989 = ssub.s32 64, 64
          %4990 = vsyncadd %s4981, %s4989
          %s4991 = smul.addr %s19, 4
          %s4992 = smul.addr %s4991, 16
          %s4993 = scalar_lea.hbm %s3, %s4992
          %s4995 = sshll.u32 %s4984, 4
          %s4996 = int_to_ptr.vmem [resolvable:$true] %s4995
          %4998 = dma.vmem_to_hbm [thread:$0]  %s4996, 64, %s4993, %s4981
        $region44: #{tpu_custom_call.1} parent=31 // pred_fallthru
          _
      $region32: #{tpu_custom_call.1} parent=5 // pred_fallthru
        _
      %p4999 = scmp.le.s32.totalorder 2, %s14
      // Predicated region
      $region45: #{tpu_custom_call.1} parent=5 // pred_check
        %p5000 = pneg %p4999
      $region46: #{tpu_custom_call.1} parent=5 // pred_check_branch
        %5002 = sbr.rel (%p5000) target = $region48
      $region47: #{tpu_custom_call.1} parent=5 // pred_region
        %s5003 = ssub.s32 %s14, 2
        // Predicated region
        $region49: #{tpu_custom_call.1} parent=47 // pred_check
          %p5004 = pneg %p111
        $region50: #{tpu_custom_call.1} parent=47 // pred_check_branch
          %5006 = sbr.rel (%p5004) target = $region52
        $region51: #{tpu_custom_call.1} parent=47 // pred_region
          %s5007 = sand.u32 %s96, 1
          %s5008 = scalar_lea.sflag [#allocation4], %s5007
          %s5009 = sand.u32 %s96, 1
          %s5010 = smul.addr %s5009, 4
          %s5011 = scalar_lea.vmem [#allocation7], %s5010
          %5012 = dma.done %s5008, 64
        $region52: #{tpu_custom_call.1} parent=47 // pred_fallthru
          _
      $region48: #{tpu_custom_call.1} parent=5 // pred_fallthru
        _
    $region6: #{tpu_custom_call.1} parent=1 // loop_footer
      %s18 = sadd.s32 1, %s14
    $region7: #{tpu_custom_call.1} parent=1 // loop_footer_branch
      %13 = sbr.rel target = $region3
    $region8: #{tpu_custom_call.1} parent=1 // loop_exit
      _
    %5013 = vsyncpa [#allocation3], 1
    %s5014 = scalar_lea.sflag [#allocation3], 1
    %5015 = vsyncpa %s5014, 1
    %5016 = vsyncpa [#allocation6], 1
    %5017 = vsyncpa [#allocation4], 1
    %s5018 = scalar_lea.sflag [#allocation4], 1
    %5019 = vsyncpa %s5018, 1

</llo_original>
